<compile_context>
chip_gen: v6e
topology: v6e:2x2x1
jax: 0.10.0
libtpu: 0.0.40
codegen_flags: <defaults>
</compile_context>

<pallas_src>
import functools

import jax
import jax.numpy as jnp
from jax.experimental import pallas as pl
from jax.experimental.pallas import tpu as pltpu

LANE = 128      # padded feature width (lane-dense MXU inputs / output stores)
ROW_PAD = 512   # pad node count to a multiple of this so tiles never fall to 128


def _round_up(x, m):
    return ((x + m - 1) // m) * m


def _pick_tile(n_pad, preferred=512):
    for t in (preferred, 512, 256, 128):
        if t <= n_pad and n_pad % t == 0:
            return t
    return LANE


def _vmem_limit_bytes():
    """~3/4 of per-core VMEM: ~96 MiB on v5e/v6e, ~48 MiB on v7x."""
    try:
        cap = pltpu.get_tpu_info().vmem_capacity_bytes
    except Exception:
        cap = 64 * 1024 * 1024
    return (int(cap) * 3) // 4


def _fits_resident(n_pad, tile_m, tile_k, vmem_limit):
    """Conservative VMEM budget check for keeping A_hat (bf16) resident."""
    bytes_a = 2 * n_pad * n_pad * 2                       # assume double-buffered
    bytes_scratch = 3 * n_pad * LANE * 2 + tile_m * LANE * 4
    bytes_blocks = 2 * (tile_k * LANE * 2 +               # xw0 input blocks
                        tile_m * LANE * 4 +               # output blocks
                        LANE * LANE * 2 + LANE * 4)       # W, b blocks
    headroom = 4 * 1024 * 1024
    return bytes_a + bytes_scratch + bytes_blocks + headroom <= vmem_limit


# ----------------------------- Pallas kernel ---------------------------------

def _fused_gcn_kernel(xw0_ref, a_ref, w_ref, b_ref, o_ref,
                      h_even, h_odd, xw_ref, acc_ref,
                      *, num_layers, tile_m, tile_k, a_resident):
    l = pl.program_id(0)            # layer (sequential cross-layer dependency)
    r = pl.program_id(1)            # output-row tile of A_hat
    k = pl.program_id(2)            # contraction tile of A_hat (reduction)
    nk = pl.num_programs(2)

    k_start = pl.multiple_of(k * tile_k, tile_k)
    k_slice = pl.ds(k_start, tile_k)
    r_start = pl.multiple_of(r * tile_m, tile_m)

    # ---- per-layer XW = H_{l-1} @ W_l, spread across the k loop (r == 0) ----
    @pl.when(r == 0)
    def _xw_tile():
        @pl.when(l == 0)
        def _():
            # Layer 0's XW is precomputed outside the kernel.
            xw_ref[k_slice, :] = xw0_ref[...]

        def from_prev(h_prev):
            w = w_ref[0]                                   # (LANE, LANE) bf16
            xw_ref[k_slice, :] = jnp.dot(
                h_prev[k_slice, :], w,
                preferred_element_type=jnp.float32).astype(xw_ref.dtype)

        @pl.when(l % 2 == 1)                               # layers 1, 3 read h_even
        def _():
            from_prev(h_even)

        @pl.when(jnp.logical_and(l > 0, l % 2 == 0))       # layer 2 reads h_odd
        def _():
            from_prev(h_odd)

    # ---- reduction init ----
    @pl.when(k == 0)
    def _init():
        acc_ref[...] = jnp.zeros_like(acc_ref)

    # ---- main MXU work: acc += A_hat[row_tile, k_tile] @ XW[k_tile, :] ----
    if a_resident:
        # A_hat is one VMEM-resident block of shape (nk, n_pad, tile_k);
        # slice out the (tile_m, tile_k) tile (scalar leading index + sublane ds).
        a_tile = a_ref.at[k][pl.ds(r_start, tile_m), :]
    else:
        # Streamed path: BlockSpec delivered a (1, tile_m, tile_k) tile.
        a_tile = a_ref[0]
    acc_ref[...] += jnp.dot(a_tile, xw_ref[k_slice, :],
                            preferred_element_type=jnp.float32)

    # ---- finalize (last k step): bias (+ReLU for hidden layers), store ----
    @pl.when(k == nk - 1)
    def _finalize():
        h = acc_ref[...] + b_ref[0]                        # f32, (1, LANE) bcast
        h_relu = jnp.maximum(h, 0.0)
        row_slice = pl.ds(r_start, tile_m)

        @pl.when(jnp.logical_and(l < num_layers - 1, l % 2 == 0))
        def _():
            h_even[row_slice, :] = h_relu.astype(h_even.dtype)

        @pl.when(jnp.logical_and(l < num_layers - 1, l % 2 == 1))
        def _():
            h_odd[row_slice, :] = h_relu.astype(h_odd.dtype)

        # Final layer: no ReLU, write the lane-dense (tile_m, 128) output block.
        @pl.when(l == num_layers - 1)
        def _():
            o_ref[...] = h.astype(o_ref.dtype)


# --------------------------- GCN preprocessing --------------------------------

def build_normalized_adjacency(edge_index, num_nodes):
    """Dense D^-1/2 (A + I') D^-1/2, matching PyG gcn_norm semantics
    (add_remaining_self_loops: only add a self loop where one is missing)."""
    src, dst = edge_index[0], edge_index[1]
    a = jnp.zeros((num_nodes, num_nodes), jnp.float32)
    a = a.at[dst, src].add(1.0)                            # row = destination node
    diag = jnp.diagonal(a)
    a = a + jnp.diag(jnp.where(diag == 0.0, 1.0, 0.0))     # remaining self loops
    deg = a.sum(axis=1)
    dinv = jnp.where(deg > 0, jax.lax.rsqrt(deg), 0.0)
    return dinv[:, None] * a * dinv[None, :]


# ------------------------------- Wrapper ---------------------------------------

def gcn_forward_pallas(x, edge_index, params, *, tile_m=None, tile_k=None,
                       force_stream_a=False):
    """Fused 4-layer GCN forward: 3x relu(GCNConv), 1x GCNConv."""
    n, in_dim = x.shape
    num_layers = len(params)
    out_dim = params[-1][0].shape[1]
    assert max([in_dim, out_dim] + [w.shape[1] for w, _ in params]) <= LANE

    # Pad rows to a multiple of 512: larger tiles amortize grid-step overhead
    # and the f32 accumulator writeback on this memory-bound kernel.
    n_pad = _round_up(n, ROW_PAD)
    tile_m = tile_m if tile_m is not None else _pick_tile(n_pad)
    tile_k = tile_k if tile_k is not None else _pick_tile(n_pad)
    assert n_pad % tile_m == 0 and n_pad % tile_k == 0
    nr, nk = n_pad // tile_m, n_pad // tile_k

    vmem_limit = _vmem_limit_bytes()
    a_resident = (not force_stream_a) and _fits_resident(
        n_pad, tile_m, tile_k, vmem_limit)

    # ---- glue (plain JAX, once): normalized adjacency + zero padding ----
    a_hat = build_normalized_adjacency(edge_index, n)
    a_pad = jnp.zeros((n_pad, n_pad), jnp.float32).at[:n, :n].set(a_hat)
    a_pad = a_pad.astype(jnp.bfloat16)
    # Column-blocked layout (nk, n_pad, tile_k): [kb, row, c] = A[row, kb*tk + c].
    # Lets the resident path slice with a scalar leading index + sublane pl.ds
    # (no lane-dim dynamic slicing) and serves the streamed path unchanged.
    a_blk = a_pad.reshape(n_pad, nk, tile_k).transpose(1, 0, 2)

    x_pad = jnp.zeros((n_pad, LANE), jnp.float32).at[:n, :in_dim].set(x)
    x_pad = x_pad.astype(jnp.bfloat16)

    w_all = jnp.zeros((num_layers, LANE, LANE), jnp.float32)
    b_all = jnp.zeros((num_layers, 1, LANE), jnp.float32)
    for i, (w, b) in enumerate(params):
        w_all = w_all.at[i, :w.shape[0], :w.shape[1]].set(w)
        b_all = b_all.at[i, 0, :b.shape[0]].set(b)
    w_all = w_all.astype(jnp.bfloat16)

    # Layer-0 XW precomputed outside (O(N*F*F), trivial XLA matmul) so the
    # kernel never holds a resident copy of X in VMEM.
    xw0 = jnp.dot(x_pad, w_all[0],
                  preferred_element_type=jnp.float32).astype(jnp.bfloat16)

    if a_resident:
        # Whole A_hat resident in VMEM: constant index map -> fetched once.
        a_spec = pl.BlockSpec((nk, n_pad, tile_k), lambda l, r, k: (0, 0, 0))
    else:
        # Streamed fallback for graphs whose A_hat does not fit VMEM.
        # TODO(synk): on v5e add pipeline_mode=pl.Buffered(3) here to smooth
        # DMA jitter on the dominant stream when VMEM headroom exists.
        a_spec = pl.BlockSpec((1, tile_m, tile_k), lambda l, r, k: (k, r, 0))

    last = num_layers - 1
    grid = (num_layers, nr, nk)
    kernel = functools.partial(_fused_gcn_kernel, num_layers=num_layers,
                               tile_m=tile_m, tile_k=tile_k,
                               a_resident=a_resident)

    out_pad = pl.pallas_call(
        kernel,
        out_shape=jax.ShapeDtypeStruct((n_pad, LANE), jnp.float32),
        grid_spec=pltpu.PrefetchScalarGridSpec(
            num_scalar_prefetch=0,
            grid=grid,
            in_specs=[
                # Precomputed layer-0 XW tiles: only advanced while
                # (l==0, r==0); pinned to block 0 otherwise (no re-streaming).
                pl.BlockSpec(
                    (tile_k, LANE),
                    lambda l, r, k: (jnp.where((l == 0) & (r == 0), k, 0), 0)),
                a_spec,
                # per-layer weight / bias (resident across the (r, k) loop)
                pl.BlockSpec((1, LANE, LANE), lambda l, r, k: (l, 0, 0)),
                pl.BlockSpec((1, 1, LANE), lambda l, r, k: (l, 0, 0)),
            ],
            # Collapse the output index to block 0 for hidden layers so the
            # only HBM output writebacks are the final layer's (no 4x output
            # write amplification / transient garbage writes).
            out_specs=pl.BlockSpec(
                (tile_m, LANE),
                lambda l, r, k: (jnp.where(l == last, r, 0), 0)),
            scratch_shapes=[
                pltpu.VMEM((n_pad, LANE), jnp.bfloat16),   # h_even (act ping)
                pltpu.VMEM((n_pad, LANE), jnp.bfloat16),   # h_odd  (act pong)
                pltpu.VMEM((n_pad, LANE), jnp.bfloat16),   # XW of current layer
                pltpu.VMEM((tile_m, LANE), jnp.float32),   # f32 accumulator
            ],
        ),
        compiler_params=pltpu.CompilerParams(
            # Layer and k axes are true reductions; the row axis stays
            # "arbitrary" (fused inter-layer activations live in per-core VMEM
            # scratch, and the kernel is HBM-bandwidth-bound anyway).
            dimension_semantics=("arbitrary", "arbitrary", "arbitrary"),
            vmem_limit_bytes=vmem_limit,
        ),
    )(xw0, a_blk, w_all, b_all)

    return out_pad[:n, :out_dim]


# ------------------------------ Reference / init ------------------------------

def init_params(key, input_dim, hidden_dim, output_dim):
    dims = [(input_dim, hidden_dim), (hidden_dim, hidden_dim),
            (hidden_dim, hidden_dim), (hidden_dim, output_dim)]
    params = []
    for fan_in, fan_out in dims:
        kw, key = jax.random.split(key)
        scale = jnp.sqrt(6.0 / (fan_in + fan_out))          # glorot-uniform-ish
        w = jax.random.uniform(kw, (fan_in, fan_out), jnp.float32, -scale, scale)
        b = jnp.zeros((fan_out,), jnp.float32)
        params.append((w, b))
    return params


def gcn_reference(x, edge_index, params):
    """Pure-JAX reference with the same bf16-input / f32-accum quantization."""
    n = x.shape[0]
    a = build_normalized_adjacency(edge_index, n).astype(jnp.bfloat16)
    h = x.astype(jnp.bfloat16)
    num_layers = len(params)
    result = None
    for i, (w, b) in enumerate(params):
        xw = jnp.dot(h, w.astype(jnp.bfloat16),
                     preferred_element_type=jnp.float32).astype(jnp.bfloat16)
        out = jnp.dot(a, xw, preferred_element_type=jnp.float32) + b
        if i < num_layers - 1:
            h = jnp.maximum(out, 0.0).astype(jnp.bfloat16)
        else:
            result = out
    return result


# ------------------------------- Driver ---------------------------------------

if __name__ == "__main__":
    key = jax.random.PRNGKey(0)

    num_nodes = 700                     # -> n_pad = 1024, grid (4, 2, 2) @ 512 tiles
    input_dim, hidden_dim, output_dim = 32, 32, 16

    kx, ke, kp = jax.random.split(key, 3)

    # Node features.
    x = jax.random.normal(kx, (num_nodes, input_dim), jnp.float32)

    # Deterministic small graph: ring edges (both directions) + random edges.
    idx = jnp.arange(num_nodes)
    ring_src = jnp.concatenate([idx, (idx + 1) % num_nodes])
    ring_dst = jnp.concatenate([(idx + 1) % num_nodes, idx])
    rnd = jax.random.randint(ke, (2, 256), 0, num_nodes)
    edge_index = jnp.stack([
        jnp.concatenate([ring_src, rnd[0]]),
        jnp.concatenate([ring_dst, rnd[1]]),
    ]).astype(jnp.int32)                                   # [2, E]

    params = init_params(kp, input_dim, hidden_dim, output_dim)
    ref = gcn_reference(x, edge_index, params)

    # Default path: VMEM-resident A_hat (read from HBM exactly once).
    fwd = jax.jit(gcn_forward_pallas)
    out = fwd(x, edge_index, params)
    jax.block_until_ready(out)

    assert out.shape == (num_nodes, output_dim), out.shape
    assert jnp.all(jnp.isfinite(out))
    err = float(jnp.max(jnp.abs(out - ref)))
    assert jnp.allclose(out, ref, atol=5e-2, rtol=5e-2), (
        "resident-A max abs err = %f" % err)

    # Streamed-A fallback (auto-selected for graphs whose A_hat exceeds VMEM);
    # exercise it here too so both code paths stay verified.
    fwd_s = jax.jit(functools.partial(gcn_forward_pallas, force_stream_a=True))
    out_s = fwd_s(x, edge_index, params)
    jax.block_until_ready(out_s)
    err_s = float(jnp.max(jnp.abs(out_s - ref)))
    assert jnp.allclose(out_s, ref, atol=5e-2, rtol=5e-2), (
        "streamed-A max abs err = %f" % err_s)

    print("KERNEL_OK")
</pallas_src>

<mosaic_0001>
module attributes {stable_mosaic.version = 11 : i64} {
  func.func private @main(%arg0: i32) attributes {dimension_semantics = [#tpu.dimension_semantics<core_parallel>], iteration_bounds = array<i64: 2>, tpu.core_type = #tpu.core_type<sc_scalar_subcore>, window_params = []} {
    return
  }
}

module attributes {stable_mosaic.version = 11 : i64} {
  func.func private @main(%arg0: i32) attributes {dimension_semantics = [#tpu.dimension_semantics<core_parallel>], iteration_bounds = array<i64: 2>, tpu.core_type = #tpu.core_type<sc_scalar_subcore>, window_params = []} {
    return
  }
}

module attributes {stable_mosaic.version = 11 : i64} {
  func.func @_fused_gcn_kernel(%arg0: i32, %arg1: i32, %arg2: i32, %arg3: memref<512x128xbf16, #tpu.memory_space<vmem>>, %arg4: memref<2x1024x512xbf16, #tpu.memory_space<vmem>>, %arg5: memref<1x128x128xbf16, #tpu.memory_space<vmem>>, %arg6: memref<1x1x128xf32, #tpu.memory_space<vmem>>, %arg7: memref<512x128xf32, #tpu.memory_space<vmem>>, %arg8: memref<1024x128xbf16, #tpu.memory_space<vmem>>, %arg9: memref<1024x128xbf16, #tpu.memory_space<vmem>>, %arg10: memref<1024x128xbf16, #tpu.memory_space<vmem>>, %arg11: memref<512x128xf32, #tpu.memory_space<vmem>>) attributes {dimension_semantics = [#tpu.dimension_semantics<arbitrary>, #tpu.dimension_semantics<arbitrary>, #tpu.dimension_semantics<arbitrary>], iteration_bounds = array<i64: 4, 2, 2>, scalar_prefetch = 0 : i64, scratch_operands = 4 : i64, tpu.core_type = #tpu.core_type<tc>, window_params = [{transform_indices = @transform_0, window_bounds = array<i64: 512, 128>}, {pipeline_mode = #tpu.pipeline_mode<synchronous>, transform_indices = @transform_1, window_bounds = array<i64: 2, 1024, 512>}, {transform_indices = @transform_2, window_bounds = array<i64: 1, 128, 128>}, {transform_indices = @transform_3, window_bounds = array<i64: 1, 1, 128>}, {transform_indices = @transform_4, window_bounds = array<i64: 512, 128>}]} {
    %c512_i32 = arith.constant 512 : i32
    %0 = arith.muli %arg2, %c512_i32 : i32
    %1 = tpu.assume_multiple %0, 512 : i32
    %c512_i32_0 = arith.constant 512 : i32
    %2 = arith.muli %arg1, %c512_i32_0 : i32
    %3 = tpu.assume_multiple %2, 512 : i32
    %c0_i32 = arith.constant 0 : i32
    %4 = arith.cmpi eq, %arg1, %c0_i32 : i32
    %5 = arith.extui %4 : i1 to i32
    %c0_i32_1 = arith.constant 0 : i32
    %6 = arith.cmpi ne, %5, %c0_i32_1 : i32
    scf.if %6 {
      %c0_i32_12 = arith.constant 0 : i32
      %23 = arith.cmpi eq, %arg0, %c0_i32_12 : i32
      %24 = arith.extui %23 : i1 to i32
      %c0_i32_13 = arith.constant 0 : i32
      %25 = arith.cmpi ne, %24, %c0_i32_13 : i32
      scf.if %25 {
        %c0_30 = arith.constant 0 : index
        %c0_31 = arith.constant 0 : index
        %54 = vector.load %arg3[%c0_30, %c0_31] : memref<512x128xbf16, #tpu.memory_space<vmem>>, vector<512x128xbf16>
        %55 = arith.index_cast %1 : i32 to index
        %c0_32 = arith.constant 0 : index
        %56 = vector.load %arg10[%55, %c0_32] : memref<1024x128xbf16, #tpu.memory_space<vmem>>, vector<512x128xbf16>
        tpu.vector_store %arg10[%55, %c0_32], %54 {strides = array<i32>} : memref<1024x128xbf16, #tpu.memory_space<vmem>>, vector<512x128xbf16>,
      } else {
      }
      %c2_i32 = arith.constant 2 : i32
      %c0_i32_14 = arith.constant 0 : i32
      %26 = arith.cmpi eq, %c2_i32, %c0_i32_14 : i32
      %c1_i32_15 = arith.constant 1 : i32
      %27 = arith.select %26, %c1_i32_15, %c2_i32 : i32
      %28 = arith.remsi %arg0, %27 : i32
      %c0_i32_16 = arith.constant 0 : i32
      %29 = arith.cmpi ne, %28, %c0_i32_16 : i32
      %c0_i32_17 = arith.constant 0 : i32
      %30 = arith.cmpi slt, %28, %c0_i32_17 : i32
      %c0_i32_18 = arith.constant 0 : i32
      %31 = arith.cmpi slt, %27, %c0_i32_18 : i32
      %32 = arith.xori %30, %31 : i1
      %33 = arith.andi %32, %29 : i1
      %34 = arith.addi %28, %27 : i32
      %35 = arith.select %33, %34, %28 : i32
      %c1_i32_19 = arith.constant 1 : i32
      %36 = arith.cmpi eq, %35, %c1_i32_19 : i32
      %37 = arith.extui %36 : i1 to i32
      %c0_i32_20 = arith.constant 0 : i32
      %38 = arith.cmpi ne, %37, %c0_i32_20 : i32
      scf.if %38 {
        %c0_30 = arith.constant 0 : index
        %c0_31 = arith.constant 0 : index
        %c0_32 = arith.constant 0 : index
        %54 = vector.load %arg5[%c0_30, %c0_31, %c0_32] : memref<1x128x128xbf16, #tpu.memory_space<vmem>>, vector<1x128x128xbf16>
        %55 = vector.shape_cast %54 : vector<1x128x128xbf16> to vector<128x128xbf16>
        %56 = arith.index_cast %1 : i32 to index
        %c0_33 = arith.constant 0 : index
        %57 = vector.load %arg8[%56, %c0_33] : memref<1024x128xbf16, #tpu.memory_space<vmem>>, vector<512x128xbf16>
        %cst_34 = arith.constant dense<0.000000e+00> : vector<512x128xf32>
        %58 = tpu.matmul %57, %55, %cst_34 {dimension_numbers = #tpu.dot_dimension_numbers<[1], [0], [0], [1], [0, 0, 1, 1], [], []>} : vector<512x128xbf16>, vector<128x128xbf16>, vector<512x128xf32> -> vector<512x128xf32>
        %59 = arith.truncf %58 : vector<512x128xf32> to vector<512x128xbf16>
        %60 = arith.index_cast %1 : i32 to index
        %c0_35 = arith.constant 0 : index
        %61 = vector.load %arg10[%60, %c0_35] : memref<1024x128xbf16, #tpu.memory_space<vmem>>, vector<512x128xbf16>
        tpu.vector_store %arg10[%60, %c0_35], %59 {strides = array<i32>} : memref<1024x128xbf16, #tpu.memory_space<vmem>>, vector<512x128xbf16>,
      } else {
      }
      %c0_i32_21 = arith.constant 0 : i32
      %39 = arith.cmpi sgt, %arg0, %c0_i32_21 : i32
      %c2_i32_22 = arith.constant 2 : i32
      %c0_i32_23 = arith.constant 0 : i32
      %40 = arith.cmpi eq, %c2_i32_22, %c0_i32_23 : i32
      %c1_i32_24 = arith.constant 1 : i32
      %41 = arith.select %40, %c1_i32_24, %c2_i32_22 : i32
      %42 = arith.remsi %arg0, %41 : i32
      %c0_i32_25 = arith.constant 0 : i32
      %43 = arith.cmpi ne, %42, %c0_i32_25 : i32
      %c0_i32_26 = arith.constant 0 : i32
      %44 = arith.cmpi slt, %42, %c0_i32_26 : i32
      %c0_i32_27 = arith.constant 0 : i32
      %45 = arith.cmpi slt, %41, %c0_i32_27 : i32
      %46 = arith.xori %44, %45 : i1
      %47 = arith.andi %46, %43 : i1
      %48 = arith.addi %42, %41 : i32
      %49 = arith.select %47, %48, %42 : i32
      %c0_i32_28 = arith.constant 0 : i32
      %50 = arith.cmpi eq, %49, %c0_i32_28 : i32
      %51 = arith.andi %39, %50 : i1
      %52 = arith.extui %51 : i1 to i32
      %c0_i32_29 = arith.constant 0 : i32
      %53 = arith.cmpi ne, %52, %c0_i32_29 : i32
      scf.if %53 {
        %c0_30 = arith.constant 0 : index
        %c0_31 = arith.constant 0 : index
        %c0_32 = arith.constant 0 : index
        %54 = vector.load %arg5[%c0_30, %c0_31, %c0_32] : memref<1x128x128xbf16, #tpu.memory_space<vmem>>, vector<1x128x128xbf16>
        %55 = vector.shape_cast %54 : vector<1x128x128xbf16> to vector<128x128xbf16>
        %56 = arith.index_cast %1 : i32 to index
        %c0_33 = arith.constant 0 : index
        %57 = vector.load %arg9[%56, %c0_33] : memref<1024x128xbf16, #tpu.memory_space<vmem>>, vector<512x128xbf16>
        %cst_34 = arith.constant dense<0.000000e+00> : vector<512x128xf32>
        %58 = tpu.matmul %57, %55, %cst_34 {dimension_numbers = #tpu.dot_dimension_numbers<[1], [0], [0], [1], [0, 0, 1, 1], [], []>} : vector<512x128xbf16>, vector<128x128xbf16>, vector<512x128xf32> -> vector<512x128xf32>
        %59 = arith.truncf %58 : vector<512x128xf32> to vector<512x128xbf16>
        %60 = arith.index_cast %1 : i32 to index
        %c0_35 = arith.constant 0 : index
        %61 = vector.load %arg10[%60, %c0_35] : memref<1024x128xbf16, #tpu.memory_space<vmem>>, vector<512x128xbf16>
        tpu.vector_store %arg10[%60, %c0_35], %59 {strides = array<i32>} : memref<1024x128xbf16, #tpu.memory_space<vmem>>, vector<512x128xbf16>,
      } else {
      }
    } else {
    }
    %c0_i32_2 = arith.constant 0 : i32
    %7 = arith.cmpi eq, %arg2, %c0_i32_2 : i32
    %8 = arith.extui %7 : i1 to i32
    %c0_i32_3 = arith.constant 0 : i32
    %9 = arith.cmpi ne, %8, %c0_i32_3 : i32
    scf.if %9 {
      %cst_12 = arith.constant 0.000000e+00 : f32
      %23 = vector.broadcast %cst_12 : f32 to vector<512x128xf32>
      %c0_13 = arith.constant 0 : index
      %c0_14 = arith.constant 0 : index
      %24 = vector.load %arg11[%c0_13, %c0_14] : memref<512x128xf32, #tpu.memory_space<vmem>>, vector<512x128xf32>
      tpu.vector_store %arg11[%c0_13, %c0_14], %23 {strides = array<i32>} : memref<512x128xf32, #tpu.memory_space<vmem>>, vector<512x128xf32>,
    } else {
    }
    %c0_i32_4 = arith.constant 0 : i32
    %c0_i32_5 = arith.constant 0 : i32
    %10 = tpu.memref_slice %arg4[%arg2, %c0_i32_4, %c0_i32_5] : memref<2x1024x512xbf16, #tpu.memory_space<vmem>> -> memref<1x1024x512xbf16, #tpu.memory_space<vmem>>
    %11 = tpu.memref_squeeze %10 : memref<1x1024x512xbf16, #tpu.memory_space<vmem>> -> memref<1024x512xbf16, #tpu.memory_space<vmem>>
    %12 = arith.index_cast %3 : i32 to index
    %c0 = arith.constant 0 : index
    %13 = vector.load %11[%12, %c0] : memref<1024x512xbf16, #tpu.memory_space<vmem>>, vector<512x512xbf16>
    %c0_6 = arith.constant 0 : index
    %c0_7 = arith.constant 0 : index
    %14 = vector.load %arg11[%c0_6, %c0_7] : memref<512x128xf32, #tpu.memory_space<vmem>>, vector<512x128xf32>
    %15 = arith.index_cast %1 : i32 to index
    %c0_8 = arith.constant 0 : index
    %16 = vector.load %arg10[%15, %c0_8] : memref<1024x128xbf16, #tpu.memory_space<vmem>>, vector<512x128xbf16>
    %cst = arith.constant dense<0.000000e+00> : vector<512x128xf32>
    %17 = tpu.matmul %13, %16, %cst {dimension_numbers = #tpu.dot_dimension_numbers<[1], [0], [0], [1], [0, 0, 1, 1], [], []>} : vector<512x512xbf16>, vector<512x128xbf16>, vector<512x128xf32> -> vector<512x128xf32>
    %18 = arith.addf %14, %17 : vector<512x128xf32>
    %c0_9 = arith.constant 0 : index
    %c0_10 = arith.constant 0 : index
    %19 = vector.load %arg11[%c0_9, %c0_10] : memref<512x128xf32, #tpu.memory_space<vmem>>, vector<512x128xf32>
    tpu.vector_store %arg11[%c0_9, %c0_10], %18 {strides = array<i32>} : memref<512x128xf32, #tpu.memory_space<vmem>>, vector<512x128xf32>,
    %c1_i32 = arith.constant 1 : i32
    %20 = arith.cmpi eq, %arg2, %c1_i32 : i32
    %21 = arith.extui %20 : i1 to i32
    %c0_i32_11 = arith.constant 0 : i32
    %22 = arith.cmpi ne, %21, %c0_i32_11 : i32
    scf.if %22 {
      %c0_12 = arith.constant 0 : index
      %c0_13 = arith.constant 0 : index
      %23 = vector.load %arg11[%c0_12, %c0_13] : memref<512x128xf32, #tpu.memory_space<vmem>>, vector<512x128xf32>
      %c0_14 = arith.constant 0 : index
      %c0_15 = arith.constant 0 : index
      %c0_16 = arith.constant 0 : index
      %24 = vector.load %arg6[%c0_14, %c0_15, %c0_16] : memref<1x1x128xf32, #tpu.memory_space<vmem>>, vector<1x1x128xf32>
      %25 = vector.shape_cast %24 : vector<1x1x128xf32> to vector<1x128xf32>
      %26 = vector.broadcast %25 : vector<1x128xf32> to vector<512x128xf32>
      %27 = arith.addf %23, %26 : vector<512x128xf32>
      %cst_17 = arith.constant 0.000000e+00 : f32
      %28 = vector.broadcast %cst_17 : f32 to vector<512x128xf32>
      %29 = arith.maximumf %27, %28 : vector<512x128xf32>
      %c3_i32 = arith.constant 3 : i32
      %30 = arith.cmpi slt, %arg0, %c3_i32 : i32
      %c2_i32 = arith.constant 2 : i32
      %c0_i32_18 = arith.constant 0 : i32
      %31 = arith.cmpi eq, %c2_i32, %c0_i32_18 : i32
      %c1_i32_19 = arith.constant 1 : i32
      %32 = arith.select %31, %c1_i32_19, %c2_i32 : i32
      %33 = arith.remsi %arg0, %32 : i32
      %c0_i32_20 = arith.constant 0 : i32
      %34 = arith.cmpi ne, %33, %c0_i32_20 : i32
      %c0_i32_21 = arith.constant 0 : i32
      %35 = arith.cmpi slt, %33, %c0_i32_21 : i32
      %c0_i32_22 = arith.constant 0 : i32
      %36 = arith.cmpi slt, %32, %c0_i32_22 : i32
      %37 = arith.xori %35, %36 : i1
      %38 = arith.andi %37, %34 : i1
      %39 = arith.addi %33, %32 : i32
      %40 = arith.select %38, %39, %33 : i32
      %c0_i32_23 = arith.constant 0 : i32
      %41 = arith.cmpi eq, %40, %c0_i32_23 : i32
      %42 = arith.andi %30, %41 : i1
      %43 = arith.extui %42 : i1 to i32
      %c0_i32_24 = arith.constant 0 : i32
      %44 = arith.cmpi ne, %43, %c0_i32_24 : i32
      scf.if %44 {
        %63 = arith.truncf %29 : vector<512x128xf32> to vector<512x128xbf16>
        %64 = arith.index_cast %3 : i32 to index
        %c0_36 = arith.constant 0 : index
        %65 = vector.load %arg8[%64, %c0_36] : memref<1024x128xbf16, #tpu.memory_space<vmem>>, vector<512x128xbf16>
        tpu.vector_store %arg8[%64, %c0_36], %63 {strides = array<i32>} : memref<1024x128xbf16, #tpu.memory_space<vmem>>, vector<512x128xbf16>,
      } else {
      }
      %c3_i32_25 = arith.constant 3 : i32
      %45 = arith.cmpi slt, %arg0, %c3_i32_25 : i32
      %c2_i32_26 = arith.constant 2 : i32
      %c0_i32_27 = arith.constant 0 : i32
      %46 = arith.cmpi eq, %c2_i32_26, %c0_i32_27 : i32
      %c1_i32_28 = arith.constant 1 : i32
      %47 = arith.select %46, %c1_i32_28, %c2_i32_26 : i32
      %48 = arith.remsi %arg0, %47 : i32
      %c0_i32_29 = arith.constant 0 : i32
      %49 = arith.cmpi ne, %48, %c0_i32_29 : i32
      %c0_i32_30 = arith.constant 0 : i32
      %50 = arith.cmpi slt, %48, %c0_i32_30 : i32
      %c0_i32_31 = arith.constant 0 : i32
      %51 = arith.cmpi slt, %47, %c0_i32_31 : i32
      %52 = arith.xori %50, %51 : i1
      %53 = arith.andi %52, %49 : i1
      %54 = arith.addi %48, %47 : i32
      %55 = arith.select %53, %54, %48 : i32
      %c1_i32_32 = arith.constant 1 : i32
      %56 = arith.cmpi eq, %55, %c1_i32_32 : i32
      %57 = arith.andi %45, %56 : i1
      %58 = arith.extui %57 : i1 to i32
      %c0_i32_33 = arith.constant 0 : i32
      %59 = arith.cmpi ne, %58, %c0_i32_33 : i32
      scf.if %59 {
        %63 = arith.truncf %29 : vector<512x128xf32> to vector<512x128xbf16>
        %64 = arith.index_cast %3 : i32 to index
        %c0_36 = arith.constant 0 : index
        %65 = vector.load %arg9[%64, %c0_36] : memref<1024x128xbf16, #tpu.memory_space<vmem>>, vector<512x128xbf16>
        tpu.vector_store %arg9[%64, %c0_36], %63 {strides = array<i32>} : memref<1024x128xbf16, #tpu.memory_space<vmem>>, vector<512x128xbf16>,
      } else {
      }
      %c3_i32_34 = arith.constant 3 : i32
      %60 = arith.cmpi eq, %arg0, %c3_i32_34 : i32
      %61 = arith.extui %60 : i1 to i32
      %c0_i32_35 = arith.constant 0 : i32
      %62 = arith.cmpi ne, %61, %c0_i32_35 : i32
      scf.if %62 {
        %c0_36 = arith.constant 0 : index
        %c0_37 = arith.constant 0 : index
        %63 = vector.load %arg7[%c0_36, %c0_37] : memref<512x128xf32, #tpu.memory_space<vmem>>, vector<512x128xf32>
        tpu.vector_store %arg7[%c0_36, %c0_37], %27 {strides = array<i32>} : memref<512x128xf32, #tpu.memory_space<vmem>>, vector<512x128xf32>,
      } else {
      }
    } else {
    }
    return
  }
  func.func @transform_0(%arg0: i32, %arg1: i32, %arg2: i32) -> (i32, i32) {
    %c0_i32 = arith.constant 0 : i32
    %0 = arith.cmpi eq, %arg0, %c0_i32 : i32
    %c0_i32_0 = arith.constant 0 : i32
    %1 = arith.cmpi eq, %arg1, %c0_i32_0 : i32
    %2 = arith.andi %0, %1 : i1
    %c0_i32_1 = arith.constant 0 : i32
    %3 = arith.select %2, %arg2, %c0_i32_1 : i32
    %c0_i32_2 = arith.constant 0 : i32
    %c0_i32_3 = arith.constant 0 : i32
    return %3, %c0_i32_2 : i32, i32
  }
  func.func @transform_1(%arg0: i32, %arg1: i32, %arg2: i32) -> (i32, i32, i32) {
    %c0_i32 = arith.constant 0 : i32
    %c0_i32_0 = arith.constant 0 : i32
    %c0_i32_1 = arith.constant 0 : i32
    %c0_i32_2 = arith.constant 0 : i32
    return %c0_i32, %c0_i32_0, %c0_i32_1 : i32, i32, i32
  }
  func.func @transform_2(%arg0: i32, %arg1: i32, %arg2: i32) -> (i32, i32, i32) {
    %c0_i32 = arith.constant 0 : i32
    %c0_i32_0 = arith.constant 0 : i32
    %c0_i32_1 = arith.constant 0 : i32
    return %arg0, %c0_i32, %c0_i32_0 : i32, i32, i32
  }
  func.func @transform_3(%arg0: i32, %arg1: i32, %arg2: i32) -> (i32, i32, i32) {
    %c0_i32 = arith.constant 0 : i32
    %c0_i32_0 = arith.constant 0 : i32
    %c0_i32_1 = arith.constant 0 : i32
    return %arg0, %c0_i32, %c0_i32_0 : i32, i32, i32
  }
  func.func @transform_4(%arg0: i32, %arg1: i32, %arg2: i32) -> (i32, i32) {
    %c3_i32 = arith.constant 3 : i32
    %0 = arith.cmpi eq, %arg0, %c3_i32 : i32
    %c0_i32 = arith.constant 0 : i32
    %1 = arith.select %0, %arg1, %c0_i32 : i32
    %c0_i32_0 = arith.constant 0 : i32
    %c0_i32_1 = arith.constant 0 : i32
    return %1, %c0_i32_0 : i32, i32
  }
}

</mosaic_0001>

<llo_original>
// kernel: gcn_forward_pallas.1
$region0: #{gcn_forward_pallas.1}
  #allocation0 [shape = 'u32[]', space=smem, size = 0x4, offset = 0x4, fixed_abs, tag = 'smem constant byte address 0x4 - core index']
  #allocation1 [shape = 'u32[144,128]{1,0:T(1,128)}', space=vmem, size = 0x12000, scoped, tag = 'internal scratch']
  #allocation2 [shape = 'bf16[1024,128]{1,0:T(8,128)(2,1)}', space=vmem, size = 0x40000, scoped, tag = 'scratch operand']
  #allocation3 [shape = 'bf16[1024,128]{1,0:T(8,128)(2,1)}', space=vmem, size = 0x40000, scoped, tag = 'scratch operand']
  #allocation4 [shape = 'bf16[1024,128]{1,0:T(8,128)(2,1)}', space=vmem, size = 0x40000, scoped, tag = 'scratch operand']
  #allocation5 [shape = 'f32[512,128]{1,0:T(8,128)}', space=vmem, size = 0x40000, scoped, tag = 'scratch operand']
  %s0 = inlined_call_operand.vmem [shape: bf16[1024,128], index: 0, kind: input, shape index: {}]
  %s1 = inlined_call_operand.vmem [shape: bf16[2,1024,512], index: 1, kind: input, shape index: {}]
  %s2 = inlined_call_operand.vmem [shape: bf16[4,128,128], index: 2, kind: input, shape index: {}]
  %s3 = inlined_call_operand.vmem [shape: f32[4,1,128], index: 3, kind: input, shape index: {}]
  %s4 = inlined_call_operand.vmem [shape: f32[1024,128], index: 4, kind: output, shape index: {}]
  %s5 = sld [smem:[#allocation0]]
  $region85: #{gcn_forward_pallas.1} parent=0
    _
  %s7 = ssub.s32 1, %s5
  %s8 = scalar_select 0, %s7, %s5
  loop: start=0, step=1, limit=18
  $region2: #{gcn_forward_pallas.1} parent=0 // loop_pre_header
    _
  $region3: #{gcn_forward_pallas.1} parent=0 // loop_header
    %s10 = sphi 0, %s14
    %p11 = scmp.ge.s32.totalorder %s10, 18
    %s17 = sphi 0, %s36
    %s18 = sphi 0, %s32
    %s19 = sphi 0, %s28
    %s20 = sphi 0, %s17
    %s21 = sphi 0, %s18
    %s22 = sphi 0, %s19
    %s23 = sphi 0, %s20
    %s24 = sphi 0, %s21
    %s25 = sphi 0, %s22
    %s49 = sphi 0, %s51
    %s52 = sphi 0, %s49
    %s53 = sphi 0, %s52
    %s69 = sphi 0, %s53
    %s73 = sphi 0, %s73
    %s75 = sphi 0, %s73
    %s76 = sphi 0, %s75
    %s90 = sphi 0, %s76
    %s96 = sphi 0, %s98
    %s99 = sphi 0, %s96
    %s100 = sphi 0, %s99
    %s116 = sphi 0, %s100
    %s122 = sphi 0, %s124
    %s125 = sphi 0, %s122
    %s126 = sphi 0, %s125
    %s142 = sphi 0, %s126
    %s152 = sphi 0, %s154
    %s155 = sphi 0, %s152
    %s156 = sphi 0, %s155
    %s172 = sphi 0, %s156
  $region4: #{gcn_forward_pallas.1} parent=0 // loop_header_branch
    %13 = sbr.rel (%p11) target = $region8
  $region5: #{gcn_forward_pallas.1} parent=0 // loop_body
    %s15 = ssub.s32 %s10, 1
    %s16 = ssub.s32 %s10, 2
    %s26 = sadd.s32 1, %s19
    %p27 = scmp.ge.s32.totalorder %s26, 2
    %s28 = scalar_select %p27, 0, %s26
    %s29 = sadd.s32 1, %s18
    %s30 = scalar_select %p27, %s29, %s18
    %p31 = scmp.ge.s32.totalorder %s30, 2
    %s32 = scalar_select %p31, 0, %s30
    %s33 = sadd.s32 1, %s17
    %s34 = scalar_select %p31, %s33, %s17
    %p35 = scmp.ge.s32.totalorder %s34, 4
    %s36 = scalar_select %p35, 0, %s34
    %p37 = scmp.eq.s32.totalorder %s17, 0
    %p38 = scmp.eq.s32.totalorder %s18, 0
    %p39 = pnand %p37, %p38
    %p40 = pneg %p39
    %s41 = scalar_select %p40, %s19, 0
    %p42 = scmp.eq.s32.totalorder %s36, 0
    %p43 = scmp.eq.s32.totalorder %s32, 0
    %p44 = pnand %p42, %p43
    %p45 = pneg %p44
    %s46 = scalar_select %p45, %s28, 0
    %s47 = ssub.s32 %s41, %s46
    %p48 = scmp.eq.s32.totalorder %s47, 0
    %s50 = sadd.s32 %s49, 1
    %s51 = scalar_select %p48, %s49, %s50
    %p54 = pneg %p48
    %p55 = scmp.eq.s32.totalorder %s10, 15
    %p56 = por %p54, %p55
    %p57 = scmp.ne.s32.totalorder %s49, %s52
    %p58 = scmp.eq.s32.totalorder %s10, 0
    %p59 = por %p57, %p58
    %p60 = scmp.ne.s32.totalorder %s49, %s52
    %p61 = scmp.eq.s32.totalorder %s15, 15
    %p62 = por %p60, %p61
    %p63 = scmp.ne.s32.totalorder %s52, %s53
    %p64 = scmp.eq.s32.totalorder %s15, 0
    %p65 = por %p63, %p64
    %p66 = scmp.ne.s32.totalorder %s52, %s53
    %p67 = scmp.eq.s32.totalorder %s16, 15
    %p68 = por %p66, %p67
    %p70 = scmp.ne.s32.totalorder %s53, %s69
    %p71 = scmp.eq.s32.totalorder %s16, 0
    %p72 = por %p70, %p71
    %s74 = sadd.s32 %s73, 1
    %p77 = scmp.eq.s32.totalorder %s10, 15
    %p78 = scmp.ne.s32.totalorder %s73, %s75
    %p79 = scmp.eq.s32.totalorder %s10, 0
    %p80 = por %p78, %p79
    %p81 = scmp.ne.s32.totalorder %s73, %s75
    %p82 = scmp.eq.s32.totalorder %s15, 15
    %p83 = por %p81, %p82
    %p84 = scmp.ne.s32.totalorder %s75, %s76
    %p85 = scmp.eq.s32.totalorder %s15, 0
    %p86 = por %p84, %p85
    %p87 = scmp.ne.s32.totalorder %s75, %s76
    %p88 = scmp.eq.s32.totalorder %s16, 15
    %p89 = por %p87, %p88
    %p91 = scmp.ne.s32.totalorder %s76, %s90
    %p92 = scmp.eq.s32.totalorder %s16, 0
    %p93 = por %p91, %p92
    %s94 = ssub.s32 %s17, %s36
    %p95 = scmp.eq.s32.totalorder %s94, 0
    %s97 = sadd.s32 %s96, 1
    %s98 = scalar_select %p95, %s96, %s97
    %p101 = pneg %p95
    %p102 = scmp.eq.s32.totalorder %s10, 15
    %p103 = por %p101, %p102
    %p104 = scmp.ne.s32.totalorder %s96, %s99
    %p105 = scmp.eq.s32.totalorder %s10, 0
    %p106 = por %p104, %p105
    %p107 = scmp.ne.s32.totalorder %s96, %s99
    %p108 = scmp.eq.s32.totalorder %s15, 15
    %p109 = por %p107, %p108
    %p110 = scmp.ne.s32.totalorder %s99, %s100
    %p111 = scmp.eq.s32.totalorder %s15, 0
    %p112 = por %p110, %p111
    %p113 = scmp.ne.s32.totalorder %s99, %s100
    %p114 = scmp.eq.s32.totalorder %s16, 15
    %p115 = por %p113, %p114
    %p117 = scmp.ne.s32.totalorder %s100, %s116
    %p118 = scmp.eq.s32.totalorder %s16, 0
    %p119 = por %p117, %p118
    %s120 = ssub.s32 %s17, %s36
    %p121 = scmp.eq.s32.totalorder %s120, 0
    %s123 = sadd.s32 %s122, 1
    %s124 = scalar_select %p121, %s122, %s123
    %p127 = pneg %p121
    %p128 = scmp.eq.s32.totalorder %s10, 15
    %p129 = por %p127, %p128
    %p130 = scmp.ne.s32.totalorder %s122, %s125
    %p131 = scmp.eq.s32.totalorder %s10, 0
    %p132 = por %p130, %p131
    %p133 = scmp.ne.s32.totalorder %s122, %s125
    %p134 = scmp.eq.s32.totalorder %s15, 15
    %p135 = por %p133, %p134
    %p136 = scmp.ne.s32.totalorder %s125, %s126
    %p137 = scmp.eq.s32.totalorder %s15, 0
    %p138 = por %p136, %p137
    %p139 = scmp.ne.s32.totalorder %s125, %s126
    %p140 = scmp.eq.s32.totalorder %s16, 15
    %p141 = por %p139, %p140
    %p143 = scmp.ne.s32.totalorder %s126, %s142
    %p144 = scmp.eq.s32.totalorder %s16, 0
    %p145 = por %p143, %p144
    %p146 = scmp.eq.s32.totalorder %s17, 3
    %s147 = scalar_select %p146, %s18, 0
    %p148 = scmp.eq.s32.totalorder %s36, 3
    %s149 = scalar_select %p148, %s32, 0
    %s150 = ssub.s32 %s147, %s149
    %p151 = scmp.eq.s32.totalorder %s150, 0
    %s153 = sadd.s32 %s152, 1
    %s154 = scalar_select %p151, %s152, %s153
    %p157 = pneg %p151
    %p158 = scmp.eq.s32.totalorder %s10, 15
    %p159 = por %p157, %p158
    %p160 = scmp.ne.s32.totalorder %s152, %s155
    %p161 = scmp.eq.s32.totalorder %s10, 0
    %p162 = por %p160, %p161
    %p163 = scmp.ne.s32.totalorder %s152, %s155
    %p164 = scmp.eq.s32.totalorder %s15, 15
    %p165 = por %p163, %p164
    %p166 = scmp.ne.s32.totalorder %s155, %s156
    %p167 = scmp.eq.s32.totalorder %s15, 0
    %p168 = por %p166, %p167
    %p169 = scmp.ne.s32.totalorder %s155, %s156
    %p170 = scmp.eq.s32.totalorder %s16, 15
    %p171 = por %p169, %p170
    %p173 = scmp.ne.s32.totalorder %s156, %s172
    %p174 = scmp.eq.s32.totalorder %s16, 0
    %p175 = por %p173, %p174
    %p176 = scmp.le.s32.totalorder 1, %s10
    %p177 = scmp.lt.s32.totalorder %s10, 17
    %p178 = pnand %p176, %p177
    %p179 = pneg %p178
    // Predicated region
    $region9: #{gcn_forward_pallas.1} parent=5 // pred_check
      _
    $region10: #{gcn_forward_pallas.1} parent=5 // pred_check_branch
      %181 = sbr.rel (%p178) target = $region12
    $region11: #{gcn_forward_pallas.1} parent=5 // pred_region
      %s182 = ssub.s32 %s10, 1
      // Predicated region
      $region13: #{gcn_forward_pallas.1} parent=11 // pred_check
        %p183 = pneg %p86
      $region14: #{gcn_forward_pallas.1} parent=11 // pred_check_branch
        %185 = sbr.rel (%p183) target = $region16
      $region15: #{gcn_forward_pallas.1} parent=11 // pred_region
        _
      $region16: #{gcn_forward_pallas.1} parent=11 // pred_fallthru
        _
    $region12: #{gcn_forward_pallas.1} parent=5 // pred_fallthru
      _
    %p186 = scmp.lt.s32.totalorder %s10, 16
    // Predicated region
    $region17: #{gcn_forward_pallas.1} parent=5 // pred_check
      %p187 = pneg %p186
    $region18: #{gcn_forward_pallas.1} parent=5 // pred_check_branch
      %189 = sbr.rel (%p187) target = $region20
    $region19: #{gcn_forward_pallas.1} parent=5 // pred_region
      // Predicated region
      $region21: #{gcn_forward_pallas.1} parent=19 // pred_check
        %p190 = pneg %p59
      $region22: #{gcn_forward_pallas.1} parent=19 // pred_check_branch
        %192 = sbr.rel (%p190) target = $region24
      $region23: #{gcn_forward_pallas.1} parent=19 // pred_region
        %p193 = scmp.eq.s32.totalorder %s17, 0
        %p194 = scmp.eq.s32.totalorder %s18, 0
        %p195 = pnand %p193, %p194
        %p196 = pneg %p195
        %s197 = scalar_select %p196, %s19, 0
        %s198 = smul.u32 64, %s197
        %p199 = scmp.lt.s32.totalorder %s198, 127
        %s200 = scalar_select %p199, %s198, 127
        %s201 = smul.addr %s200, 4
        %s202 = scalar_lea.vmem %s0, %s201
        %p203 = scmp.eq.s32.totalorder %s17, 0
        %p204 = scmp.eq.s32.totalorder %s18, 0
        %p205 = pnand %p203, %p204
        %p206 = pneg %p205
        %s207 = scalar_select %p206, %s19, 0
        %s208 = smul.u32 64, %s207
      $region24: #{gcn_forward_pallas.1} parent=19 // pred_fallthru
        _
      // Predicated region
      $region25: #{gcn_forward_pallas.1} parent=19 // pred_check
        %p209 = pneg %p106
      $region26: #{gcn_forward_pallas.1} parent=19 // pred_check_branch
        %211 = sbr.rel (%p209) target = $region28
      $region27: #{gcn_forward_pallas.1} parent=19 // pred_region
        %p212 = scmp.lt.s32.totalorder %s17, 3
        %s213 = scalar_select %p212, %s17, 3
        %s214 = smul.addr %s213, 16
        %s215 = smul.addr %s214, 4
        %s216 = scalar_lea.vmem %s2, %s215
      $region28: #{gcn_forward_pallas.1} parent=19 // pred_fallthru
        _
      // Predicated region
      $region29: #{gcn_forward_pallas.1} parent=19 // pred_check
        %p217 = pneg %p132
      $region30: #{gcn_forward_pallas.1} parent=19 // pred_check_branch
        %219 = sbr.rel (%p217) target = $region32
      $region31: #{gcn_forward_pallas.1} parent=19 // pred_region
        %p220 = scmp.lt.s32.totalorder %s17, 3
        %s221 = scalar_select %p220, %s17, 3
        %s222 = scalar_lea.vmem %s3, %s221
      $region32: #{gcn_forward_pallas.1} parent=19 // pred_fallthru
        _
    $region20: #{gcn_forward_pallas.1} parent=5 // pred_fallthru
      _
    %p223 = scmp.le.s32.totalorder 1, %s10
    %p224 = scmp.lt.s32.totalorder %s10, 17
    %p225 = pnand %p223, %p224
    %p226 = pneg %p225
    // Predicated region
    $region33: #{gcn_forward_pallas.1} parent=5 // pred_check
      _
    $region34: #{gcn_forward_pallas.1} parent=5 // pred_check_branch
      %228 = sbr.rel (%p225) target = $region36
    $region35: #{gcn_forward_pallas.1} parent=5 // pred_region
      %s229 = ssub.s32 %s10, 1
      %p230 = scmp.eq.s32.totalorder %s20, 0
      %p231 = scmp.eq.s32.totalorder %s21, 0
      %p232 = pnand %p230, %p231
      %p233 = pneg %p232
      %s234 = scalar_select %p233, %s22, 0
      %s235 = smul.u32 64, %s234
      %p236 = scmp.lt.s32.totalorder %s235, 127
      %s237 = scalar_select %p236, %s235, 127
      %s238 = smul.addr %s237, 4
      %s239 = scalar_lea.vmem %s0, %s238
      %p240 = pneg %p65
      %p241 = pneg %p62
      %p242 = pneg %p86
      %p243 = pneg %p83
      %p244 = scmp.lt.s32.totalorder %s20, 3
      %s245 = scalar_select %p244, %s20, 3
      %s246 = smul.addr %s245, 16
      %s247 = smul.addr %s246, 4
      %s248 = scalar_lea.vmem %s2, %s247
      %p249 = pneg %p112
      %p250 = pneg %p109
      %p251 = scmp.lt.s32.totalorder %s20, 3
      %s252 = scalar_select %p251, %s20, 3
      %s253 = scalar_lea.vmem %s3, %s252
      %p254 = pneg %p138
      %p255 = pneg %p135
      %p256 = pneg %p168
      %p257 = pneg %p165
      %p258 = scmp.eq.s32.totalorder %s20, 3
      %s259 = scalar_select %p258, %s21, 0
      %s260 = smul.u32 64, %s259
      %p261 = scmp.lt.s32.totalorder %s260, 127
      %s262 = scalar_select %p261, %s260, 127
      %s263 = smul.addr %s262, 8
      %s264 = scalar_lea.vmem %s4, %s263
      %p265 = scmp.eq.s32.totalorder %s20, 0
      %p266 = scmp.eq.s32.totalorder %s21, 0
      %p267 = pnand %p265, %p266
      %p268 = pneg %p267
      %s269 = scalar_select %p268, %s22, 0
      %s270 = smul.u32 64, %s269
      %p271 = scmp.lt.s32.totalorder %s270, 127
      %s272 = scalar_select %p271, %s270, 127
      %s273 = smul.addr %s272, 4
      %s274 = scalar_lea.vmem %s0, %s273
      %p275 = scmp.eq.s32.totalorder %s20, 0
      %p276 = scmp.eq.s32.totalorder %s21, 0
      %p277 = pnand %p275, %p276
      %p278 = pneg %p277
      %s279 = scalar_select %p278, %s22, 0
      %s280 = smul.u32 64, %s279
      %p281 = scmp.lt.s32.totalorder %s20, 3
      %s282 = scalar_select %p281, %s20, 3
      %s283 = smul.addr %s282, 16
      %s284 = smul.addr %s283, 4
      %s285 = scalar_lea.vmem %s2, %s284
      %p286 = scmp.lt.s32.totalorder %s20, 3
      %s287 = scalar_select %p286, %s20, 3
      %s288 = scalar_lea.vmem %s3, %s287
      %p289 = scmp.eq.s32.totalorder %s20, 3
      %s290 = scalar_select %p289, %s21, 0
      %s291 = smul.u32 64, %s290
      %p292 = scmp.lt.s32.totalorder %s291, 127
      %s293 = scalar_select %p292, %s291, 127
      %s294 = smul.addr %s293, 8
      %s295 = scalar_lea.vmem %s4, %s294
      %p296 = scmp.eq.s32.totalorder %s20, 3
      %s297 = scalar_select %p296, %s21, 0
      %s298 = smul.u32 64, %s297
      %s300 = smul.u32 %s22, 512
      %s301 = smul.u32 %s21, 512
      %p302 = scmp.eq.s32.totalorder %s21, 0
      // Predicated region
      $region37: #{gcn_forward_pallas.1} parent=35 // pred_check
        %p303 = pneg %p302
      $region38: #{gcn_forward_pallas.1} parent=35 // pred_check_branch
        %305 = sbr.rel (%p303) target = $region40
      $region39: #{gcn_forward_pallas.1} parent=35 // pred_region
        %p306 = scmp.eq.s32.totalorder %s20, 0
        // Predicated region
        $region41: #{gcn_forward_pallas.1} parent=39 // pred_check
          %p307 = pneg %p306
        $region42: #{gcn_forward_pallas.1} parent=39 // pred_check_branch
          %309 = sbr.rel (%p307) target = $region44
        $region43: #{gcn_forward_pallas.1} parent=39 // pred_region
          %v310 = vld [vmem:[%s274] sm:$0xf]
          %v311 = vld [vmem:[%s274 + $0x4] sm:$0xf]
          %v312 = vld [vmem:[%s274 + $0x8] sm:$0xf]
          %v313 = vld [vmem:[%s274 + $0xc] sm:$0xf]
          %v314 = vld [vmem:[%s274 + $0x10] sm:$0xf]
          %v315 = vld [vmem:[%s274 + $0x14] sm:$0xf]
          %v316 = vld [vmem:[%s274 + $0x18] sm:$0xf]
          %v317 = vld [vmem:[%s274 + $0x1c] sm:$0xf]
          %v318 = vld [vmem:[%s274 + $0x20] sm:$0xf]
          %v319 = vld [vmem:[%s274 + $0x24] sm:$0xf]
          %v320 = vld [vmem:[%s274 + $0x28] sm:$0xf]
          %v321 = vld [vmem:[%s274 + $0x2c] sm:$0xf]
          %v322 = vld [vmem:[%s274 + $0x30] sm:$0xf]
          %v323 = vld [vmem:[%s274 + $0x34] sm:$0xf]
          %v324 = vld [vmem:[%s274 + $0x38] sm:$0xf]
          %v325 = vld [vmem:[%s274 + $0x3c] sm:$0xf]
          %v326 = vld [vmem:[%s274 + $0x40] sm:$0xf]
          %v327 = vld [vmem:[%s274 + $0x44] sm:$0xf]
          %v328 = vld [vmem:[%s274 + $0x48] sm:$0xf]
          %v329 = vld [vmem:[%s274 + $0x4c] sm:$0xf]
          %v330 = vld [vmem:[%s274 + $0x50] sm:$0xf]
          %v331 = vld [vmem:[%s274 + $0x54] sm:$0xf]
          %v332 = vld [vmem:[%s274 + $0x58] sm:$0xf]
          %v333 = vld [vmem:[%s274 + $0x5c] sm:$0xf]
          %v334 = vld [vmem:[%s274 + $0x60] sm:$0xf]
          %v335 = vld [vmem:[%s274 + $0x64] sm:$0xf]
          %v336 = vld [vmem:[%s274 + $0x68] sm:$0xf]
          %v337 = vld [vmem:[%s274 + $0x6c] sm:$0xf]
          %v338 = vld [vmem:[%s274 + $0x70] sm:$0xf]
          %v339 = vld [vmem:[%s274 + $0x74] sm:$0xf]
          %v340 = vld [vmem:[%s274 + $0x78] sm:$0xf]
          %v341 = vld [vmem:[%s274 + $0x7c] sm:$0xf]
          %v342 = vld [vmem:[%s274 + $0x80] sm:$0xf]
          %v343 = vld [vmem:[%s274 + $0x84] sm:$0xf]
          %v344 = vld [vmem:[%s274 + $0x88] sm:$0xf]
          %v345 = vld [vmem:[%s274 + $0x8c] sm:$0xf]
          %v346 = vld [vmem:[%s274 + $0x90] sm:$0xf]
          %v347 = vld [vmem:[%s274 + $0x94] sm:$0xf]
          %v348 = vld [vmem:[%s274 + $0x98] sm:$0xf]
          %v349 = vld [vmem:[%s274 + $0x9c] sm:$0xf]
          %v350 = vld [vmem:[%s274 + $0xa0] sm:$0xf]
          %v351 = vld [vmem:[%s274 + $0xa4] sm:$0xf]
          %v352 = vld [vmem:[%s274 + $0xa8] sm:$0xf]
          %v353 = vld [vmem:[%s274 + $0xac] sm:$0xf]
          %v354 = vld [vmem:[%s274 + $0xb0] sm:$0xf]
          %v355 = vld [vmem:[%s274 + $0xb4] sm:$0xf]
          %v356 = vld [vmem:[%s274 + $0xb8] sm:$0xf]
          %v357 = vld [vmem:[%s274 + $0xbc] sm:$0xf]
          %v358 = vld [vmem:[%s274 + $0xc0] sm:$0xf]
          %v359 = vld [vmem:[%s274 + $0xc4] sm:$0xf]
          %v360 = vld [vmem:[%s274 + $0xc8] sm:$0xf]
          %v361 = vld [vmem:[%s274 + $0xcc] sm:$0xf]
          %v362 = vld [vmem:[%s274 + $0xd0] sm:$0xf]
          %v363 = vld [vmem:[%s274 + $0xd4] sm:$0xf]
          %v364 = vld [vmem:[%s274 + $0xd8] sm:$0xf]
          %v365 = vld [vmem:[%s274 + $0xdc] sm:$0xf]
          %v366 = vld [vmem:[%s274 + $0xe0] sm:$0xf]
          %v367 = vld [vmem:[%s274 + $0xe4] sm:$0xf]
          %v368 = vld [vmem:[%s274 + $0xe8] sm:$0xf]
          %v369 = vld [vmem:[%s274 + $0xec] sm:$0xf]
          %v370 = vld [vmem:[%s274 + $0xf0] sm:$0xf]
          %v371 = vld [vmem:[%s274 + $0xf4] sm:$0xf]
          %v372 = vld [vmem:[%s274 + $0xf8] sm:$0xf]
          %v373 = vld [vmem:[%s274 + $0xfc] sm:$0xf]
          %s374 = sshra.s32 %s300, 3
          %s375 = sand.u32 %s300, 7
          %s376 = smul.addr %s374, 4
          %s377 = scalar_lea.vmem [#allocation4], %s376
          %378 = vst [vmem:[%s377] sm:$0xf] %v310
          %379 = vst [vmem:[%s377 + $0x4] sm:$0xf] %v311
          %380 = vst [vmem:[%s377 + $0x8] sm:$0xf] %v312
          %381 = vst [vmem:[%s377 + $0xc] sm:$0xf] %v313
          %382 = vst [vmem:[%s377 + $0x10] sm:$0xf] %v314
          %383 = vst [vmem:[%s377 + $0x14] sm:$0xf] %v315
          %384 = vst [vmem:[%s377 + $0x18] sm:$0xf] %v316
          %385 = vst [vmem:[%s377 + $0x1c] sm:$0xf] %v317
          %386 = vst [vmem:[%s377 + $0x20] sm:$0xf] %v318
          %387 = vst [vmem:[%s377 + $0x24] sm:$0xf] %v319
          %388 = vst [vmem:[%s377 + $0x28] sm:$0xf] %v320
          %389 = vst [vmem:[%s377 + $0x2c] sm:$0xf] %v321
          %390 = vst [vmem:[%s377 + $0x30] sm:$0xf] %v322
          %391 = vst [vmem:[%s377 + $0x34] sm:$0xf] %v323
          %392 = vst [vmem:[%s377 + $0x38] sm:$0xf] %v324
          %393 = vst [vmem:[%s377 + $0x3c] sm:$0xf] %v325
          %394 = vst [vmem:[%s377 + $0x40] sm:$0xf] %v326
          %395 = vst [vmem:[%s377 + $0x44] sm:$0xf] %v327
          %396 = vst [vmem:[%s377 + $0x48] sm:$0xf] %v328
          %397 = vst [vmem:[%s377 + $0x4c] sm:$0xf] %v329
          %398 = vst [vmem:[%s377 + $0x50] sm:$0xf] %v330
          %399 = vst [vmem:[%s377 + $0x54] sm:$0xf] %v331
          %400 = vst [vmem:[%s377 + $0x58] sm:$0xf] %v332
          %401 = vst [vmem:[%s377 + $0x5c] sm:$0xf] %v333
          %402 = vst [vmem:[%s377 + $0x60] sm:$0xf] %v334
          %403 = vst [vmem:[%s377 + $0x64] sm:$0xf] %v335
          %404 = vst [vmem:[%s377 + $0x68] sm:$0xf] %v336
          %405 = vst [vmem:[%s377 + $0x6c] sm:$0xf] %v337
          %406 = vst [vmem:[%s377 + $0x70] sm:$0xf] %v338
          %407 = vst [vmem:[%s377 + $0x74] sm:$0xf] %v339
          %408 = vst [vmem:[%s377 + $0x78] sm:$0xf] %v340
          %409 = vst [vmem:[%s377 + $0x7c] sm:$0xf] %v341
          %410 = vst [vmem:[%s377 + $0x80] sm:$0xf] %v342
          %411 = vst [vmem:[%s377 + $0x84] sm:$0xf] %v343
          %412 = vst [vmem:[%s377 + $0x88] sm:$0xf] %v344
          %413 = vst [vmem:[%s377 + $0x8c] sm:$0xf] %v345
          %414 = vst [vmem:[%s377 + $0x90] sm:$0xf] %v346
          %415 = vst [vmem:[%s377 + $0x94] sm:$0xf] %v347
          %416 = vst [vmem:[%s377 + $0x98] sm:$0xf] %v348
          %417 = vst [vmem:[%s377 + $0x9c] sm:$0xf] %v349
          %418 = vst [vmem:[%s377 + $0xa0] sm:$0xf] %v350
          %419 = vst [vmem:[%s377 + $0xa4] sm:$0xf] %v351
          %420 = vst [vmem:[%s377 + $0xa8] sm:$0xf] %v352
          %421 = vst [vmem:[%s377 + $0xac] sm:$0xf] %v353
          %422 = vst [vmem:[%s377 + $0xb0] sm:$0xf] %v354
          %423 = vst [vmem:[%s377 + $0xb4] sm:$0xf] %v355
          %424 = vst [vmem:[%s377 + $0xb8] sm:$0xf] %v356
          %425 = vst [vmem:[%s377 + $0xbc] sm:$0xf] %v357
          %426 = vst [vmem:[%s377 + $0xc0] sm:$0xf] %v358
          %427 = vst [vmem:[%s377 + $0xc4] sm:$0xf] %v359
          %428 = vst [vmem:[%s377 + $0xc8] sm:$0xf] %v360
          %429 = vst [vmem:[%s377 + $0xcc] sm:$0xf] %v361
          %430 = vst [vmem:[%s377 + $0xd0] sm:$0xf] %v362
          %431 = vst [vmem:[%s377 + $0xd4] sm:$0xf] %v363
          %432 = vst [vmem:[%s377 + $0xd8] sm:$0xf] %v364
          %433 = vst [vmem:[%s377 + $0xdc] sm:$0xf] %v365
          %434 = vst [vmem:[%s377 + $0xe0] sm:$0xf] %v366
          %435 = vst [vmem:[%s377 + $0xe4] sm:$0xf] %v367
          %436 = vst [vmem:[%s377 + $0xe8] sm:$0xf] %v368
          %437 = vst [vmem:[%s377 + $0xec] sm:$0xf] %v369
          %438 = vst [vmem:[%s377 + $0xf0] sm:$0xf] %v370
          %439 = vst [vmem:[%s377 + $0xf4] sm:$0xf] %v371
          %440 = vst [vmem:[%s377 + $0xf8] sm:$0xf] %v372
          %441 = vst [vmem:[%s377 + $0xfc] sm:$0xf] %v373
        $region44: #{gcn_forward_pallas.1} parent=39 // pred_fallthru
          _
        %p442 = scmp.lt.s32.totalorder %s20, 0
        %s443 = ssub.s32 0, %s20
        %s444 = scalar_select %p442, %s443, %s20
        %s445 = sand.u32 %s444, 1
        %s446 = ssub.s32 0, %s445
        %s447 = scalar_select %p442, %s446, %s445
        %p448 = scmp.ne.s32.totalorder %s447, 0
        %p449 = scmp.lt.s32.totalorder %s447, 0
        %p450 = pnand %p449, %p448
        %p451 = pneg %p450
        %s452 = sadd.s32 %s447, 2
        %s453 = scalar_select %p451, %s452, %s447
        %p454 = scmp.eq.s32.totalorder %s453, 1
        // Predicated region
        $region45: #{gcn_forward_pallas.1} parent=39 // pred_check
          %p455 = pneg %p454
        $region46: #{gcn_forward_pallas.1} parent=39 // pred_check_branch
          %457 = sbr.rel (%p455) target = $region48
        $region47: #{gcn_forward_pallas.1} parent=39 // pred_region
          %v458 = vld [vmem:[%s285] sm:$0xf]
          %v459 = vld [vmem:[%s285 + $0x4] sm:$0xf]
          %v460 = vld [vmem:[%s285 + $0x8] sm:$0xf]
          %v461 = vld [vmem:[%s285 + $0xc] sm:$0xf]
          %v462 = vld [vmem:[%s285 + $0x10] sm:$0xf]
          %v463 = vld [vmem:[%s285 + $0x14] sm:$0xf]
          %v464 = vld [vmem:[%s285 + $0x18] sm:$0xf]
          %v465 = vld [vmem:[%s285 + $0x1c] sm:$0xf]
          %v466 = vld [vmem:[%s285 + $0x20] sm:$0xf]
          %v467 = vld [vmem:[%s285 + $0x24] sm:$0xf]
          %v468 = vld [vmem:[%s285 + $0x28] sm:$0xf]
          %v469 = vld [vmem:[%s285 + $0x2c] sm:$0xf]
          %v470 = vld [vmem:[%s285 + $0x30] sm:$0xf]
          %v471 = vld [vmem:[%s285 + $0x34] sm:$0xf]
          %v472 = vld [vmem:[%s285 + $0x38] sm:$0xf]
          %v473 = vld [vmem:[%s285 + $0x3c] sm:$0xf]
          %s474 = sshra.s32 %s300, 3
          %s475 = sand.u32 %s300, 7
          %s476 = smul.addr %s474, 4
          %s477 = scalar_lea.vmem [#allocation2], %s476
          %v478 = vld [vmem:[%s477] sm:$0xf]
          %v479 = vld [vmem:[%s477 + $0x4] sm:$0xf]
          %v480 = vld [vmem:[%s477 + $0x8] sm:$0xf]
          %v481 = vld [vmem:[%s477 + $0xc] sm:$0xf]
          %v482 = vld [vmem:[%s477 + $0x10] sm:$0xf]
          %v483 = vld [vmem:[%s477 + $0x14] sm:$0xf]
          %v484 = vld [vmem:[%s477 + $0x18] sm:$0xf]
          %v485 = vld [vmem:[%s477 + $0x1c] sm:$0xf]
          %v486 = vld [vmem:[%s477 + $0x20] sm:$0xf]
          %v487 = vld [vmem:[%s477 + $0x24] sm:$0xf]
          %v488 = vld [vmem:[%s477 + $0x28] sm:$0xf]
          %v489 = vld [vmem:[%s477 + $0x2c] sm:$0xf]
          %v490 = vld [vmem:[%s477 + $0x30] sm:$0xf]
          %v491 = vld [vmem:[%s477 + $0x34] sm:$0xf]
          %v492 = vld [vmem:[%s477 + $0x38] sm:$0xf]
          %v493 = vld [vmem:[%s477 + $0x3c] sm:$0xf]
          %v494 = vld [vmem:[%s477 + $0x40] sm:$0xf]
          %v495 = vld [vmem:[%s477 + $0x44] sm:$0xf]
          %v496 = vld [vmem:[%s477 + $0x48] sm:$0xf]
          %v497 = vld [vmem:[%s477 + $0x4c] sm:$0xf]
          %v498 = vld [vmem:[%s477 + $0x50] sm:$0xf]
          %v499 = vld [vmem:[%s477 + $0x54] sm:$0xf]
          %v500 = vld [vmem:[%s477 + $0x58] sm:$0xf]
          %v501 = vld [vmem:[%s477 + $0x5c] sm:$0xf]
          %v502 = vld [vmem:[%s477 + $0x60] sm:$0xf]
          %v503 = vld [vmem:[%s477 + $0x64] sm:$0xf]
          %v504 = vld [vmem:[%s477 + $0x68] sm:$0xf]
          %v505 = vld [vmem:[%s477 + $0x6c] sm:$0xf]
          %v506 = vld [vmem:[%s477 + $0x70] sm:$0xf]
          %v507 = vld [vmem:[%s477 + $0x74] sm:$0xf]
          %v508 = vld [vmem:[%s477 + $0x78] sm:$0xf]
          %v509 = vld [vmem:[%s477 + $0x7c] sm:$0xf]
          %v510 = vld [vmem:[%s477 + $0x80] sm:$0xf]
          %v511 = vld [vmem:[%s477 + $0x84] sm:$0xf]
          %v512 = vld [vmem:[%s477 + $0x88] sm:$0xf]
          %v513 = vld [vmem:[%s477 + $0x8c] sm:$0xf]
          %v514 = vld [vmem:[%s477 + $0x90] sm:$0xf]
          %v515 = vld [vmem:[%s477 + $0x94] sm:$0xf]
          %v516 = vld [vmem:[%s477 + $0x98] sm:$0xf]
          %v517 = vld [vmem:[%s477 + $0x9c] sm:$0xf]
          %v518 = vld [vmem:[%s477 + $0xa0] sm:$0xf]
          %v519 = vld [vmem:[%s477 + $0xa4] sm:$0xf]
          %v520 = vld [vmem:[%s477 + $0xa8] sm:$0xf]
          %v521 = vld [vmem:[%s477 + $0xac] sm:$0xf]
          %v522 = vld [vmem:[%s477 + $0xb0] sm:$0xf]
          %v523 = vld [vmem:[%s477 + $0xb4] sm:$0xf]
          %v524 = vld [vmem:[%s477 + $0xb8] sm:$0xf]
          %v525 = vld [vmem:[%s477 + $0xbc] sm:$0xf]
          %v526 = vld [vmem:[%s477 + $0xc0] sm:$0xf]
          %v527 = vld [vmem:[%s477 + $0xc4] sm:$0xf]
          %v528 = vld [vmem:[%s477 + $0xc8] sm:$0xf]
          %v529 = vld [vmem:[%s477 + $0xcc] sm:$0xf]
          %v530 = vld [vmem:[%s477 + $0xd0] sm:$0xf]
          %v531 = vld [vmem:[%s477 + $0xd4] sm:$0xf]
          %v532 = vld [vmem:[%s477 + $0xd8] sm:$0xf]
          %v533 = vld [vmem:[%s477 + $0xdc] sm:$0xf]
          %v534 = vld [vmem:[%s477 + $0xe0] sm:$0xf]
          %v535 = vld [vmem:[%s477 + $0xe4] sm:$0xf]
          %v536 = vld [vmem:[%s477 + $0xe8] sm:$0xf]
          %v537 = vld [vmem:[%s477 + $0xec] sm:$0xf]
          %v538 = vld [vmem:[%s477 + $0xf0] sm:$0xf]
          %v539 = vld [vmem:[%s477 + $0xf4] sm:$0xf]
          %v540 = vld [vmem:[%s477 + $0xf8] sm:$0xf]
          %v541 = vld [vmem:[%s477 + $0xfc] sm:$0xf]
          %v606 = vunpack.c.l.b16 %v478
          %v607 = vunpack.c.l.b16 %v479
          %v608 = vunpack.c.l.b16 %v480
          %v609 = vunpack.c.l.b16 %v481
          %v610 = vunpack.c.l.b16 %v482
          %v611 = vunpack.c.l.b16 %v483
          %v612 = vunpack.c.l.b16 %v484
          %v613 = vunpack.c.l.b16 %v485
          %v614 = vunpack.c.l.b16 %v486
          %v615 = vunpack.c.l.b16 %v487
          %v616 = vunpack.c.l.b16 %v488
          %v617 = vunpack.c.l.b16 %v489
          %v618 = vunpack.c.l.b16 %v490
          %v619 = vunpack.c.l.b16 %v491
          %v620 = vunpack.c.l.b16 %v492
          %v621 = vunpack.c.l.b16 %v493
          %v622 = vunpack.c.l.b16 %v494
          %v623 = vunpack.c.l.b16 %v495
          %v624 = vunpack.c.l.b16 %v496
          %v625 = vunpack.c.l.b16 %v497
          %v626 = vunpack.c.l.b16 %v498
          %v627 = vunpack.c.l.b16 %v499
          %v628 = vunpack.c.l.b16 %v500
          %v629 = vunpack.c.l.b16 %v501
          %v630 = vunpack.c.l.b16 %v502
          %v631 = vunpack.c.l.b16 %v503
          %v632 = vunpack.c.l.b16 %v504
          %v633 = vunpack.c.l.b16 %v505
          %v634 = vunpack.c.l.b16 %v506
          %v635 = vunpack.c.l.b16 %v507
          %v636 = vunpack.c.l.b16 %v508
          %v637 = vunpack.c.l.b16 %v509
          %v638 = vunpack.c.l.b16 %v510
          %v639 = vunpack.c.l.b16 %v511
          %v640 = vunpack.c.l.b16 %v512
          %v641 = vunpack.c.l.b16 %v513
          %v642 = vunpack.c.l.b16 %v514
          %v643 = vunpack.c.l.b16 %v515
          %v644 = vunpack.c.l.b16 %v516
          %v645 = vunpack.c.l.b16 %v517
          %v646 = vunpack.c.l.b16 %v518
          %v647 = vunpack.c.l.b16 %v519
          %v648 = vunpack.c.l.b16 %v520
          %v649 = vunpack.c.l.b16 %v521
          %v650 = vunpack.c.l.b16 %v522
          %v651 = vunpack.c.l.b16 %v523
          %v652 = vunpack.c.l.b16 %v524
          %v653 = vunpack.c.l.b16 %v525
          %v654 = vunpack.c.l.b16 %v526
          %v655 = vunpack.c.l.b16 %v527
          %v656 = vunpack.c.l.b16 %v528
          %v657 = vunpack.c.l.b16 %v529
          %v658 = vunpack.c.l.b16 %v530
          %v659 = vunpack.c.l.b16 %v531
          %v660 = vunpack.c.l.b16 %v532
          %v661 = vunpack.c.l.b16 %v533
          %v662 = vunpack.c.l.b16 %v534
          %v663 = vunpack.c.l.b16 %v535
          %v664 = vunpack.c.l.b16 %v536
          %v665 = vunpack.c.l.b16 %v537
          %v666 = vunpack.c.l.b16 %v538
          %v667 = vunpack.c.l.b16 %v539
          %v668 = vunpack.c.l.b16 %v540
          %v669 = vunpack.c.l.b16 %v541
          %v670 = vpack.c.b16 %v607, %v606
          %v671 = vpack.c.b16 %v609, %v608
          %v672 = vpack.c.b16 %v611, %v610
          %v673 = vpack.c.b16 %v613, %v612
          %v674 = vpack.c.b16 %v615, %v614
          %v675 = vpack.c.b16 %v617, %v616
          %v676 = vpack.c.b16 %v619, %v618
          %v677 = vpack.c.b16 %v621, %v620
          %v678 = vpack.c.b16 %v623, %v622
          %v679 = vpack.c.b16 %v625, %v624
          %v680 = vpack.c.b16 %v627, %v626
          %v681 = vpack.c.b16 %v629, %v628
          %v682 = vpack.c.b16 %v631, %v630
          %v683 = vpack.c.b16 %v633, %v632
          %v684 = vpack.c.b16 %v635, %v634
          %v685 = vpack.c.b16 %v637, %v636
          %v686 = vpack.c.b16 %v639, %v638
          %v687 = vpack.c.b16 %v641, %v640
          %v688 = vpack.c.b16 %v643, %v642
          %v689 = vpack.c.b16 %v645, %v644
          %v690 = vpack.c.b16 %v647, %v646
          %v691 = vpack.c.b16 %v649, %v648
          %v692 = vpack.c.b16 %v651, %v650
          %v693 = vpack.c.b16 %v653, %v652
          %v694 = vpack.c.b16 %v655, %v654
          %v695 = vpack.c.b16 %v657, %v656
          %v696 = vpack.c.b16 %v659, %v658
          %v697 = vpack.c.b16 %v661, %v660
          %v698 = vpack.c.b16 %v663, %v662
          %v699 = vpack.c.b16 %v665, %v664
          %v700 = vpack.c.b16 %v667, %v666
          %v701 = vpack.c.b16 %v669, %v668
          %v750 = vunpack.c.l.b16 %v458
          %v751 = vunpack.c.l.b16 %v459
          %v752 = vunpack.c.l.b16 %v460
          %v753 = vunpack.c.l.b16 %v461
          %v754 = vunpack.c.l.b16 %v462
          %v755 = vunpack.c.l.b16 %v463
          %v756 = vunpack.c.l.b16 %v464
          %v757 = vunpack.c.l.b16 %v465
          %v758 = vunpack.c.l.b16 %v466
          %v759 = vunpack.c.l.b16 %v467
          %v760 = vunpack.c.l.b16 %v468
          %v761 = vunpack.c.l.b16 %v469
          %v762 = vunpack.c.l.b16 %v470
          %v763 = vunpack.c.l.b16 %v471
          %v764 = vunpack.c.l.b16 %v472
          %v765 = vunpack.c.l.b16 %v473
          %v766 = vpack.c.b16 %v751, %v750
          %v767 = vpack.c.b16 %v753, %v752
          %v768 = vpack.c.b16 %v755, %v754
          %v769 = vpack.c.b16 %v757, %v756
          %v770 = vpack.c.b16 %v759, %v758
          %v771 = vpack.c.b16 %v761, %v760
          %v772 = vpack.c.b16 %v763, %v762
          %v773 = vpack.c.b16 %v765, %v764
          %782 = vmatprep.subr.bf16.mxu0 0
          %783 = vmatpush1.bf16.msra.mxu0 %v773
          %784 = vmatprep.subr.bf16.mxu0 0
          %785 = vmatpush1.bf16.msra.mxu0 %v772
          %786 = vmatprep.subr.bf16.mxu0 0
          %787 = vmatpush1.bf16.msra.mxu0 %v771
          %788 = vmatprep.subr.bf16.mxu0 0
          %789 = vmatpush1.bf16.msra.mxu0 %v770
          %790 = vmatprep.subr.bf16.mxu0 0
          %791 = vmatpush1.bf16.msra.mxu0 %v769
          %792 = vmatprep.subr.bf16.mxu0 0
          %793 = vmatpush1.bf16.msra.mxu0 %v768
          %794 = vmatprep.subr.bf16.mxu0 0
          %795 = vmatpush1.bf16.msra.mxu0 %v767
          %796 = vmatprep.subr.bf16.mxu0 0
          %797 = vmatpush1.bf16.msra.mxu0 %v766
          %798 = vmatprep.subr.bf16.mxu0 0
          %799 = vmatpush2.bf16.msra.mxu0 0
          %800 = vmatprep.subr.bf16.mxu0 0
          %801 = vmatpush2.bf16.msra.mxu0 0
          %802 = vmatprep.subr.bf16.mxu0 0
          %803 = vmatpush2.bf16.msra.mxu0 0
          %804 = vmatprep.subr.bf16.mxu0 0
          %805 = vmatpush2.bf16.msra.mxu0 0
          %806 = vmatprep.subr.bf16.mxu0 0
          %807 = vmatpush2.bf16.msra.mxu0 0
          %808 = vmatprep.subr.bf16.mxu0 0
          %809 = vmatpush2.bf16.msra.mxu0 0
          %810 = vmatprep.subr.bf16.mxu0 0
          %811 = vmatpush2.bf16.msra.mxu0 0
          %812 = vmatprep.subr.bf16.mxu0 0
          %813 = vmatpush2.bf16.msra.mxu0 0
          %814 = vmatprep.mubr.bf16.mxu0 0
          %815 = vmatmul.mubr.bf16.gmra.mxu0 %v670
          %v816 = vpop.f32.mrf.mxu0
          %v817 = vadd.f32 0.0, %v816
          %v818 = vpop.f32.mrf.mxu0
          %v819 = vpop.f32.mrf.mxu0
          %v820 = vadd.f32 0.0, %v819
          %v821 = vpop.f32.mrf.mxu0
          %822 = vmatprep.mubr.bf16.mxu0 0
          %823 = vmatmul.mubr.bf16.gmra.mxu0 %v671
          %v824 = vpop.f32.mrf.mxu0
          %v825 = vadd.f32 0.0, %v824
          %v826 = vpop.f32.mrf.mxu0
          %v827 = vpop.f32.mrf.mxu0
          %v828 = vadd.f32 0.0, %v827
          %v829 = vpop.f32.mrf.mxu0
          %830 = vmatprep.mubr.bf16.mxu0 0
          %831 = vmatmul.mubr.bf16.gmra.mxu0 %v672
          %v832 = vpop.f32.mrf.mxu0
          %v833 = vadd.f32 0.0, %v832
          %v834 = vpop.f32.mrf.mxu0
          %v835 = vpop.f32.mrf.mxu0
          %v836 = vadd.f32 0.0, %v835
          %v837 = vpop.f32.mrf.mxu0
          %838 = vmatprep.mubr.bf16.mxu0 0
          %839 = vmatmul.mubr.bf16.gmra.mxu0 %v673
          %v840 = vpop.f32.mrf.mxu0
          %v841 = vadd.f32 0.0, %v840
          %v842 = vpop.f32.mrf.mxu0
          %v843 = vpop.f32.mrf.mxu0
          %v844 = vadd.f32 0.0, %v843
          %v845 = vpop.f32.mrf.mxu0
          %846 = vmatprep.mubr.bf16.mxu0 0
          %847 = vmatmul.mubr.bf16.gmra.mxu0 %v674
          %v848 = vpop.f32.mrf.mxu0
          %v849 = vadd.f32 0.0, %v848
          %v850 = vpop.f32.mrf.mxu0
          %v851 = vpop.f32.mrf.mxu0
          %v852 = vadd.f32 0.0, %v851
          %v853 = vpop.f32.mrf.mxu0
          %854 = vmatprep.mubr.bf16.mxu0 0
          %855 = vmatmul.mubr.bf16.gmra.mxu0 %v675
          %v856 = vpop.f32.mrf.mxu0
          %v857 = vadd.f32 0.0, %v856
          %v858 = vpop.f32.mrf.mxu0
          %v859 = vpop.f32.mrf.mxu0
          %v860 = vadd.f32 0.0, %v859
          %v861 = vpop.f32.mrf.mxu0
          %862 = vmatprep.mubr.bf16.mxu0 0
          %863 = vmatmul.mubr.bf16.gmra.mxu0 %v676
          %v864 = vpop.f32.mrf.mxu0
          %v865 = vadd.f32 0.0, %v864
          %v866 = vpop.f32.mrf.mxu0
          %v867 = vpop.f32.mrf.mxu0
          %v868 = vadd.f32 0.0, %v867
          %v869 = vpop.f32.mrf.mxu0
          %870 = vmatprep.mubr.bf16.mxu0 0
          %871 = vmatmul.mubr.bf16.gmra.mxu0 %v677
          %v872 = vpop.f32.mrf.mxu0
          %v873 = vadd.f32 0.0, %v872
          %v874 = vpop.f32.mrf.mxu0
          %v875 = vpop.f32.mrf.mxu0
          %v876 = vadd.f32 0.0, %v875
          %v877 = vpop.f32.mrf.mxu0
          %878 = vmatprep.mubr.bf16.mxu0 0
          %879 = vmatmul.mubr.bf16.gmra.mxu0 %v678
          %v880 = vpop.f32.mrf.mxu0
          %v881 = vadd.f32 0.0, %v880
          %v882 = vpop.f32.mrf.mxu0
          %v883 = vpop.f32.mrf.mxu0
          %v884 = vadd.f32 0.0, %v883
          %v885 = vpop.f32.mrf.mxu0
          %886 = vmatprep.mubr.bf16.mxu0 0
          %887 = vmatmul.mubr.bf16.gmra.mxu0 %v679
          %v888 = vpop.f32.mrf.mxu0
          %v889 = vadd.f32 0.0, %v888
          %v890 = vpop.f32.mrf.mxu0
          %v891 = vpop.f32.mrf.mxu0
          %v892 = vadd.f32 0.0, %v891
          %v893 = vpop.f32.mrf.mxu0
          %894 = vmatprep.mubr.bf16.mxu0 0
          %895 = vmatmul.mubr.bf16.gmra.mxu0 %v680
          %v896 = vpop.f32.mrf.mxu0
          %v897 = vadd.f32 0.0, %v896
          %v898 = vpop.f32.mrf.mxu0
          %v899 = vpop.f32.mrf.mxu0
          %v900 = vadd.f32 0.0, %v899
          %v901 = vpop.f32.mrf.mxu0
          %902 = vmatprep.mubr.bf16.mxu0 0
          %903 = vmatmul.mubr.bf16.gmra.mxu0 %v681
          %v904 = vpop.f32.mrf.mxu0
          %v905 = vadd.f32 0.0, %v904
          %v906 = vpop.f32.mrf.mxu0
          %v907 = vpop.f32.mrf.mxu0
          %v908 = vadd.f32 0.0, %v907
          %v909 = vpop.f32.mrf.mxu0
          %910 = vmatprep.mubr.bf16.mxu0 0
          %911 = vmatmul.mubr.bf16.gmra.mxu0 %v682
          %v912 = vpop.f32.mrf.mxu0
          %v913 = vadd.f32 0.0, %v912
          %v914 = vpop.f32.mrf.mxu0
          %v915 = vpop.f32.mrf.mxu0
          %v916 = vadd.f32 0.0, %v915
          %v917 = vpop.f32.mrf.mxu0
          %918 = vmatprep.mubr.bf16.mxu0 0
          %919 = vmatmul.mubr.bf16.gmra.mxu0 %v683
          %v920 = vpop.f32.mrf.mxu0
          %v921 = vadd.f32 0.0, %v920
          %v922 = vpop.f32.mrf.mxu0
          %v923 = vpop.f32.mrf.mxu0
          %v924 = vadd.f32 0.0, %v923
          %v925 = vpop.f32.mrf.mxu0
          %926 = vmatprep.mubr.bf16.mxu0 0
          %927 = vmatmul.mubr.bf16.gmra.mxu0 %v684
          %v928 = vpop.f32.mrf.mxu0
          %v929 = vadd.f32 0.0, %v928
          %v930 = vpop.f32.mrf.mxu0
          %v931 = vpop.f32.mrf.mxu0
          %v932 = vadd.f32 0.0, %v931
          %v933 = vpop.f32.mrf.mxu0
          %934 = vmatprep.mubr.bf16.mxu0 0
          %935 = vmatmul.mubr.bf16.gmra.mxu0 %v685
          %v936 = vpop.f32.mrf.mxu0
          %v937 = vadd.f32 0.0, %v936
          %v938 = vpop.f32.mrf.mxu0
          %v939 = vpop.f32.mrf.mxu0
          %v940 = vadd.f32 0.0, %v939
          %v941 = vpop.f32.mrf.mxu0
          %942 = vmatprep.mubr.bf16.mxu0 0
          %943 = vmatmul.mubr.bf16.gmra.mxu0 %v686
          %v944 = vpop.f32.mrf.mxu0
          %v945 = vadd.f32 0.0, %v944
          %v946 = vpop.f32.mrf.mxu0
          %v947 = vpop.f32.mrf.mxu0
          %v948 = vadd.f32 0.0, %v947
          %v949 = vpop.f32.mrf.mxu0
          %950 = vmatprep.mubr.bf16.mxu0 0
          %951 = vmatmul.mubr.bf16.gmra.mxu0 %v687
          %v952 = vpop.f32.mrf.mxu0
          %v953 = vadd.f32 0.0, %v952
          %v954 = vpop.f32.mrf.mxu0
          %v955 = vpop.f32.mrf.mxu0
          %v956 = vadd.f32 0.0, %v955
          %v957 = vpop.f32.mrf.mxu0
          %958 = vmatprep.mubr.bf16.mxu0 0
          %959 = vmatmul.mubr.bf16.gmra.mxu0 %v688
          %v960 = vpop.f32.mrf.mxu0
          %v961 = vadd.f32 0.0, %v960
          %v962 = vpop.f32.mrf.mxu0
          %v963 = vpop.f32.mrf.mxu0
          %v964 = vadd.f32 0.0, %v963
          %v965 = vpop.f32.mrf.mxu0
          %966 = vmatprep.mubr.bf16.mxu0 0
          %967 = vmatmul.mubr.bf16.gmra.mxu0 %v689
          %v968 = vpop.f32.mrf.mxu0
          %v969 = vadd.f32 0.0, %v968
          %v970 = vpop.f32.mrf.mxu0
          %v971 = vpop.f32.mrf.mxu0
          %v972 = vadd.f32 0.0, %v971
          %v973 = vpop.f32.mrf.mxu0
          %974 = vmatprep.mubr.bf16.mxu0 0
          %975 = vmatmul.mubr.bf16.gmra.mxu0 %v690
          %v976 = vpop.f32.mrf.mxu0
          %v977 = vadd.f32 0.0, %v976
          %v978 = vpop.f32.mrf.mxu0
          %v979 = vpop.f32.mrf.mxu0
          %v980 = vadd.f32 0.0, %v979
          %v981 = vpop.f32.mrf.mxu0
          %982 = vmatprep.mubr.bf16.mxu0 0
          %983 = vmatmul.mubr.bf16.gmra.mxu0 %v691
          %v984 = vpop.f32.mrf.mxu0
          %v985 = vadd.f32 0.0, %v984
          %v986 = vpop.f32.mrf.mxu0
          %v987 = vpop.f32.mrf.mxu0
          %v988 = vadd.f32 0.0, %v987
          %v989 = vpop.f32.mrf.mxu0
          %990 = vmatprep.mubr.bf16.mxu0 0
          %991 = vmatmul.mubr.bf16.gmra.mxu0 %v692
          %v992 = vpop.f32.mrf.mxu0
          %v993 = vadd.f32 0.0, %v992
          %v994 = vpop.f32.mrf.mxu0
          %v995 = vpop.f32.mrf.mxu0
          %v996 = vadd.f32 0.0, %v995
          %v997 = vpop.f32.mrf.mxu0
          %998 = vmatprep.mubr.bf16.mxu0 0
          %999 = vmatmul.mubr.bf16.gmra.mxu0 %v693
          %v1000 = vpop.f32.mrf.mxu0
          %v1001 = vadd.f32 0.0, %v1000
          %v1002 = vpop.f32.mrf.mxu0
          %v1003 = vpop.f32.mrf.mxu0
          %v1004 = vadd.f32 0.0, %v1003
          %v1005 = vpop.f32.mrf.mxu0
          %1006 = vmatprep.mubr.bf16.mxu0 0
          %1007 = vmatmul.mubr.bf16.gmra.mxu0 %v694
          %v1008 = vpop.f32.mrf.mxu0
          %v1009 = vadd.f32 0.0, %v1008
          %v1010 = vpop.f32.mrf.mxu0
          %v1011 = vpop.f32.mrf.mxu0
          %v1012 = vadd.f32 0.0, %v1011
          %v1013 = vpop.f32.mrf.mxu0
          %1014 = vmatprep.mubr.bf16.mxu0 0
          %1015 = vmatmul.mubr.bf16.gmra.mxu0 %v695
          %v1016 = vpop.f32.mrf.mxu0
          %v1017 = vadd.f32 0.0, %v1016
          %v1018 = vpop.f32.mrf.mxu0
          %v1019 = vpop.f32.mrf.mxu0
          %v1020 = vadd.f32 0.0, %v1019
          %v1021 = vpop.f32.mrf.mxu0
          %1022 = vmatprep.mubr.bf16.mxu0 0
          %1023 = vmatmul.mubr.bf16.gmra.mxu0 %v696
          %v1024 = vpop.f32.mrf.mxu0
          %v1025 = vadd.f32 0.0, %v1024
          %v1026 = vpop.f32.mrf.mxu0
          %v1027 = vpop.f32.mrf.mxu0
          %v1028 = vadd.f32 0.0, %v1027
          %v1029 = vpop.f32.mrf.mxu0
          %1030 = vmatprep.mubr.bf16.mxu0 0
          %1031 = vmatmul.mubr.bf16.gmra.mxu0 %v697
          %v1032 = vpop.f32.mrf.mxu0
          %v1033 = vadd.f32 0.0, %v1032
          %v1034 = vpop.f32.mrf.mxu0
          %v1035 = vpop.f32.mrf.mxu0
          %v1036 = vadd.f32 0.0, %v1035
          %v1037 = vpop.f32.mrf.mxu0
          %1038 = vmatprep.mubr.bf16.mxu0 0
          %1039 = vmatmul.mubr.bf16.gmra.mxu0 %v698
          %v1040 = vpop.f32.mrf.mxu0
          %v1041 = vadd.f32 0.0, %v1040
          %v1042 = vpop.f32.mrf.mxu0
          %v1043 = vpop.f32.mrf.mxu0
          %v1044 = vadd.f32 0.0, %v1043
          %v1045 = vpop.f32.mrf.mxu0
          %1046 = vmatprep.mubr.bf16.mxu0 0
          %1047 = vmatmul.mubr.bf16.gmra.mxu0 %v699
          %v1048 = vpop.f32.mrf.mxu0
          %v1049 = vadd.f32 0.0, %v1048
          %v1050 = vpop.f32.mrf.mxu0
          %v1051 = vpop.f32.mrf.mxu0
          %v1052 = vadd.f32 0.0, %v1051
          %v1053 = vpop.f32.mrf.mxu0
          %1054 = vmatprep.mubr.bf16.mxu0 0
          %1055 = vmatmul.mubr.bf16.gmra.mxu0 %v700
          %v1056 = vpop.f32.mrf.mxu0
          %v1057 = vadd.f32 0.0, %v1056
          %v1058 = vpop.f32.mrf.mxu0
          %v1059 = vpop.f32.mrf.mxu0
          %v1060 = vadd.f32 0.0, %v1059
          %v1061 = vpop.f32.mrf.mxu0
          %1062 = vmatprep.mubr.bf16.mxu0 0
          %1063 = vmatmul.mubr.bf16.gmra.mxu0 %v701
          %v1064 = vpop.f32.mrf.mxu0
          %v1065 = vadd.f32 0.0, %v1064
          %v1066 = vpop.f32.mrf.mxu0
          %v1067 = vpop.f32.mrf.mxu0
          %v1068 = vadd.f32 0.0, %v1067
          %v1069 = vpop.f32.mrf.mxu0
          %1070 = vdwg.mxu0
          %v1071 = vpack.c.bf16 %v820, %v817
          %v1072 = vpack.c.bf16 %v828, %v825
          %v1073 = vpack.c.bf16 %v836, %v833
          %v1074 = vpack.c.bf16 %v844, %v841
          %v1075 = vpack.c.bf16 %v852, %v849
          %v1076 = vpack.c.bf16 %v860, %v857
          %v1077 = vpack.c.bf16 %v868, %v865
          %v1078 = vpack.c.bf16 %v876, %v873
          %v1079 = vpack.c.bf16 %v884, %v881
          %v1080 = vpack.c.bf16 %v892, %v889
          %v1081 = vpack.c.bf16 %v900, %v897
          %v1082 = vpack.c.bf16 %v908, %v905
          %v1083 = vpack.c.bf16 %v916, %v913
          %v1084 = vpack.c.bf16 %v924, %v921
          %v1085 = vpack.c.bf16 %v932, %v929
          %v1086 = vpack.c.bf16 %v940, %v937
          %v1087 = vpack.c.bf16 %v948, %v945
          %v1088 = vpack.c.bf16 %v956, %v953
          %v1089 = vpack.c.bf16 %v964, %v961
          %v1090 = vpack.c.bf16 %v972, %v969
          %v1091 = vpack.c.bf16 %v980, %v977
          %v1092 = vpack.c.bf16 %v988, %v985
          %v1093 = vpack.c.bf16 %v996, %v993
          %v1094 = vpack.c.bf16 %v1004, %v1001
          %v1095 = vpack.c.bf16 %v1012, %v1009
          %v1096 = vpack.c.bf16 %v1020, %v1017
          %v1097 = vpack.c.bf16 %v1028, %v1025
          %v1098 = vpack.c.bf16 %v1036, %v1033
          %v1099 = vpack.c.bf16 %v1044, %v1041
          %v1100 = vpack.c.bf16 %v1052, %v1049
          %v1101 = vpack.c.bf16 %v1060, %v1057
          %v1102 = vpack.c.bf16 %v1068, %v1065
          %v1135 = vunpack.c.l.b16 %v1071
          %v1136 = vunpack.c.h.b16 %v1071
          %v1137 = vunpack.c.l.b16 %v1072
          %v1138 = vunpack.c.h.b16 %v1072
          %v1139 = vunpack.c.l.b16 %v1073
          %v1140 = vunpack.c.h.b16 %v1073
          %v1141 = vunpack.c.l.b16 %v1074
          %v1142 = vunpack.c.h.b16 %v1074
          %v1143 = vunpack.c.l.b16 %v1075
          %v1144 = vunpack.c.h.b16 %v1075
          %v1145 = vunpack.c.l.b16 %v1076
          %v1146 = vunpack.c.h.b16 %v1076
          %v1147 = vunpack.c.l.b16 %v1077
          %v1148 = vunpack.c.h.b16 %v1077
          %v1149 = vunpack.c.l.b16 %v1078
          %v1150 = vunpack.c.h.b16 %v1078
          %v1151 = vunpack.c.l.b16 %v1079
          %v1152 = vunpack.c.h.b16 %v1079
          %v1153 = vunpack.c.l.b16 %v1080
          %v1154 = vunpack.c.h.b16 %v1080
          %v1155 = vunpack.c.l.b16 %v1081
          %v1156 = vunpack.c.h.b16 %v1081
          %v1157 = vunpack.c.l.b16 %v1082
          %v1158 = vunpack.c.h.b16 %v1082
          %v1159 = vunpack.c.l.b16 %v1083
          %v1160 = vunpack.c.h.b16 %v1083
          %v1161 = vunpack.c.l.b16 %v1084
          %v1162 = vunpack.c.h.b16 %v1084
          %v1163 = vunpack.c.l.b16 %v1085
          %v1164 = vunpack.c.h.b16 %v1085
          %v1165 = vunpack.c.l.b16 %v1086
          %v1166 = vunpack.c.h.b16 %v1086
          %v1167 = vunpack.c.l.b16 %v1087
          %v1168 = vunpack.c.h.b16 %v1087
          %v1169 = vunpack.c.l.b16 %v1088
          %v1170 = vunpack.c.h.b16 %v1088
          %v1171 = vunpack.c.l.b16 %v1089
          %v1172 = vunpack.c.h.b16 %v1089
          %v1173 = vunpack.c.l.b16 %v1090
          %v1174 = vunpack.c.h.b16 %v1090
          %v1175 = vunpack.c.l.b16 %v1091
          %v1176 = vunpack.c.h.b16 %v1091
          %v1177 = vunpack.c.l.b16 %v1092
          %v1178 = vunpack.c.h.b16 %v1092
          %v1179 = vunpack.c.l.b16 %v1093
          %v1180 = vunpack.c.h.b16 %v1093
          %v1181 = vunpack.c.l.b16 %v1094
          %v1182 = vunpack.c.h.b16 %v1094
          %v1183 = vunpack.c.l.b16 %v1095
          %v1184 = vunpack.c.h.b16 %v1095
          %v1185 = vunpack.c.l.b16 %v1096
          %v1186 = vunpack.c.h.b16 %v1096
          %v1187 = vunpack.c.l.b16 %v1097
          %v1188 = vunpack.c.h.b16 %v1097
          %v1189 = vunpack.c.l.b16 %v1098
          %v1190 = vunpack.c.h.b16 %v1098
          %v1191 = vunpack.c.l.b16 %v1099
          %v1192 = vunpack.c.h.b16 %v1099
          %v1193 = vunpack.c.l.b16 %v1100
          %v1194 = vunpack.c.h.b16 %v1100
          %v1195 = vunpack.c.l.b16 %v1101
          %v1196 = vunpack.c.h.b16 %v1101
          %v1197 = vunpack.c.l.b16 %v1102
          %v1198 = vunpack.c.h.b16 %v1102
          %v1199 = vpack.c.b16 %v1135, %v1135
          %v1200 = vpack.c.b16 %v1136, %v1136
          %v1201 = vpack.c.b16 %v1137, %v1137
          %v1202 = vpack.c.b16 %v1138, %v1138
          %v1203 = vpack.c.b16 %v1139, %v1139
          %v1204 = vpack.c.b16 %v1140, %v1140
          %v1205 = vpack.c.b16 %v1141, %v1141
          %v1206 = vpack.c.b16 %v1142, %v1142
          %v1207 = vpack.c.b16 %v1143, %v1143
          %v1208 = vpack.c.b16 %v1144, %v1144
          %v1209 = vpack.c.b16 %v1145, %v1145
          %v1210 = vpack.c.b16 %v1146, %v1146
          %v1211 = vpack.c.b16 %v1147, %v1147
          %v1212 = vpack.c.b16 %v1148, %v1148
          %v1213 = vpack.c.b16 %v1149, %v1149
          %v1214 = vpack.c.b16 %v1150, %v1150
          %v1215 = vpack.c.b16 %v1151, %v1151
          %v1216 = vpack.c.b16 %v1152, %v1152
          %v1217 = vpack.c.b16 %v1153, %v1153
          %v1218 = vpack.c.b16 %v1154, %v1154
          %v1219 = vpack.c.b16 %v1155, %v1155
          %v1220 = vpack.c.b16 %v1156, %v1156
          %v1221 = vpack.c.b16 %v1157, %v1157
          %v1222 = vpack.c.b16 %v1158, %v1158
          %v1223 = vpack.c.b16 %v1159, %v1159
          %v1224 = vpack.c.b16 %v1160, %v1160
          %v1225 = vpack.c.b16 %v1161, %v1161
          %v1226 = vpack.c.b16 %v1162, %v1162
          %v1227 = vpack.c.b16 %v1163, %v1163
          %v1228 = vpack.c.b16 %v1164, %v1164
          %v1229 = vpack.c.b16 %v1165, %v1165
          %v1230 = vpack.c.b16 %v1166, %v1166
          %v1231 = vpack.c.b16 %v1167, %v1167
          %v1232 = vpack.c.b16 %v1168, %v1168
          %v1233 = vpack.c.b16 %v1169, %v1169
          %v1234 = vpack.c.b16 %v1170, %v1170
          %v1235 = vpack.c.b16 %v1171, %v1171
          %v1236 = vpack.c.b16 %v1172, %v1172
          %v1237 = vpack.c.b16 %v1173, %v1173
          %v1238 = vpack.c.b16 %v1174, %v1174
          %v1239 = vpack.c.b16 %v1175, %v1175
          %v1240 = vpack.c.b16 %v1176, %v1176
          %v1241 = vpack.c.b16 %v1177, %v1177
          %v1242 = vpack.c.b16 %v1178, %v1178
          %v1243 = vpack.c.b16 %v1179, %v1179
          %v1244 = vpack.c.b16 %v1180, %v1180
          %v1245 = vpack.c.b16 %v1181, %v1181
          %v1246 = vpack.c.b16 %v1182, %v1182
          %v1247 = vpack.c.b16 %v1183, %v1183
          %v1248 = vpack.c.b16 %v1184, %v1184
          %v1249 = vpack.c.b16 %v1185, %v1185
          %v1250 = vpack.c.b16 %v1186, %v1186
          %v1251 = vpack.c.b16 %v1187, %v1187
          %v1252 = vpack.c.b16 %v1188, %v1188
          %v1253 = vpack.c.b16 %v1189, %v1189
          %v1254 = vpack.c.b16 %v1190, %v1190
          %v1255 = vpack.c.b16 %v1191, %v1191
          %v1256 = vpack.c.b16 %v1192, %v1192
          %v1257 = vpack.c.b16 %v1193, %v1193
          %v1258 = vpack.c.b16 %v1194, %v1194
          %v1259 = vpack.c.b16 %v1195, %v1195
          %v1260 = vpack.c.b16 %v1196, %v1196
          %v1261 = vpack.c.b16 %v1197, %v1197
          %v1262 = vpack.c.b16 %v1198, %v1198
          %s1327 = smul.addr %s474, 4
          %s1328 = scalar_lea.vmem [#allocation4], %s1327
          %1329 = vst [vmem:[%s1328] sm:$0xf] %v1199
          %1330 = vst [vmem:[%s1328 + $0x4] sm:$0xf] %v1200
          %1331 = vst [vmem:[%s1328 + $0x8] sm:$0xf] %v1201
          %1332 = vst [vmem:[%s1328 + $0xc] sm:$0xf] %v1202
          %1333 = vst [vmem:[%s1328 + $0x10] sm:$0xf] %v1203
          %1334 = vst [vmem:[%s1328 + $0x14] sm:$0xf] %v1204
          %1335 = vst [vmem:[%s1328 + $0x18] sm:$0xf] %v1205
          %1336 = vst [vmem:[%s1328 + $0x1c] sm:$0xf] %v1206
          %1337 = vst [vmem:[%s1328 + $0x20] sm:$0xf] %v1207
          %1338 = vst [vmem:[%s1328 + $0x24] sm:$0xf] %v1208
          %1339 = vst [vmem:[%s1328 + $0x28] sm:$0xf] %v1209
          %1340 = vst [vmem:[%s1328 + $0x2c] sm:$0xf] %v1210
          %1341 = vst [vmem:[%s1328 + $0x30] sm:$0xf] %v1211
          %1342 = vst [vmem:[%s1328 + $0x34] sm:$0xf] %v1212
          %1343 = vst [vmem:[%s1328 + $0x38] sm:$0xf] %v1213
          %1344 = vst [vmem:[%s1328 + $0x3c] sm:$0xf] %v1214
          %1345 = vst [vmem:[%s1328 + $0x40] sm:$0xf] %v1215
          %1346 = vst [vmem:[%s1328 + $0x44] sm:$0xf] %v1216
          %1347 = vst [vmem:[%s1328 + $0x48] sm:$0xf] %v1217
          %1348 = vst [vmem:[%s1328 + $0x4c] sm:$0xf] %v1218
          %1349 = vst [vmem:[%s1328 + $0x50] sm:$0xf] %v1219
          %1350 = vst [vmem:[%s1328 + $0x54] sm:$0xf] %v1220
          %1351 = vst [vmem:[%s1328 + $0x58] sm:$0xf] %v1221
          %1352 = vst [vmem:[%s1328 + $0x5c] sm:$0xf] %v1222
          %1353 = vst [vmem:[%s1328 + $0x60] sm:$0xf] %v1223
          %1354 = vst [vmem:[%s1328 + $0x64] sm:$0xf] %v1224
          %1355 = vst [vmem:[%s1328 + $0x68] sm:$0xf] %v1225
          %1356 = vst [vmem:[%s1328 + $0x6c] sm:$0xf] %v1226
          %1357 = vst [vmem:[%s1328 + $0x70] sm:$0xf] %v1227
          %1358 = vst [vmem:[%s1328 + $0x74] sm:$0xf] %v1228
          %1359 = vst [vmem:[%s1328 + $0x78] sm:$0xf] %v1229
          %1360 = vst [vmem:[%s1328 + $0x7c] sm:$0xf] %v1230
          %1361 = vst [vmem:[%s1328 + $0x80] sm:$0xf] %v1231
          %1362 = vst [vmem:[%s1328 + $0x84] sm:$0xf] %v1232
          %1363 = vst [vmem:[%s1328 + $0x88] sm:$0xf] %v1233
          %1364 = vst [vmem:[%s1328 + $0x8c] sm:$0xf] %v1234
          %1365 = vst [vmem:[%s1328 + $0x90] sm:$0xf] %v1235
          %1366 = vst [vmem:[%s1328 + $0x94] sm:$0xf] %v1236
          %1367 = vst [vmem:[%s1328 + $0x98] sm:$0xf] %v1237
          %1368 = vst [vmem:[%s1328 + $0x9c] sm:$0xf] %v1238
          %1369 = vst [vmem:[%s1328 + $0xa0] sm:$0xf] %v1239
          %1370 = vst [vmem:[%s1328 + $0xa4] sm:$0xf] %v1240
          %1371 = vst [vmem:[%s1328 + $0xa8] sm:$0xf] %v1241
          %1372 = vst [vmem:[%s1328 + $0xac] sm:$0xf] %v1242
          %1373 = vst [vmem:[%s1328 + $0xb0] sm:$0xf] %v1243
          %1374 = vst [vmem:[%s1328 + $0xb4] sm:$0xf] %v1244
          %1375 = vst [vmem:[%s1328 + $0xb8] sm:$0xf] %v1245
          %1376 = vst [vmem:[%s1328 + $0xbc] sm:$0xf] %v1246
          %1377 = vst [vmem:[%s1328 + $0xc0] sm:$0xf] %v1247
          %1378 = vst [vmem:[%s1328 + $0xc4] sm:$0xf] %v1248
          %1379 = vst [vmem:[%s1328 + $0xc8] sm:$0xf] %v1249
          %1380 = vst [vmem:[%s1328 + $0xcc] sm:$0xf] %v1250
          %1381 = vst [vmem:[%s1328 + $0xd0] sm:$0xf] %v1251
          %1382 = vst [vmem:[%s1328 + $0xd4] sm:$0xf] %v1252
          %1383 = vst [vmem:[%s1328 + $0xd8] sm:$0xf] %v1253
          %1384 = vst [vmem:[%s1328 + $0xdc] sm:$0xf] %v1254
          %1385 = vst [vmem:[%s1328 + $0xe0] sm:$0xf] %v1255
          %1386 = vst [vmem:[%s1328 + $0xe4] sm:$0xf] %v1256
          %1387 = vst [vmem:[%s1328 + $0xe8] sm:$0xf] %v1257
          %1388 = vst [vmem:[%s1328 + $0xec] sm:$0xf] %v1258
          %1389 = vst [vmem:[%s1328 + $0xf0] sm:$0xf] %v1259
          %1390 = vst [vmem:[%s1328 + $0xf4] sm:$0xf] %v1260
          %1391 = vst [vmem:[%s1328 + $0xf8] sm:$0xf] %v1261
          %1392 = vst [vmem:[%s1328 + $0xfc] sm:$0xf] %v1262
        $region48: #{gcn_forward_pallas.1} parent=39 // pred_fallthru
          _
        %p1393 = scmp.gt.s32.totalorder %s20, 0
        %p1394 = scmp.eq.s32.totalorder %s453, 0
        %p1395 = pnand %p1393, %p1394
        %p1396 = pneg %p1395
        // Predicated region
        $region49: #{gcn_forward_pallas.1} parent=39 // pred_check
          _
        $region50: #{gcn_forward_pallas.1} parent=39 // pred_check_branch
          %1398 = sbr.rel (%p1395) target = $region52
        $region51: #{gcn_forward_pallas.1} parent=39 // pred_region
          %v1399 = vld [vmem:[%s285] sm:$0xf]
          %v1400 = vld [vmem:[%s285 + $0x4] sm:$0xf]
          %v1401 = vld [vmem:[%s285 + $0x8] sm:$0xf]
          %v1402 = vld [vmem:[%s285 + $0xc] sm:$0xf]
          %v1403 = vld [vmem:[%s285 + $0x10] sm:$0xf]
          %v1404 = vld [vmem:[%s285 + $0x14] sm:$0xf]
          %v1405 = vld [vmem:[%s285 + $0x18] sm:$0xf]
          %v1406 = vld [vmem:[%s285 + $0x1c] sm:$0xf]
          %v1407 = vld [vmem:[%s285 + $0x20] sm:$0xf]
          %v1408 = vld [vmem:[%s285 + $0x24] sm:$0xf]
          %v1409 = vld [vmem:[%s285 + $0x28] sm:$0xf]
          %v1410 = vld [vmem:[%s285 + $0x2c] sm:$0xf]
          %v1411 = vld [vmem:[%s285 + $0x30] sm:$0xf]
          %v1412 = vld [vmem:[%s285 + $0x34] sm:$0xf]
          %v1413 = vld [vmem:[%s285 + $0x38] sm:$0xf]
          %v1414 = vld [vmem:[%s285 + $0x3c] sm:$0xf]
          %s1415 = sshra.s32 %s300, 3
          %s1416 = sand.u32 %s300, 7
          %s1417 = smul.addr %s1415, 4
          %s1418 = scalar_lea.vmem [#allocation3], %s1417
          %v1419 = vld [vmem:[%s1418] sm:$0xf]
          %v1420 = vld [vmem:[%s1418 + $0x4] sm:$0xf]
          %v1421 = vld [vmem:[%s1418 + $0x8] sm:$0xf]
          %v1422 = vld [vmem:[%s1418 + $0xc] sm:$0xf]
          %v1423 = vld [vmem:[%s1418 + $0x10] sm:$0xf]
          %v1424 = vld [vmem:[%s1418 + $0x14] sm:$0xf]
          %v1425 = vld [vmem:[%s1418 + $0x18] sm:$0xf]
          %v1426 = vld [vmem:[%s1418 + $0x1c] sm:$0xf]
          %v1427 = vld [vmem:[%s1418 + $0x20] sm:$0xf]
          %v1428 = vld [vmem:[%s1418 + $0x24] sm:$0xf]
          %v1429 = vld [vmem:[%s1418 + $0x28] sm:$0xf]
          %v1430 = vld [vmem:[%s1418 + $0x2c] sm:$0xf]
          %v1431 = vld [vmem:[%s1418 + $0x30] sm:$0xf]
          %v1432 = vld [vmem:[%s1418 + $0x34] sm:$0xf]
          %v1433 = vld [vmem:[%s1418 + $0x38] sm:$0xf]
          %v1434 = vld [vmem:[%s1418 + $0x3c] sm:$0xf]
          %v1435 = vld [vmem:[%s1418 + $0x40] sm:$0xf]
          %v1436 = vld [vmem:[%s1418 + $0x44] sm:$0xf]
          %v1437 = vld [vmem:[%s1418 + $0x48] sm:$0xf]
          %v1438 = vld [vmem:[%s1418 + $0x4c] sm:$0xf]
          %v1439 = vld [vmem:[%s1418 + $0x50] sm:$0xf]
          %v1440 = vld [vmem:[%s1418 + $0x54] sm:$0xf]
          %v1441 = vld [vmem:[%s1418 + $0x58] sm:$0xf]
          %v1442 = vld [vmem:[%s1418 + $0x5c] sm:$0xf]
          %v1443 = vld [vmem:[%s1418 + $0x60] sm:$0xf]
          %v1444 = vld [vmem:[%s1418 + $0x64] sm:$0xf]
          %v1445 = vld [vmem:[%s1418 + $0x68] sm:$0xf]
          %v1446 = vld [vmem:[%s1418 + $0x6c] sm:$0xf]
          %v1447 = vld [vmem:[%s1418 + $0x70] sm:$0xf]
          %v1448 = vld [vmem:[%s1418 + $0x74] sm:$0xf]
          %v1449 = vld [vmem:[%s1418 + $0x78] sm:$0xf]
          %v1450 = vld [vmem:[%s1418 + $0x7c] sm:$0xf]
          %v1451 = vld [vmem:[%s1418 + $0x80] sm:$0xf]
          %v1452 = vld [vmem:[%s1418 + $0x84] sm:$0xf]
          %v1453 = vld [vmem:[%s1418 + $0x88] sm:$0xf]
          %v1454 = vld [vmem:[%s1418 + $0x8c] sm:$0xf]
          %v1455 = vld [vmem:[%s1418 + $0x90] sm:$0xf]
          %v1456 = vld [vmem:[%s1418 + $0x94] sm:$0xf]
          %v1457 = vld [vmem:[%s1418 + $0x98] sm:$0xf]
          %v1458 = vld [vmem:[%s1418 + $0x9c] sm:$0xf]
          %v1459 = vld [vmem:[%s1418 + $0xa0] sm:$0xf]
          %v1460 = vld [vmem:[%s1418 + $0xa4] sm:$0xf]
          %v1461 = vld [vmem:[%s1418 + $0xa8] sm:$0xf]
          %v1462 = vld [vmem:[%s1418 + $0xac] sm:$0xf]
          %v1463 = vld [vmem:[%s1418 + $0xb0] sm:$0xf]
          %v1464 = vld [vmem:[%s1418 + $0xb4] sm:$0xf]
          %v1465 = vld [vmem:[%s1418 + $0xb8] sm:$0xf]
          %v1466 = vld [vmem:[%s1418 + $0xbc] sm:$0xf]
          %v1467 = vld [vmem:[%s1418 + $0xc0] sm:$0xf]
          %v1468 = vld [vmem:[%s1418 + $0xc4] sm:$0xf]
          %v1469 = vld [vmem:[%s1418 + $0xc8] sm:$0xf]
          %v1470 = vld [vmem:[%s1418 + $0xcc] sm:$0xf]
          %v1471 = vld [vmem:[%s1418 + $0xd0] sm:$0xf]
          %v1472 = vld [vmem:[%s1418 + $0xd4] sm:$0xf]
          %v1473 = vld [vmem:[%s1418 + $0xd8] sm:$0xf]
          %v1474 = vld [vmem:[%s1418 + $0xdc] sm:$0xf]
          %v1475 = vld [vmem:[%s1418 + $0xe0] sm:$0xf]
          %v1476 = vld [vmem:[%s1418 + $0xe4] sm:$0xf]
          %v1477 = vld [vmem:[%s1418 + $0xe8] sm:$0xf]
          %v1478 = vld [vmem:[%s1418 + $0xec] sm:$0xf]
          %v1479 = vld [vmem:[%s1418 + $0xf0] sm:$0xf]
          %v1480 = vld [vmem:[%s1418 + $0xf4] sm:$0xf]
          %v1481 = vld [vmem:[%s1418 + $0xf8] sm:$0xf]
          %v1482 = vld [vmem:[%s1418 + $0xfc] sm:$0xf]
          %v1547 = vunpack.c.l.b16 %v1419
          %v1548 = vunpack.c.l.b16 %v1420
          %v1549 = vunpack.c.l.b16 %v1421
          %v1550 = vunpack.c.l.b16 %v1422
          %v1551 = vunpack.c.l.b16 %v1423
          %v1552 = vunpack.c.l.b16 %v1424
          %v1553 = vunpack.c.l.b16 %v1425
          %v1554 = vunpack.c.l.b16 %v1426
          %v1555 = vunpack.c.l.b16 %v1427
          %v1556 = vunpack.c.l.b16 %v1428
          %v1557 = vunpack.c.l.b16 %v1429
          %v1558 = vunpack.c.l.b16 %v1430
          %v1559 = vunpack.c.l.b16 %v1431
          %v1560 = vunpack.c.l.b16 %v1432
          %v1561 = vunpack.c.l.b16 %v1433
          %v1562 = vunpack.c.l.b16 %v1434
          %v1563 = vunpack.c.l.b16 %v1435
          %v1564 = vunpack.c.l.b16 %v1436
          %v1565 = vunpack.c.l.b16 %v1437
          %v1566 = vunpack.c.l.b16 %v1438
          %v1567 = vunpack.c.l.b16 %v1439
          %v1568 = vunpack.c.l.b16 %v1440
          %v1569 = vunpack.c.l.b16 %v1441
          %v1570 = vunpack.c.l.b16 %v1442
          %v1571 = vunpack.c.l.b16 %v1443
          %v1572 = vunpack.c.l.b16 %v1444
          %v1573 = vunpack.c.l.b16 %v1445
          %v1574 = vunpack.c.l.b16 %v1446
          %v1575 = vunpack.c.l.b16 %v1447
          %v1576 = vunpack.c.l.b16 %v1448
          %v1577 = vunpack.c.l.b16 %v1449
          %v1578 = vunpack.c.l.b16 %v1450
          %v1579 = vunpack.c.l.b16 %v1451
          %v1580 = vunpack.c.l.b16 %v1452
          %v1581 = vunpack.c.l.b16 %v1453
          %v1582 = vunpack.c.l.b16 %v1454
          %v1583 = vunpack.c.l.b16 %v1455
          %v1584 = vunpack.c.l.b16 %v1456
          %v1585 = vunpack.c.l.b16 %v1457
          %v1586 = vunpack.c.l.b16 %v1458
          %v1587 = vunpack.c.l.b16 %v1459
          %v1588 = vunpack.c.l.b16 %v1460
          %v1589 = vunpack.c.l.b16 %v1461
          %v1590 = vunpack.c.l.b16 %v1462
          %v1591 = vunpack.c.l.b16 %v1463
          %v1592 = vunpack.c.l.b16 %v1464
          %v1593 = vunpack.c.l.b16 %v1465
          %v1594 = vunpack.c.l.b16 %v1466
          %v1595 = vunpack.c.l.b16 %v1467
          %v1596 = vunpack.c.l.b16 %v1468
          %v1597 = vunpack.c.l.b16 %v1469
          %v1598 = vunpack.c.l.b16 %v1470
          %v1599 = vunpack.c.l.b16 %v1471
          %v1600 = vunpack.c.l.b16 %v1472
          %v1601 = vunpack.c.l.b16 %v1473
          %v1602 = vunpack.c.l.b16 %v1474
          %v1603 = vunpack.c.l.b16 %v1475
          %v1604 = vunpack.c.l.b16 %v1476
          %v1605 = vunpack.c.l.b16 %v1477
          %v1606 = vunpack.c.l.b16 %v1478
          %v1607 = vunpack.c.l.b16 %v1479
          %v1608 = vunpack.c.l.b16 %v1480
          %v1609 = vunpack.c.l.b16 %v1481
          %v1610 = vunpack.c.l.b16 %v1482
          %v1611 = vpack.c.b16 %v1548, %v1547
          %v1612 = vpack.c.b16 %v1550, %v1549
          %v1613 = vpack.c.b16 %v1552, %v1551
          %v1614 = vpack.c.b16 %v1554, %v1553
          %v1615 = vpack.c.b16 %v1556, %v1555
          %v1616 = vpack.c.b16 %v1558, %v1557
          %v1617 = vpack.c.b16 %v1560, %v1559
          %v1618 = vpack.c.b16 %v1562, %v1561
          %v1619 = vpack.c.b16 %v1564, %v1563
          %v1620 = vpack.c.b16 %v1566, %v1565
          %v1621 = vpack.c.b16 %v1568, %v1567
          %v1622 = vpack.c.b16 %v1570, %v1569
          %v1623 = vpack.c.b16 %v1572, %v1571
          %v1624 = vpack.c.b16 %v1574, %v1573
          %v1625 = vpack.c.b16 %v1576, %v1575
          %v1626 = vpack.c.b16 %v1578, %v1577
          %v1627 = vpack.c.b16 %v1580, %v1579
          %v1628 = vpack.c.b16 %v1582, %v1581
          %v1629 = vpack.c.b16 %v1584, %v1583
          %v1630 = vpack.c.b16 %v1586, %v1585
          %v1631 = vpack.c.b16 %v1588, %v1587
          %v1632 = vpack.c.b16 %v1590, %v1589
          %v1633 = vpack.c.b16 %v1592, %v1591
          %v1634 = vpack.c.b16 %v1594, %v1593
          %v1635 = vpack.c.b16 %v1596, %v1595
          %v1636 = vpack.c.b16 %v1598, %v1597
          %v1637 = vpack.c.b16 %v1600, %v1599
          %v1638 = vpack.c.b16 %v1602, %v1601
          %v1639 = vpack.c.b16 %v1604, %v1603
          %v1640 = vpack.c.b16 %v1606, %v1605
          %v1641 = vpack.c.b16 %v1608, %v1607
          %v1642 = vpack.c.b16 %v1610, %v1609
          %v1691 = vunpack.c.l.b16 %v1399
          %v1692 = vunpack.c.l.b16 %v1400
          %v1693 = vunpack.c.l.b16 %v1401
          %v1694 = vunpack.c.l.b16 %v1402
          %v1695 = vunpack.c.l.b16 %v1403
          %v1696 = vunpack.c.l.b16 %v1404
          %v1697 = vunpack.c.l.b16 %v1405
          %v1698 = vunpack.c.l.b16 %v1406
          %v1699 = vunpack.c.l.b16 %v1407
          %v1700 = vunpack.c.l.b16 %v1408
          %v1701 = vunpack.c.l.b16 %v1409
          %v1702 = vunpack.c.l.b16 %v1410
          %v1703 = vunpack.c.l.b16 %v1411
          %v1704 = vunpack.c.l.b16 %v1412
          %v1705 = vunpack.c.l.b16 %v1413
          %v1706 = vunpack.c.l.b16 %v1414
          %v1707 = vpack.c.b16 %v1692, %v1691
          %v1708 = vpack.c.b16 %v1694, %v1693
          %v1709 = vpack.c.b16 %v1696, %v1695
          %v1710 = vpack.c.b16 %v1698, %v1697
          %v1711 = vpack.c.b16 %v1700, %v1699
          %v1712 = vpack.c.b16 %v1702, %v1701
          %v1713 = vpack.c.b16 %v1704, %v1703
          %v1714 = vpack.c.b16 %v1706, %v1705
          %1723 = vmatprep.subr.bf16.mxu0 0
          %1724 = vmatpush1.bf16.msra.mxu0 %v1714
          %1725 = vmatprep.subr.bf16.mxu0 0
          %1726 = vmatpush1.bf16.msra.mxu0 %v1713
          %1727 = vmatprep.subr.bf16.mxu0 0
          %1728 = vmatpush1.bf16.msra.mxu0 %v1712
          %1729 = vmatprep.subr.bf16.mxu0 0
          %1730 = vmatpush1.bf16.msra.mxu0 %v1711
          %1731 = vmatprep.subr.bf16.mxu0 0
          %1732 = vmatpush1.bf16.msra.mxu0 %v1710
          %1733 = vmatprep.subr.bf16.mxu0 0
          %1734 = vmatpush1.bf16.msra.mxu0 %v1709
          %1735 = vmatprep.subr.bf16.mxu0 0
          %1736 = vmatpush1.bf16.msra.mxu0 %v1708
          %1737 = vmatprep.subr.bf16.mxu0 0
          %1738 = vmatpush1.bf16.msra.mxu0 %v1707
          %1739 = vmatprep.subr.bf16.mxu0 0
          %1740 = vmatpush2.bf16.msra.mxu0 0
          %1741 = vmatprep.subr.bf16.mxu0 0
          %1742 = vmatpush2.bf16.msra.mxu0 0
          %1743 = vmatprep.subr.bf16.mxu0 0
          %1744 = vmatpush2.bf16.msra.mxu0 0
          %1745 = vmatprep.subr.bf16.mxu0 0
          %1746 = vmatpush2.bf16.msra.mxu0 0
          %1747 = vmatprep.subr.bf16.mxu0 0
          %1748 = vmatpush2.bf16.msra.mxu0 0
          %1749 = vmatprep.subr.bf16.mxu0 0
          %1750 = vmatpush2.bf16.msra.mxu0 0
          %1751 = vmatprep.subr.bf16.mxu0 0
          %1752 = vmatpush2.bf16.msra.mxu0 0
          %1753 = vmatprep.subr.bf16.mxu0 0
          %1754 = vmatpush2.bf16.msra.mxu0 0
          %1755 = vmatprep.mubr.bf16.mxu0 0
          %1756 = vmatmul.mubr.bf16.gmra.mxu0 %v1611
          %v1757 = vpop.f32.mrf.mxu0
          %v1758 = vadd.f32 0.0, %v1757
          %v1759 = vpop.f32.mrf.mxu0
          %v1760 = vpop.f32.mrf.mxu0
          %v1761 = vadd.f32 0.0, %v1760
          %v1762 = vpop.f32.mrf.mxu0
          %1763 = vmatprep.mubr.bf16.mxu0 0
          %1764 = vmatmul.mubr.bf16.gmra.mxu0 %v1612
          %v1765 = vpop.f32.mrf.mxu0
          %v1766 = vadd.f32 0.0, %v1765
          %v1767 = vpop.f32.mrf.mxu0
          %v1768 = vpop.f32.mrf.mxu0
          %v1769 = vadd.f32 0.0, %v1768
          %v1770 = vpop.f32.mrf.mxu0
          %1771 = vmatprep.mubr.bf16.mxu0 0
          %1772 = vmatmul.mubr.bf16.gmra.mxu0 %v1613
          %v1773 = vpop.f32.mrf.mxu0
          %v1774 = vadd.f32 0.0, %v1773
          %v1775 = vpop.f32.mrf.mxu0
          %v1776 = vpop.f32.mrf.mxu0
          %v1777 = vadd.f32 0.0, %v1776
          %v1778 = vpop.f32.mrf.mxu0
          %1779 = vmatprep.mubr.bf16.mxu0 0
          %1780 = vmatmul.mubr.bf16.gmra.mxu0 %v1614
          %v1781 = vpop.f32.mrf.mxu0
          %v1782 = vadd.f32 0.0, %v1781
          %v1783 = vpop.f32.mrf.mxu0
          %v1784 = vpop.f32.mrf.mxu0
          %v1785 = vadd.f32 0.0, %v1784
          %v1786 = vpop.f32.mrf.mxu0
          %1787 = vmatprep.mubr.bf16.mxu0 0
          %1788 = vmatmul.mubr.bf16.gmra.mxu0 %v1615
          %v1789 = vpop.f32.mrf.mxu0
          %v1790 = vadd.f32 0.0, %v1789
          %v1791 = vpop.f32.mrf.mxu0
          %v1792 = vpop.f32.mrf.mxu0
          %v1793 = vadd.f32 0.0, %v1792
          %v1794 = vpop.f32.mrf.mxu0
          %1795 = vmatprep.mubr.bf16.mxu0 0
          %1796 = vmatmul.mubr.bf16.gmra.mxu0 %v1616
          %v1797 = vpop.f32.mrf.mxu0
          %v1798 = vadd.f32 0.0, %v1797
          %v1799 = vpop.f32.mrf.mxu0
          %v1800 = vpop.f32.mrf.mxu0
          %v1801 = vadd.f32 0.0, %v1800
          %v1802 = vpop.f32.mrf.mxu0
          %1803 = vmatprep.mubr.bf16.mxu0 0
          %1804 = vmatmul.mubr.bf16.gmra.mxu0 %v1617
          %v1805 = vpop.f32.mrf.mxu0
          %v1806 = vadd.f32 0.0, %v1805
          %v1807 = vpop.f32.mrf.mxu0
          %v1808 = vpop.f32.mrf.mxu0
          %v1809 = vadd.f32 0.0, %v1808
          %v1810 = vpop.f32.mrf.mxu0
          %1811 = vmatprep.mubr.bf16.mxu0 0
          %1812 = vmatmul.mubr.bf16.gmra.mxu0 %v1618
          %v1813 = vpop.f32.mrf.mxu0
          %v1814 = vadd.f32 0.0, %v1813
          %v1815 = vpop.f32.mrf.mxu0
          %v1816 = vpop.f32.mrf.mxu0
          %v1817 = vadd.f32 0.0, %v1816
          %v1818 = vpop.f32.mrf.mxu0
          %1819 = vmatprep.mubr.bf16.mxu0 0
          %1820 = vmatmul.mubr.bf16.gmra.mxu0 %v1619
          %v1821 = vpop.f32.mrf.mxu0
          %v1822 = vadd.f32 0.0, %v1821
          %v1823 = vpop.f32.mrf.mxu0
          %v1824 = vpop.f32.mrf.mxu0
          %v1825 = vadd.f32 0.0, %v1824
          %v1826 = vpop.f32.mrf.mxu0
          %1827 = vmatprep.mubr.bf16.mxu0 0
          %1828 = vmatmul.mubr.bf16.gmra.mxu0 %v1620
          %v1829 = vpop.f32.mrf.mxu0
          %v1830 = vadd.f32 0.0, %v1829
          %v1831 = vpop.f32.mrf.mxu0
          %v1832 = vpop.f32.mrf.mxu0
          %v1833 = vadd.f32 0.0, %v1832
          %v1834 = vpop.f32.mrf.mxu0
          %1835 = vmatprep.mubr.bf16.mxu0 0
          %1836 = vmatmul.mubr.bf16.gmra.mxu0 %v1621
          %v1837 = vpop.f32.mrf.mxu0
          %v1838 = vadd.f32 0.0, %v1837
          %v1839 = vpop.f32.mrf.mxu0
          %v1840 = vpop.f32.mrf.mxu0
          %v1841 = vadd.f32 0.0, %v1840
          %v1842 = vpop.f32.mrf.mxu0
          %1843 = vmatprep.mubr.bf16.mxu0 0
          %1844 = vmatmul.mubr.bf16.gmra.mxu0 %v1622
          %v1845 = vpop.f32.mrf.mxu0
          %v1846 = vadd.f32 0.0, %v1845
          %v1847 = vpop.f32.mrf.mxu0
          %v1848 = vpop.f32.mrf.mxu0
          %v1849 = vadd.f32 0.0, %v1848
          %v1850 = vpop.f32.mrf.mxu0
          %1851 = vmatprep.mubr.bf16.mxu0 0
          %1852 = vmatmul.mubr.bf16.gmra.mxu0 %v1623
          %v1853 = vpop.f32.mrf.mxu0
          %v1854 = vadd.f32 0.0, %v1853
          %v1855 = vpop.f32.mrf.mxu0
          %v1856 = vpop.f32.mrf.mxu0
          %v1857 = vadd.f32 0.0, %v1856
          %v1858 = vpop.f32.mrf.mxu0
          %1859 = vmatprep.mubr.bf16.mxu0 0
          %1860 = vmatmul.mubr.bf16.gmra.mxu0 %v1624
          %v1861 = vpop.f32.mrf.mxu0
          %v1862 = vadd.f32 0.0, %v1861
          %v1863 = vpop.f32.mrf.mxu0
          %v1864 = vpop.f32.mrf.mxu0
          %v1865 = vadd.f32 0.0, %v1864
          %v1866 = vpop.f32.mrf.mxu0
          %1867 = vmatprep.mubr.bf16.mxu0 0
          %1868 = vmatmul.mubr.bf16.gmra.mxu0 %v1625
          %v1869 = vpop.f32.mrf.mxu0
          %v1870 = vadd.f32 0.0, %v1869
          %v1871 = vpop.f32.mrf.mxu0
          %v1872 = vpop.f32.mrf.mxu0
          %v1873 = vadd.f32 0.0, %v1872
          %v1874 = vpop.f32.mrf.mxu0
          %1875 = vmatprep.mubr.bf16.mxu0 0
          %1876 = vmatmul.mubr.bf16.gmra.mxu0 %v1626
          %v1877 = vpop.f32.mrf.mxu0
          %v1878 = vadd.f32 0.0, %v1877
          %v1879 = vpop.f32.mrf.mxu0
          %v1880 = vpop.f32.mrf.mxu0
          %v1881 = vadd.f32 0.0, %v1880
          %v1882 = vpop.f32.mrf.mxu0
          %1883 = vmatprep.mubr.bf16.mxu0 0
          %1884 = vmatmul.mubr.bf16.gmra.mxu0 %v1627
          %v1885 = vpop.f32.mrf.mxu0
          %v1886 = vadd.f32 0.0, %v1885
          %v1887 = vpop.f32.mrf.mxu0
          %v1888 = vpop.f32.mrf.mxu0
          %v1889 = vadd.f32 0.0, %v1888
          %v1890 = vpop.f32.mrf.mxu0
          %1891 = vmatprep.mubr.bf16.mxu0 0
          %1892 = vmatmul.mubr.bf16.gmra.mxu0 %v1628
          %v1893 = vpop.f32.mrf.mxu0
          %v1894 = vadd.f32 0.0, %v1893
          %v1895 = vpop.f32.mrf.mxu0
          %v1896 = vpop.f32.mrf.mxu0
          %v1897 = vadd.f32 0.0, %v1896
          %v1898 = vpop.f32.mrf.mxu0
          %1899 = vmatprep.mubr.bf16.mxu0 0
          %1900 = vmatmul.mubr.bf16.gmra.mxu0 %v1629
          %v1901 = vpop.f32.mrf.mxu0
          %v1902 = vadd.f32 0.0, %v1901
          %v1903 = vpop.f32.mrf.mxu0
          %v1904 = vpop.f32.mrf.mxu0
          %v1905 = vadd.f32 0.0, %v1904
          %v1906 = vpop.f32.mrf.mxu0
          %1907 = vmatprep.mubr.bf16.mxu0 0
          %1908 = vmatmul.mubr.bf16.gmra.mxu0 %v1630
          %v1909 = vpop.f32.mrf.mxu0
          %v1910 = vadd.f32 0.0, %v1909
          %v1911 = vpop.f32.mrf.mxu0
          %v1912 = vpop.f32.mrf.mxu0
          %v1913 = vadd.f32 0.0, %v1912
          %v1914 = vpop.f32.mrf.mxu0
          %1915 = vmatprep.mubr.bf16.mxu0 0
          %1916 = vmatmul.mubr.bf16.gmra.mxu0 %v1631
          %v1917 = vpop.f32.mrf.mxu0
          %v1918 = vadd.f32 0.0, %v1917
          %v1919 = vpop.f32.mrf.mxu0
          %v1920 = vpop.f32.mrf.mxu0
          %v1921 = vadd.f32 0.0, %v1920
          %v1922 = vpop.f32.mrf.mxu0
          %1923 = vmatprep.mubr.bf16.mxu0 0
          %1924 = vmatmul.mubr.bf16.gmra.mxu0 %v1632
          %v1925 = vpop.f32.mrf.mxu0
          %v1926 = vadd.f32 0.0, %v1925
          %v1927 = vpop.f32.mrf.mxu0
          %v1928 = vpop.f32.mrf.mxu0
          %v1929 = vadd.f32 0.0, %v1928
          %v1930 = vpop.f32.mrf.mxu0
          %1931 = vmatprep.mubr.bf16.mxu0 0
          %1932 = vmatmul.mubr.bf16.gmra.mxu0 %v1633
          %v1933 = vpop.f32.mrf.mxu0
          %v1934 = vadd.f32 0.0, %v1933
          %v1935 = vpop.f32.mrf.mxu0
          %v1936 = vpop.f32.mrf.mxu0
          %v1937 = vadd.f32 0.0, %v1936
          %v1938 = vpop.f32.mrf.mxu0
          %1939 = vmatprep.mubr.bf16.mxu0 0
          %1940 = vmatmul.mubr.bf16.gmra.mxu0 %v1634
          %v1941 = vpop.f32.mrf.mxu0
          %v1942 = vadd.f32 0.0, %v1941
          %v1943 = vpop.f32.mrf.mxu0
          %v1944 = vpop.f32.mrf.mxu0
          %v1945 = vadd.f32 0.0, %v1944
          %v1946 = vpop.f32.mrf.mxu0
          %1947 = vmatprep.mubr.bf16.mxu0 0
          %1948 = vmatmul.mubr.bf16.gmra.mxu0 %v1635
          %v1949 = vpop.f32.mrf.mxu0
          %v1950 = vadd.f32 0.0, %v1949
          %v1951 = vpop.f32.mrf.mxu0
          %v1952 = vpop.f32.mrf.mxu0
          %v1953 = vadd.f32 0.0, %v1952
          %v1954 = vpop.f32.mrf.mxu0
          %1955 = vmatprep.mubr.bf16.mxu0 0
          %1956 = vmatmul.mubr.bf16.gmra.mxu0 %v1636
          %v1957 = vpop.f32.mrf.mxu0
          %v1958 = vadd.f32 0.0, %v1957
          %v1959 = vpop.f32.mrf.mxu0
          %v1960 = vpop.f32.mrf.mxu0
          %v1961 = vadd.f32 0.0, %v1960
          %v1962 = vpop.f32.mrf.mxu0
          %1963 = vmatprep.mubr.bf16.mxu0 0
          %1964 = vmatmul.mubr.bf16.gmra.mxu0 %v1637
          %v1965 = vpop.f32.mrf.mxu0
          %v1966 = vadd.f32 0.0, %v1965
          %v1967 = vpop.f32.mrf.mxu0
          %v1968 = vpop.f32.mrf.mxu0
          %v1969 = vadd.f32 0.0, %v1968
          %v1970 = vpop.f32.mrf.mxu0
          %1971 = vmatprep.mubr.bf16.mxu0 0
          %1972 = vmatmul.mubr.bf16.gmra.mxu0 %v1638
          %v1973 = vpop.f32.mrf.mxu0
          %v1974 = vadd.f32 0.0, %v1973
          %v1975 = vpop.f32.mrf.mxu0
          %v1976 = vpop.f32.mrf.mxu0
          %v1977 = vadd.f32 0.0, %v1976
          %v1978 = vpop.f32.mrf.mxu0
          %1979 = vmatprep.mubr.bf16.mxu0 0
          %1980 = vmatmul.mubr.bf16.gmra.mxu0 %v1639
          %v1981 = vpop.f32.mrf.mxu0
          %v1982 = vadd.f32 0.0, %v1981
          %v1983 = vpop.f32.mrf.mxu0
          %v1984 = vpop.f32.mrf.mxu0
          %v1985 = vadd.f32 0.0, %v1984
          %v1986 = vpop.f32.mrf.mxu0
          %1987 = vmatprep.mubr.bf16.mxu0 0
          %1988 = vmatmul.mubr.bf16.gmra.mxu0 %v1640
          %v1989 = vpop.f32.mrf.mxu0
          %v1990 = vadd.f32 0.0, %v1989
          %v1991 = vpop.f32.mrf.mxu0
          %v1992 = vpop.f32.mrf.mxu0
          %v1993 = vadd.f32 0.0, %v1992
          %v1994 = vpop.f32.mrf.mxu0
          %1995 = vmatprep.mubr.bf16.mxu0 0
          %1996 = vmatmul.mubr.bf16.gmra.mxu0 %v1641
          %v1997 = vpop.f32.mrf.mxu0
          %v1998 = vadd.f32 0.0, %v1997
          %v1999 = vpop.f32.mrf.mxu0
          %v2000 = vpop.f32.mrf.mxu0
          %v2001 = vadd.f32 0.0, %v2000
          %v2002 = vpop.f32.mrf.mxu0
          %2003 = vmatprep.mubr.bf16.mxu0 0
          %2004 = vmatmul.mubr.bf16.gmra.mxu0 %v1642
          %v2005 = vpop.f32.mrf.mxu0
          %v2006 = vadd.f32 0.0, %v2005
          %v2007 = vpop.f32.mrf.mxu0
          %v2008 = vpop.f32.mrf.mxu0
          %v2009 = vadd.f32 0.0, %v2008
          %v2010 = vpop.f32.mrf.mxu0
          %2011 = vdwg.mxu0
          %v2012 = vpack.c.bf16 %v1761, %v1758
          %v2013 = vpack.c.bf16 %v1769, %v1766
          %v2014 = vpack.c.bf16 %v1777, %v1774
          %v2015 = vpack.c.bf16 %v1785, %v1782
          %v2016 = vpack.c.bf16 %v1793, %v1790
          %v2017 = vpack.c.bf16 %v1801, %v1798
          %v2018 = vpack.c.bf16 %v1809, %v1806
          %v2019 = vpack.c.bf16 %v1817, %v1814
          %v2020 = vpack.c.bf16 %v1825, %v1822
          %v2021 = vpack.c.bf16 %v1833, %v1830
          %v2022 = vpack.c.bf16 %v1841, %v1838
          %v2023 = vpack.c.bf16 %v1849, %v1846
          %v2024 = vpack.c.bf16 %v1857, %v1854
          %v2025 = vpack.c.bf16 %v1865, %v1862
          %v2026 = vpack.c.bf16 %v1873, %v1870
          %v2027 = vpack.c.bf16 %v1881, %v1878
          %v2028 = vpack.c.bf16 %v1889, %v1886
          %v2029 = vpack.c.bf16 %v1897, %v1894
          %v2030 = vpack.c.bf16 %v1905, %v1902
          %v2031 = vpack.c.bf16 %v1913, %v1910
          %v2032 = vpack.c.bf16 %v1921, %v1918
          %v2033 = vpack.c.bf16 %v1929, %v1926
          %v2034 = vpack.c.bf16 %v1937, %v1934
          %v2035 = vpack.c.bf16 %v1945, %v1942
          %v2036 = vpack.c.bf16 %v1953, %v1950
          %v2037 = vpack.c.bf16 %v1961, %v1958
          %v2038 = vpack.c.bf16 %v1969, %v1966
          %v2039 = vpack.c.bf16 %v1977, %v1974
          %v2040 = vpack.c.bf16 %v1985, %v1982
          %v2041 = vpack.c.bf16 %v1993, %v1990
          %v2042 = vpack.c.bf16 %v2001, %v1998
          %v2043 = vpack.c.bf16 %v2009, %v2006
          %v2076 = vunpack.c.l.b16 %v2012
          %v2077 = vunpack.c.h.b16 %v2012
          %v2078 = vunpack.c.l.b16 %v2013
          %v2079 = vunpack.c.h.b16 %v2013
          %v2080 = vunpack.c.l.b16 %v2014
          %v2081 = vunpack.c.h.b16 %v2014
          %v2082 = vunpack.c.l.b16 %v2015
          %v2083 = vunpack.c.h.b16 %v2015
          %v2084 = vunpack.c.l.b16 %v2016
          %v2085 = vunpack.c.h.b16 %v2016
          %v2086 = vunpack.c.l.b16 %v2017
          %v2087 = vunpack.c.h.b16 %v2017
          %v2088 = vunpack.c.l.b16 %v2018
          %v2089 = vunpack.c.h.b16 %v2018
          %v2090 = vunpack.c.l.b16 %v2019
          %v2091 = vunpack.c.h.b16 %v2019
          %v2092 = vunpack.c.l.b16 %v2020
          %v2093 = vunpack.c.h.b16 %v2020
          %v2094 = vunpack.c.l.b16 %v2021
          %v2095 = vunpack.c.h.b16 %v2021
          %v2096 = vunpack.c.l.b16 %v2022
          %v2097 = vunpack.c.h.b16 %v2022
          %v2098 = vunpack.c.l.b16 %v2023
          %v2099 = vunpack.c.h.b16 %v2023
          %v2100 = vunpack.c.l.b16 %v2024
          %v2101 = vunpack.c.h.b16 %v2024
          %v2102 = vunpack.c.l.b16 %v2025
          %v2103 = vunpack.c.h.b16 %v2025
          %v2104 = vunpack.c.l.b16 %v2026
          %v2105 = vunpack.c.h.b16 %v2026
          %v2106 = vunpack.c.l.b16 %v2027
          %v2107 = vunpack.c.h.b16 %v2027
          %v2108 = vunpack.c.l.b16 %v2028
          %v2109 = vunpack.c.h.b16 %v2028
          %v2110 = vunpack.c.l.b16 %v2029
          %v2111 = vunpack.c.h.b16 %v2029
          %v2112 = vunpack.c.l.b16 %v2030
          %v2113 = vunpack.c.h.b16 %v2030
          %v2114 = vunpack.c.l.b16 %v2031
          %v2115 = vunpack.c.h.b16 %v2031
          %v2116 = vunpack.c.l.b16 %v2032
          %v2117 = vunpack.c.h.b16 %v2032
          %v2118 = vunpack.c.l.b16 %v2033
          %v2119 = vunpack.c.h.b16 %v2033
          %v2120 = vunpack.c.l.b16 %v2034
          %v2121 = vunpack.c.h.b16 %v2034
          %v2122 = vunpack.c.l.b16 %v2035
          %v2123 = vunpack.c.h.b16 %v2035
          %v2124 = vunpack.c.l.b16 %v2036
          %v2125 = vunpack.c.h.b16 %v2036
          %v2126 = vunpack.c.l.b16 %v2037
          %v2127 = vunpack.c.h.b16 %v2037
          %v2128 = vunpack.c.l.b16 %v2038
          %v2129 = vunpack.c.h.b16 %v2038
          %v2130 = vunpack.c.l.b16 %v2039
          %v2131 = vunpack.c.h.b16 %v2039
          %v2132 = vunpack.c.l.b16 %v2040
          %v2133 = vunpack.c.h.b16 %v2040
          %v2134 = vunpack.c.l.b16 %v2041
          %v2135 = vunpack.c.h.b16 %v2041
          %v2136 = vunpack.c.l.b16 %v2042
          %v2137 = vunpack.c.h.b16 %v2042
          %v2138 = vunpack.c.l.b16 %v2043
          %v2139 = vunpack.c.h.b16 %v2043
          %v2140 = vpack.c.b16 %v2076, %v2076
          %v2141 = vpack.c.b16 %v2077, %v2077
          %v2142 = vpack.c.b16 %v2078, %v2078
          %v2143 = vpack.c.b16 %v2079, %v2079
          %v2144 = vpack.c.b16 %v2080, %v2080
          %v2145 = vpack.c.b16 %v2081, %v2081
          %v2146 = vpack.c.b16 %v2082, %v2082
          %v2147 = vpack.c.b16 %v2083, %v2083
          %v2148 = vpack.c.b16 %v2084, %v2084
          %v2149 = vpack.c.b16 %v2085, %v2085
          %v2150 = vpack.c.b16 %v2086, %v2086
          %v2151 = vpack.c.b16 %v2087, %v2087
          %v2152 = vpack.c.b16 %v2088, %v2088
          %v2153 = vpack.c.b16 %v2089, %v2089
          %v2154 = vpack.c.b16 %v2090, %v2090
          %v2155 = vpack.c.b16 %v2091, %v2091
          %v2156 = vpack.c.b16 %v2092, %v2092
          %v2157 = vpack.c.b16 %v2093, %v2093
          %v2158 = vpack.c.b16 %v2094, %v2094
          %v2159 = vpack.c.b16 %v2095, %v2095
          %v2160 = vpack.c.b16 %v2096, %v2096
          %v2161 = vpack.c.b16 %v2097, %v2097
          %v2162 = vpack.c.b16 %v2098, %v2098
          %v2163 = vpack.c.b16 %v2099, %v2099
          %v2164 = vpack.c.b16 %v2100, %v2100
          %v2165 = vpack.c.b16 %v2101, %v2101
          %v2166 = vpack.c.b16 %v2102, %v2102
          %v2167 = vpack.c.b16 %v2103, %v2103
          %v2168 = vpack.c.b16 %v2104, %v2104
          %v2169 = vpack.c.b16 %v2105, %v2105
          %v2170 = vpack.c.b16 %v2106, %v2106
          %v2171 = vpack.c.b16 %v2107, %v2107
          %v2172 = vpack.c.b16 %v2108, %v2108
          %v2173 = vpack.c.b16 %v2109, %v2109
          %v2174 = vpack.c.b16 %v2110, %v2110
          %v2175 = vpack.c.b16 %v2111, %v2111
          %v2176 = vpack.c.b16 %v2112, %v2112
          %v2177 = vpack.c.b16 %v2113, %v2113
          %v2178 = vpack.c.b16 %v2114, %v2114
          %v2179 = vpack.c.b16 %v2115, %v2115
          %v2180 = vpack.c.b16 %v2116, %v2116
          %v2181 = vpack.c.b16 %v2117, %v2117
          %v2182 = vpack.c.b16 %v2118, %v2118
          %v2183 = vpack.c.b16 %v2119, %v2119
          %v2184 = vpack.c.b16 %v2120, %v2120
          %v2185 = vpack.c.b16 %v2121, %v2121
          %v2186 = vpack.c.b16 %v2122, %v2122
          %v2187 = vpack.c.b16 %v2123, %v2123
          %v2188 = vpack.c.b16 %v2124, %v2124
          %v2189 = vpack.c.b16 %v2125, %v2125
          %v2190 = vpack.c.b16 %v2126, %v2126
          %v2191 = vpack.c.b16 %v2127, %v2127
          %v2192 = vpack.c.b16 %v2128, %v2128
          %v2193 = vpack.c.b16 %v2129, %v2129
          %v2194 = vpack.c.b16 %v2130, %v2130
          %v2195 = vpack.c.b16 %v2131, %v2131
          %v2196 = vpack.c.b16 %v2132, %v2132
          %v2197 = vpack.c.b16 %v2133, %v2133
          %v2198 = vpack.c.b16 %v2134, %v2134
          %v2199 = vpack.c.b16 %v2135, %v2135
          %v2200 = vpack.c.b16 %v2136, %v2136
          %v2201 = vpack.c.b16 %v2137, %v2137
          %v2202 = vpack.c.b16 %v2138, %v2138
          %v2203 = vpack.c.b16 %v2139, %v2139
          %s2268 = smul.addr %s1415, 4
          %s2269 = scalar_lea.vmem [#allocation4], %s2268
          %2270 = vst [vmem:[%s2269] sm:$0xf] %v2140
          %2271 = vst [vmem:[%s2269 + $0x4] sm:$0xf] %v2141
          %2272 = vst [vmem:[%s2269 + $0x8] sm:$0xf] %v2142
          %2273 = vst [vmem:[%s2269 + $0xc] sm:$0xf] %v2143
          %2274 = vst [vmem:[%s2269 + $0x10] sm:$0xf] %v2144
          %2275 = vst [vmem:[%s2269 + $0x14] sm:$0xf] %v2145
          %2276 = vst [vmem:[%s2269 + $0x18] sm:$0xf] %v2146
          %2277 = vst [vmem:[%s2269 + $0x1c] sm:$0xf] %v2147
          %2278 = vst [vmem:[%s2269 + $0x20] sm:$0xf] %v2148
          %2279 = vst [vmem:[%s2269 + $0x24] sm:$0xf] %v2149
          %2280 = vst [vmem:[%s2269 + $0x28] sm:$0xf] %v2150
          %2281 = vst [vmem:[%s2269 + $0x2c] sm:$0xf] %v2151
          %2282 = vst [vmem:[%s2269 + $0x30] sm:$0xf] %v2152
          %2283 = vst [vmem:[%s2269 + $0x34] sm:$0xf] %v2153
          %2284 = vst [vmem:[%s2269 + $0x38] sm:$0xf] %v2154
          %2285 = vst [vmem:[%s2269 + $0x3c] sm:$0xf] %v2155
          %2286 = vst [vmem:[%s2269 + $0x40] sm:$0xf] %v2156
          %2287 = vst [vmem:[%s2269 + $0x44] sm:$0xf] %v2157
          %2288 = vst [vmem:[%s2269 + $0x48] sm:$0xf] %v2158
          %2289 = vst [vmem:[%s2269 + $0x4c] sm:$0xf] %v2159
          %2290 = vst [vmem:[%s2269 + $0x50] sm:$0xf] %v2160
          %2291 = vst [vmem:[%s2269 + $0x54] sm:$0xf] %v2161
          %2292 = vst [vmem:[%s2269 + $0x58] sm:$0xf] %v2162
          %2293 = vst [vmem:[%s2269 + $0x5c] sm:$0xf] %v2163
          %2294 = vst [vmem:[%s2269 + $0x60] sm:$0xf] %v2164
          %2295 = vst [vmem:[%s2269 + $0x64] sm:$0xf] %v2165
          %2296 = vst [vmem:[%s2269 + $0x68] sm:$0xf] %v2166
          %2297 = vst [vmem:[%s2269 + $0x6c] sm:$0xf] %v2167
          %2298 = vst [vmem:[%s2269 + $0x70] sm:$0xf] %v2168
          %2299 = vst [vmem:[%s2269 + $0x74] sm:$0xf] %v2169
          %2300 = vst [vmem:[%s2269 + $0x78] sm:$0xf] %v2170
          %2301 = vst [vmem:[%s2269 + $0x7c] sm:$0xf] %v2171
          %2302 = vst [vmem:[%s2269 + $0x80] sm:$0xf] %v2172
          %2303 = vst [vmem:[%s2269 + $0x84] sm:$0xf] %v2173
          %2304 = vst [vmem:[%s2269 + $0x88] sm:$0xf] %v2174
          %2305 = vst [vmem:[%s2269 + $0x8c] sm:$0xf] %v2175
          %2306 = vst [vmem:[%s2269 + $0x90] sm:$0xf] %v2176
          %2307 = vst [vmem:[%s2269 + $0x94] sm:$0xf] %v2177
          %2308 = vst [vmem:[%s2269 + $0x98] sm:$0xf] %v2178
          %2309 = vst [vmem:[%s2269 + $0x9c] sm:$0xf] %v2179
          %2310 = vst [vmem:[%s2269 + $0xa0] sm:$0xf] %v2180
          %2311 = vst [vmem:[%s2269 + $0xa4] sm:$0xf] %v2181
          %2312 = vst [vmem:[%s2269 + $0xa8] sm:$0xf] %v2182
          %2313 = vst [vmem:[%s2269 + $0xac] sm:$0xf] %v2183
          %2314 = vst [vmem:[%s2269 + $0xb0] sm:$0xf] %v2184
          %2315 = vst [vmem:[%s2269 + $0xb4] sm:$0xf] %v2185
          %2316 = vst [vmem:[%s2269 + $0xb8] sm:$0xf] %v2186
          %2317 = vst [vmem:[%s2269 + $0xbc] sm:$0xf] %v2187
          %2318 = vst [vmem:[%s2269 + $0xc0] sm:$0xf] %v2188
          %2319 = vst [vmem:[%s2269 + $0xc4] sm:$0xf] %v2189
          %2320 = vst [vmem:[%s2269 + $0xc8] sm:$0xf] %v2190
          %2321 = vst [vmem:[%s2269 + $0xcc] sm:$0xf] %v2191
          %2322 = vst [vmem:[%s2269 + $0xd0] sm:$0xf] %v2192
          %2323 = vst [vmem:[%s2269 + $0xd4] sm:$0xf] %v2193
          %2324 = vst [vmem:[%s2269 + $0xd8] sm:$0xf] %v2194
          %2325 = vst [vmem:[%s2269 + $0xdc] sm:$0xf] %v2195
          %2326 = vst [vmem:[%s2269 + $0xe0] sm:$0xf] %v2196
          %2327 = vst [vmem:[%s2269 + $0xe4] sm:$0xf] %v2197
          %2328 = vst [vmem:[%s2269 + $0xe8] sm:$0xf] %v2198
          %2329 = vst [vmem:[%s2269 + $0xec] sm:$0xf] %v2199
          %2330 = vst [vmem:[%s2269 + $0xf0] sm:$0xf] %v2200
          %2331 = vst [vmem:[%s2269 + $0xf4] sm:$0xf] %v2201
          %2332 = vst [vmem:[%s2269 + $0xf8] sm:$0xf] %v2202
          %2333 = vst [vmem:[%s2269 + $0xfc] sm:$0xf] %v2203
        $region52: #{gcn_forward_pallas.1} parent=39 // pred_fallthru
          _
      $region40: #{gcn_forward_pallas.1} parent=35 // pred_fallthru
        _
      %p2334 = scmp.eq.s32.totalorder %s22, 0
      // Predicated region
      $region53: #{gcn_forward_pallas.1} parent=35 // pred_check
        %p2335 = pneg %p2334
      $region54: #{gcn_forward_pallas.1} parent=35 // pred_check_branch
        %2337 = sbr.rel (%p2335) target = $region56
      $region55: #{gcn_forward_pallas.1} parent=35 // pred_region
        %2338 = vst [vmem:[#allocation5] sm:$0xff] 0.0
        %2339 = vst [vmem:[#allocation5 + $0x8] sm:$0xff] 0.0
        %2340 = vst [vmem:[#allocation5 + $0x10] sm:$0xff] 0.0
        %2341 = vst [vmem:[#allocation5 + $0x18] sm:$0xff] 0.0
        %2342 = vst [vmem:[#allocation5 + $0x20] sm:$0xff] 0.0
        %2343 = vst [vmem:[#allocation5 + $0x28] sm:$0xff] 0.0
        %2344 = vst [vmem:[#allocation5 + $0x30] sm:$0xff] 0.0
        %2345 = vst [vmem:[#allocation5 + $0x38] sm:$0xff] 0.0
        %2346 = vst [vmem:[#allocation5 + $0x40] sm:$0xff] 0.0
        %2347 = vst [vmem:[#allocation5 + $0x48] sm:$0xff] 0.0
        %2348 = vst [vmem:[#allocation5 + $0x50] sm:$0xff] 0.0
        %2349 = vst [vmem:[#allocation5 + $0x58] sm:$0xff] 0.0
        %2350 = vst [vmem:[#allocation5 + $0x60] sm:$0xff] 0.0
        %2351 = vst [vmem:[#allocation5 + $0x68] sm:$0xff] 0.0
        %2352 = vst [vmem:[#allocation5 + $0x70] sm:$0xff] 0.0
        %2353 = vst [vmem:[#allocation5 + $0x78] sm:$0xff] 0.0
        %2354 = vst [vmem:[#allocation5 + $0x80] sm:$0xff] 0.0
        %2355 = vst [vmem:[#allocation5 + $0x88] sm:$0xff] 0.0
        %2356 = vst [vmem:[#allocation5 + $0x90] sm:$0xff] 0.0
        %2357 = vst [vmem:[#allocation5 + $0x98] sm:$0xff] 0.0
        %2358 = vst [vmem:[#allocation5 + $0xa0] sm:$0xff] 0.0
        %2359 = vst [vmem:[#allocation5 + $0xa8] sm:$0xff] 0.0
        %2360 = vst [vmem:[#allocation5 + $0xb0] sm:$0xff] 0.0
        %2361 = vst [vmem:[#allocation5 + $0xb8] sm:$0xff] 0.0
        %2362 = vst [vmem:[#allocation5 + $0xc0] sm:$0xff] 0.0
        %2363 = vst [vmem:[#allocation5 + $0xc8] sm:$0xff] 0.0
        %2364 = vst [vmem:[#allocation5 + $0xd0] sm:$0xff] 0.0
        %2365 = vst [vmem:[#allocation5 + $0xd8] sm:$0xff] 0.0
        %2366 = vst [vmem:[#allocation5 + $0xe0] sm:$0xff] 0.0
        %2367 = vst [vmem:[#allocation5 + $0xe8] sm:$0xff] 0.0
        %2368 = vst [vmem:[#allocation5 + $0xf0] sm:$0xff] 0.0
        %2369 = vst [vmem:[#allocation5 + $0xf8] sm:$0xff] 0.0
        %2370 = vst [vmem:[#allocation5 + $0x100] sm:$0xff] 0.0
        %2371 = vst [vmem:[#allocation5 + $0x108] sm:$0xff] 0.0
        %2372 = vst [vmem:[#allocation5 + $0x110] sm:$0xff] 0.0
        %2373 = vst [vmem:[#allocation5 + $0x118] sm:$0xff] 0.0
        %2374 = vst [vmem:[#allocation5 + $0x120] sm:$0xff] 0.0
        %2375 = vst [vmem:[#allocation5 + $0x128] sm:$0xff] 0.0
        %2376 = vst [vmem:[#allocation5 + $0x130] sm:$0xff] 0.0
        %2377 = vst [vmem:[#allocation5 + $0x138] sm:$0xff] 0.0
        %2378 = vst [vmem:[#allocation5 + $0x140] sm:$0xff] 0.0
        %2379 = vst [vmem:[#allocation5 + $0x148] sm:$0xff] 0.0
        %2380 = vst [vmem:[#allocation5 + $0x150] sm:$0xff] 0.0
        %2381 = vst [vmem:[#allocation5 + $0x158] sm:$0xff] 0.0
        %2382 = vst [vmem:[#allocation5 + $0x160] sm:$0xff] 0.0
        %2383 = vst [vmem:[#allocation5 + $0x168] sm:$0xff] 0.0
        %2384 = vst [vmem:[#allocation5 + $0x170] sm:$0xff] 0.0
        %2385 = vst [vmem:[#allocation5 + $0x178] sm:$0xff] 0.0
        %2386 = vst [vmem:[#allocation5 + $0x180] sm:$0xff] 0.0
        %2387 = vst [vmem:[#allocation5 + $0x188] sm:$0xff] 0.0
        %2388 = vst [vmem:[#allocation5 + $0x190] sm:$0xff] 0.0
        %2389 = vst [vmem:[#allocation5 + $0x198] sm:$0xff] 0.0
        %2390 = vst [vmem:[#allocation5 + $0x1a0] sm:$0xff] 0.0
        %2391 = vst [vmem:[#allocation5 + $0x1a8] sm:$0xff] 0.0
        %2392 = vst [vmem:[#allocation5 + $0x1b0] sm:$0xff] 0.0
        %2393 = vst [vmem:[#allocation5 + $0x1b8] sm:$0xff] 0.0
        %2394 = vst [vmem:[#allocation5 + $0x1c0] sm:$0xff] 0.0
        %2395 = vst [vmem:[#allocation5 + $0x1c8] sm:$0xff] 0.0
        %2396 = vst [vmem:[#allocation5 + $0x1d0] sm:$0xff] 0.0
        %2397 = vst [vmem:[#allocation5 + $0x1d8] sm:$0xff] 0.0
        %2398 = vst [vmem:[#allocation5 + $0x1e0] sm:$0xff] 0.0
        %2399 = vst [vmem:[#allocation5 + $0x1e8] sm:$0xff] 0.0
        %2400 = vst [vmem:[#allocation5 + $0x1f0] sm:$0xff] 0.0
        %2401 = vst [vmem:[#allocation5 + $0x1f8] sm:$0xff] 0.0
      $region56: #{gcn_forward_pallas.1} parent=35 // pred_fallthru
        _
      %s2402 = smul.addr %s300, 4
      %s2403 = scalar_lea.vmem %s1, %s2402
      %s2404 = sshra.s32 %s301, 3
      %s2405 = sand.u32 %s301, 7
      %s2406 = smul.u32 %s2404, 4
      %s2407 = smul.addr %s2406, 4
      %s2408 = scalar_lea.vmem %s2403, %s2407
      %v2409 = vld [vmem:[%s2408] sm:$0xff]
      %v2410 = vld [vmem:[%s2408 + $0x8] sm:$0xff]
      %v2411 = vld [vmem:[%s2408 + $0x10] sm:$0xff]
      %v2412 = vld [vmem:[%s2408 + $0x18] sm:$0xff]
      %v2413 = vld [vmem:[%s2408 + $0x20] sm:$0xff]
      %v2414 = vld [vmem:[%s2408 + $0x28] sm:$0xff]
      %v2415 = vld [vmem:[%s2408 + $0x30] sm:$0xff]
      %v2416 = vld [vmem:[%s2408 + $0x38] sm:$0xff]
      %v2417 = vld [vmem:[%s2408 + $0x40] sm:$0xff]
      %v2418 = vld [vmem:[%s2408 + $0x48] sm:$0xff]
      %v2419 = vld [vmem:[%s2408 + $0x50] sm:$0xff]
      %v2420 = vld [vmem:[%s2408 + $0x58] sm:$0xff]
      %v2421 = vld [vmem:[%s2408 + $0x60] sm:$0xff]
      %v2422 = vld [vmem:[%s2408 + $0x68] sm:$0xff]
      %v2423 = vld [vmem:[%s2408 + $0x70] sm:$0xff]
      %v2424 = vld [vmem:[%s2408 + $0x78] sm:$0xff]
      %v2425 = vld [vmem:[%s2408 + $0x80] sm:$0xff]
      %v2426 = vld [vmem:[%s2408 + $0x88] sm:$0xff]
      %v2427 = vld [vmem:[%s2408 + $0x90] sm:$0xff]
      %v2428 = vld [vmem:[%s2408 + $0x98] sm:$0xff]
      %v2429 = vld [vmem:[%s2408 + $0xa0] sm:$0xff]
      %v2430 = vld [vmem:[%s2408 + $0xa8] sm:$0xff]
      %v2431 = vld [vmem:[%s2408 + $0xb0] sm:$0xff]
      %v2432 = vld [vmem:[%s2408 + $0xb8] sm:$0xff]
      %v2433 = vld [vmem:[%s2408 + $0xc0] sm:$0xff]
      %v2434 = vld [vmem:[%s2408 + $0xc8] sm:$0xff]
      %v2435 = vld [vmem:[%s2408 + $0xd0] sm:$0xff]
      %v2436 = vld [vmem:[%s2408 + $0xd8] sm:$0xff]
      %v2437 = vld [vmem:[%s2408 + $0xe0] sm:$0xff]
      %v2438 = vld [vmem:[%s2408 + $0xe8] sm:$0xff]
      %v2439 = vld [vmem:[%s2408 + $0xf0] sm:$0xff]
      %v2440 = vld [vmem:[%s2408 + $0xf8] sm:$0xff]
      %v2441 = vld [vmem:[%s2408 + $0x100] sm:$0xff]
      %v2442 = vld [vmem:[%s2408 + $0x108] sm:$0xff]
      %v2443 = vld [vmem:[%s2408 + $0x110] sm:$0xff]
      %v2444 = vld [vmem:[%s2408 + $0x118] sm:$0xff]
      %v2445 = vld [vmem:[%s2408 + $0x120] sm:$0xff]
      %v2446 = vld [vmem:[%s2408 + $0x128] sm:$0xff]
      %v2447 = vld [vmem:[%s2408 + $0x130] sm:$0xff]
      %v2448 = vld [vmem:[%s2408 + $0x138] sm:$0xff]
      %v2449 = vld [vmem:[%s2408 + $0x140] sm:$0xff]
      %v2450 = vld [vmem:[%s2408 + $0x148] sm:$0xff]
      %v2451 = vld [vmem:[%s2408 + $0x150] sm:$0xff]
      %v2452 = vld [vmem:[%s2408 + $0x158] sm:$0xff]
      %v2453 = vld [vmem:[%s2408 + $0x160] sm:$0xff]
      %v2454 = vld [vmem:[%s2408 + $0x168] sm:$0xff]
      %v2455 = vld [vmem:[%s2408 + $0x170] sm:$0xff]
      %v2456 = vld [vmem:[%s2408 + $0x178] sm:$0xff]
      %v2457 = vld [vmem:[%s2408 + $0x180] sm:$0xff]
      %v2458 = vld [vmem:[%s2408 + $0x188] sm:$0xff]
      %v2459 = vld [vmem:[%s2408 + $0x190] sm:$0xff]
      %v2460 = vld [vmem:[%s2408 + $0x198] sm:$0xff]
      %v2461 = vld [vmem:[%s2408 + $0x1a0] sm:$0xff]
      %v2462 = vld [vmem:[%s2408 + $0x1a8] sm:$0xff]
      %v2463 = vld [vmem:[%s2408 + $0x1b0] sm:$0xff]
      %v2464 = vld [vmem:[%s2408 + $0x1b8] sm:$0xff]
      %v2465 = vld [vmem:[%s2408 + $0x1c0] sm:$0xff]
      %v2466 = vld [vmem:[%s2408 + $0x1c8] sm:$0xff]
      %v2467 = vld [vmem:[%s2408 + $0x1d0] sm:$0xff]
      %v2468 = vld [vmem:[%s2408 + $0x1d8] sm:$0xff]
      %v2469 = vld [vmem:[%s2408 + $0x1e0] sm:$0xff]
      %v2470 = vld [vmem:[%s2408 + $0x1e8] sm:$0xff]
      %v2471 = vld [vmem:[%s2408 + $0x1f0] sm:$0xff]
      %v2472 = vld [vmem:[%s2408 + $0x1f8] sm:$0xff]
      %v2473 = vld [vmem:[%s2408 + $0x200] sm:$0xff]
      %v2474 = vld [vmem:[%s2408 + $0x208] sm:$0xff]
      %v2475 = vld [vmem:[%s2408 + $0x210] sm:$0xff]
      %v2476 = vld [vmem:[%s2408 + $0x218] sm:$0xff]
      %v2477 = vld [vmem:[%s2408 + $0x220] sm:$0xff]
      %v2478 = vld [vmem:[%s2408 + $0x228] sm:$0xff]
      %v2479 = vld [vmem:[%s2408 + $0x230] sm:$0xff]
      %v2480 = vld [vmem:[%s2408 + $0x238] sm:$0xff]
      %v2481 = vld [vmem:[%s2408 + $0x240] sm:$0xff]
      %v2482 = vld [vmem:[%s2408 + $0x248] sm:$0xff]
      %v2483 = vld [vmem:[%s2408 + $0x250] sm:$0xff]
      %v2484 = vld [vmem:[%s2408 + $0x258] sm:$0xff]
      %v2485 = vld [vmem:[%s2408 + $0x260] sm:$0xff]
      %v2486 = vld [vmem:[%s2408 + $0x268] sm:$0xff]
      %v2487 = vld [vmem:[%s2408 + $0x270] sm:$0xff]
      %v2488 = vld [vmem:[%s2408 + $0x278] sm:$0xff]
      %v2489 = vld [vmem:[%s2408 + $0x280] sm:$0xff]
      %v2490 = vld [vmem:[%s2408 + $0x288] sm:$0xff]
      %v2491 = vld [vmem:[%s2408 + $0x290] sm:$0xff]
      %v2492 = vld [vmem:[%s2408 + $0x298] sm:$0xff]
      %v2493 = vld [vmem:[%s2408 + $0x2a0] sm:$0xff]
      %v2494 = vld [vmem:[%s2408 + $0x2a8] sm:$0xff]
      %v2495 = vld [vmem:[%s2408 + $0x2b0] sm:$0xff]
      %v2496 = vld [vmem:[%s2408 + $0x2b8] sm:$0xff]
      %v2497 = vld [vmem:[%s2408 + $0x2c0] sm:$0xff]
      %v2498 = vld [vmem:[%s2408 + $0x2c8] sm:$0xff]
      %v2499 = vld [vmem:[%s2408 + $0x2d0] sm:$0xff]
      %v2500 = vld [vmem:[%s2408 + $0x2d8] sm:$0xff]
      %v2501 = vld [vmem:[%s2408 + $0x2e0] sm:$0xff]
      %v2502 = vld [vmem:[%s2408 + $0x2e8] sm:$0xff]
      %v2503 = vld [vmem:[%s2408 + $0x2f0] sm:$0xff]
      %v2504 = vld [vmem:[%s2408 + $0x2f8] sm:$0xff]
      %v2505 = vld [vmem:[%s2408 + $0x300] sm:$0xff]
      %v2506 = vld [vmem:[%s2408 + $0x308] sm:$0xff]
      %v2507 = vld [vmem:[%s2408 + $0x310] sm:$0xff]
      %v2508 = vld [vmem:[%s2408 + $0x318] sm:$0xff]
      %v2509 = vld [vmem:[%s2408 + $0x320] sm:$0xff]
      %v2510 = vld [vmem:[%s2408 + $0x328] sm:$0xff]
      %v2511 = vld [vmem:[%s2408 + $0x330] sm:$0xff]
      %v2512 = vld [vmem:[%s2408 + $0x338] sm:$0xff]
      %v2513 = vld [vmem:[%s2408 + $0x340] sm:$0xff]
      %v2514 = vld [vmem:[%s2408 + $0x348] sm:$0xff]
      %v2515 = vld [vmem:[%s2408 + $0x350] sm:$0xff]
      %v2516 = vld [vmem:[%s2408 + $0x358] sm:$0xff]
      %v2517 = vld [vmem:[%s2408 + $0x360] sm:$0xff]
      %v2518 = vld [vmem:[%s2408 + $0x368] sm:$0xff]
      %v2519 = vld [vmem:[%s2408 + $0x370] sm:$0xff]
      %v2520 = vld [vmem:[%s2408 + $0x378] sm:$0xff]
      %v2521 = vld [vmem:[%s2408 + $0x380] sm:$0xff]
      %v2522 = vld [vmem:[%s2408 + $0x388] sm:$0xff]
      %v2523 = vld [vmem:[%s2408 + $0x390] sm:$0xff]
      %v2524 = vld [vmem:[%s2408 + $0x398] sm:$0xff]
      %v2525 = vld [vmem:[%s2408 + $0x3a0] sm:$0xff]
      %v2526 = vld [vmem:[%s2408 + $0x3a8] sm:$0xff]
      %v2527 = vld [vmem:[%s2408 + $0x3b0] sm:$0xff]
      %v2528 = vld [vmem:[%s2408 + $0x3b8] sm:$0xff]
      %v2529 = vld [vmem:[%s2408 + $0x3c0] sm:$0xff]
      %v2530 = vld [vmem:[%s2408 + $0x3c8] sm:$0xff]
      %v2531 = vld [vmem:[%s2408 + $0x3d0] sm:$0xff]
      %v2532 = vld [vmem:[%s2408 + $0x3d8] sm:$0xff]
      %v2533 = vld [vmem:[%s2408 + $0x3e0] sm:$0xff]
      %v2534 = vld [vmem:[%s2408 + $0x3e8] sm:$0xff]
      %v2535 = vld [vmem:[%s2408 + $0x3f0] sm:$0xff]
      %v2536 = vld [vmem:[%s2408 + $0x3f8] sm:$0xff]
      %v2537 = vld [vmem:[#allocation5] sm:$0xff]
      %v2538 = vld [vmem:[#allocation5 + $0x8] sm:$0xff]
      %v2539 = vld [vmem:[#allocation5 + $0x10] sm:$0xff]
      %v2540 = vld [vmem:[#allocation5 + $0x18] sm:$0xff]
      %v2541 = vld [vmem:[#allocation5 + $0x20] sm:$0xff]
      %v2542 = vld [vmem:[#allocation5 + $0x28] sm:$0xff]
      %v2543 = vld [vmem:[#allocation5 + $0x30] sm:$0xff]
      %v2544 = vld [vmem:[#allocation5 + $0x38] sm:$0xff]
      %v2545 = vld [vmem:[#allocation5 + $0x40] sm:$0xff]
      %v2546 = vld [vmem:[#allocation5 + $0x48] sm:$0xff]
      %v2547 = vld [vmem:[#allocation5 + $0x50] sm:$0xff]
      %v2548 = vld [vmem:[#allocation5 + $0x58] sm:$0xff]
      %v2549 = vld [vmem:[#allocation5 + $0x60] sm:$0xff]
      %v2550 = vld [vmem:[#allocation5 + $0x68] sm:$0xff]
      %v2551 = vld [vmem:[#allocation5 + $0x70] sm:$0xff]
      %v2552 = vld [vmem:[#allocation5 + $0x78] sm:$0xff]
      %v2553 = vld [vmem:[#allocation5 + $0x80] sm:$0xff]
      %v2554 = vld [vmem:[#allocation5 + $0x88] sm:$0xff]
      %v2555 = vld [vmem:[#allocation5 + $0x90] sm:$0xff]
      %v2556 = vld [vmem:[#allocation5 + $0x98] sm:$0xff]
      %v2557 = vld [vmem:[#allocation5 + $0xa0] sm:$0xff]
      %v2558 = vld [vmem:[#allocation5 + $0xa8] sm:$0xff]
      %v2559 = vld [vmem:[#allocation5 + $0xb0] sm:$0xff]
      %v2560 = vld [vmem:[#allocation5 + $0xb8] sm:$0xff]
      %v2561 = vld [vmem:[#allocation5 + $0xc0] sm:$0xff]
      %v2562 = vld [vmem:[#allocation5 + $0xc8] sm:$0xff]
      %v2563 = vld [vmem:[#allocation5 + $0xd0] sm:$0xff]
      %v2564 = vld [vmem:[#allocation5 + $0xd8] sm:$0xff]
      %v2565 = vld [vmem:[#allocation5 + $0xe0] sm:$0xff]
      %v2566 = vld [vmem:[#allocation5 + $0xe8] sm:$0xff]
      %v2567 = vld [vmem:[#allocation5 + $0xf0] sm:$0xff]
      %v2568 = vld [vmem:[#allocation5 + $0xf8] sm:$0xff]
      %v2569 = vld [vmem:[#allocation5 + $0x100] sm:$0xff]
      %v2570 = vld [vmem:[#allocation5 + $0x108] sm:$0xff]
      %v2571 = vld [vmem:[#allocation5 + $0x110] sm:$0xff]
      %v2572 = vld [vmem:[#allocation5 + $0x118] sm:$0xff]
      %v2573 = vld [vmem:[#allocation5 + $0x120] sm:$0xff]
      %v2574 = vld [vmem:[#allocation5 + $0x128] sm:$0xff]
      %v2575 = vld [vmem:[#allocation5 + $0x130] sm:$0xff]
      %v2576 = vld [vmem:[#allocation5 + $0x138] sm:$0xff]
      %v2577 = vld [vmem:[#allocation5 + $0x140] sm:$0xff]
      %v2578 = vld [vmem:[#allocation5 + $0x148] sm:$0xff]
      %v2579 = vld [vmem:[#allocation5 + $0x150] sm:$0xff]
      %v2580 = vld [vmem:[#allocation5 + $0x158] sm:$0xff]
      %v2581 = vld [vmem:[#allocation5 + $0x160] sm:$0xff]
      %v2582 = vld [vmem:[#allocation5 + $0x168] sm:$0xff]
      %v2583 = vld [vmem:[#allocation5 + $0x170] sm:$0xff]
      %v2584 = vld [vmem:[#allocation5 + $0x178] sm:$0xff]
      %v2585 = vld [vmem:[#allocation5 + $0x180] sm:$0xff]
      %v2586 = vld [vmem:[#allocation5 + $0x188] sm:$0xff]
      %v2587 = vld [vmem:[#allocation5 + $0x190] sm:$0xff]
      %v2588 = vld [vmem:[#allocation5 + $0x198] sm:$0xff]
      %v2589 = vld [vmem:[#allocation5 + $0x1a0] sm:$0xff]
      %v2590 = vld [vmem:[#allocation5 + $0x1a8] sm:$0xff]
      %v2591 = vld [vmem:[#allocation5 + $0x1b0] sm:$0xff]
      %v2592 = vld [vmem:[#allocation5 + $0x1b8] sm:$0xff]
      %v2593 = vld [vmem:[#allocation5 + $0x1c0] sm:$0xff]
      %v2594 = vld [vmem:[#allocation5 + $0x1c8] sm:$0xff]
      %v2595 = vld [vmem:[#allocation5 + $0x1d0] sm:$0xff]
      %v2596 = vld [vmem:[#allocation5 + $0x1d8] sm:$0xff]
      %v2597 = vld [vmem:[#allocation5 + $0x1e0] sm:$0xff]
      %v2598 = vld [vmem:[#allocation5 + $0x1e8] sm:$0xff]
      %v2599 = vld [vmem:[#allocation5 + $0x1f0] sm:$0xff]
      %v2600 = vld [vmem:[#allocation5 + $0x1f8] sm:$0xff]
      %s2601 = sshra.s32 %s300, 3
      %s2602 = sand.u32 %s300, 7
      %s2603 = smul.addr %s2601, 4
      %s2604 = scalar_lea.vmem [#allocation4], %s2603
      %v2605 = vld [vmem:[%s2604] sm:$0xf]
      %v2606 = vld [vmem:[%s2604 + $0x4] sm:$0xf]
      %v2607 = vld [vmem:[%s2604 + $0x8] sm:$0xf]
      %v2608 = vld [vmem:[%s2604 + $0xc] sm:$0xf]
      %v2609 = vld [vmem:[%s2604 + $0x10] sm:$0xf]
      %v2610 = vld [vmem:[%s2604 + $0x14] sm:$0xf]
      %v2611 = vld [vmem:[%s2604 + $0x18] sm:$0xf]
      %v2612 = vld [vmem:[%s2604 + $0x1c] sm:$0xf]
      %v2613 = vld [vmem:[%s2604 + $0x20] sm:$0xf]
      %v2614 = vld [vmem:[%s2604 + $0x24] sm:$0xf]
      %v2615 = vld [vmem:[%s2604 + $0x28] sm:$0xf]
      %v2616 = vld [vmem:[%s2604 + $0x2c] sm:$0xf]
      %v2617 = vld [vmem:[%s2604 + $0x30] sm:$0xf]
      %v2618 = vld [vmem:[%s2604 + $0x34] sm:$0xf]
      %v2619 = vld [vmem:[%s2604 + $0x38] sm:$0xf]
      %v2620 = vld [vmem:[%s2604 + $0x3c] sm:$0xf]
      %v2621 = vld [vmem:[%s2604 + $0x40] sm:$0xf]
      %v2622 = vld [vmem:[%s2604 + $0x44] sm:$0xf]
      %v2623 = vld [vmem:[%s2604 + $0x48] sm:$0xf]
      %v2624 = vld [vmem:[%s2604 + $0x4c] sm:$0xf]
      %v2625 = vld [vmem:[%s2604 + $0x50] sm:$0xf]
      %v2626 = vld [vmem:[%s2604 + $0x54] sm:$0xf]
      %v2627 = vld [vmem:[%s2604 + $0x58] sm:$0xf]
      %v2628 = vld [vmem:[%s2604 + $0x5c] sm:$0xf]
      %v2629 = vld [vmem:[%s2604 + $0x60] sm:$0xf]
      %v2630 = vld [vmem:[%s2604 + $0x64] sm:$0xf]
      %v2631 = vld [vmem:[%s2604 + $0x68] sm:$0xf]
      %v2632 = vld [vmem:[%s2604 + $0x6c] sm:$0xf]
      %v2633 = vld [vmem:[%s2604 + $0x70] sm:$0xf]
      %v2634 = vld [vmem:[%s2604 + $0x74] sm:$0xf]
      %v2635 = vld [vmem:[%s2604 + $0x78] sm:$0xf]
      %v2636 = vld [vmem:[%s2604 + $0x7c] sm:$0xf]
      %v2637 = vld [vmem:[%s2604 + $0x80] sm:$0xf]
      %v2638 = vld [vmem:[%s2604 + $0x84] sm:$0xf]
      %v2639 = vld [vmem:[%s2604 + $0x88] sm:$0xf]
      %v2640 = vld [vmem:[%s2604 + $0x8c] sm:$0xf]
      %v2641 = vld [vmem:[%s2604 + $0x90] sm:$0xf]
      %v2642 = vld [vmem:[%s2604 + $0x94] sm:$0xf]
      %v2643 = vld [vmem:[%s2604 + $0x98] sm:$0xf]
      %v2644 = vld [vmem:[%s2604 + $0x9c] sm:$0xf]
      %v2645 = vld [vmem:[%s2604 + $0xa0] sm:$0xf]
      %v2646 = vld [vmem:[%s2604 + $0xa4] sm:$0xf]
      %v2647 = vld [vmem:[%s2604 + $0xa8] sm:$0xf]
      %v2648 = vld [vmem:[%s2604 + $0xac] sm:$0xf]
      %v2649 = vld [vmem:[%s2604 + $0xb0] sm:$0xf]
      %v2650 = vld [vmem:[%s2604 + $0xb4] sm:$0xf]
      %v2651 = vld [vmem:[%s2604 + $0xb8] sm:$0xf]
      %v2652 = vld [vmem:[%s2604 + $0xbc] sm:$0xf]
      %v2653 = vld [vmem:[%s2604 + $0xc0] sm:$0xf]
      %v2654 = vld [vmem:[%s2604 + $0xc4] sm:$0xf]
      %v2655 = vld [vmem:[%s2604 + $0xc8] sm:$0xf]
      %v2656 = vld [vmem:[%s2604 + $0xcc] sm:$0xf]
      %v2657 = vld [vmem:[%s2604 + $0xd0] sm:$0xf]
      %v2658 = vld [vmem:[%s2604 + $0xd4] sm:$0xf]
      %v2659 = vld [vmem:[%s2604 + $0xd8] sm:$0xf]
      %v2660 = vld [vmem:[%s2604 + $0xdc] sm:$0xf]
      %v2661 = vld [vmem:[%s2604 + $0xe0] sm:$0xf]
      %v2662 = vld [vmem:[%s2604 + $0xe4] sm:$0xf]
      %v2663 = vld [vmem:[%s2604 + $0xe8] sm:$0xf]
      %v2664 = vld [vmem:[%s2604 + $0xec] sm:$0xf]
      %v2665 = vld [vmem:[%s2604 + $0xf0] sm:$0xf]
      %v2666 = vld [vmem:[%s2604 + $0xf4] sm:$0xf]
      %v2667 = vld [vmem:[%s2604 + $0xf8] sm:$0xf]
      %v2668 = vld [vmem:[%s2604 + $0xfc] sm:$0xf]
      %v2797 = vunpack.c.l.b16 %v2409
      %v2798 = vunpack.c.h.b16 %v2409
      %v2799 = vunpack.c.l.b16 %v2410
      %v2800 = vunpack.c.h.b16 %v2410
      %v2801 = vunpack.c.l.b16 %v2411
      %v2802 = vunpack.c.h.b16 %v2411
      %v2803 = vunpack.c.l.b16 %v2412
      %v2804 = vunpack.c.h.b16 %v2412
      %v2805 = vunpack.c.l.b16 %v2413
      %v2806 = vunpack.c.h.b16 %v2413
      %v2807 = vunpack.c.l.b16 %v2414
      %v2808 = vunpack.c.h.b16 %v2414
      %v2809 = vunpack.c.l.b16 %v2415
      %v2810 = vunpack.c.h.b16 %v2415
      %v2811 = vunpack.c.l.b16 %v2416
      %v2812 = vunpack.c.h.b16 %v2416
      %v2813 = vunpack.c.l.b16 %v2417
      %v2814 = vunpack.c.h.b16 %v2417
      %v2815 = vunpack.c.l.b16 %v2418
      %v2816 = vunpack.c.h.b16 %v2418
      %v2817 = vunpack.c.l.b16 %v2419
      %v2818 = vunpack.c.h.b16 %v2419
      %v2819 = vunpack.c.l.b16 %v2420
      %v2820 = vunpack.c.h.b16 %v2420
      %v2821 = vunpack.c.l.b16 %v2421
      %v2822 = vunpack.c.h.b16 %v2421
      %v2823 = vunpack.c.l.b16 %v2422
      %v2824 = vunpack.c.h.b16 %v2422
      %v2825 = vunpack.c.l.b16 %v2423
      %v2826 = vunpack.c.h.b16 %v2423
      %v2827 = vunpack.c.l.b16 %v2424
      %v2828 = vunpack.c.h.b16 %v2424
      %v2829 = vunpack.c.l.b16 %v2425
      %v2830 = vunpack.c.h.b16 %v2425
      %v2831 = vunpack.c.l.b16 %v2426
      %v2832 = vunpack.c.h.b16 %v2426
      %v2833 = vunpack.c.l.b16 %v2427
      %v2834 = vunpack.c.h.b16 %v2427
      %v2835 = vunpack.c.l.b16 %v2428
      %v2836 = vunpack.c.h.b16 %v2428
      %v2837 = vunpack.c.l.b16 %v2429
      %v2838 = vunpack.c.h.b16 %v2429
      %v2839 = vunpack.c.l.b16 %v2430
      %v2840 = vunpack.c.h.b16 %v2430
      %v2841 = vunpack.c.l.b16 %v2431
      %v2842 = vunpack.c.h.b16 %v2431
      %v2843 = vunpack.c.l.b16 %v2432
      %v2844 = vunpack.c.h.b16 %v2432
      %v2845 = vunpack.c.l.b16 %v2433
      %v2846 = vunpack.c.h.b16 %v2433
      %v2847 = vunpack.c.l.b16 %v2434
      %v2848 = vunpack.c.h.b16 %v2434
      %v2849 = vunpack.c.l.b16 %v2435
      %v2850 = vunpack.c.h.b16 %v2435
      %v2851 = vunpack.c.l.b16 %v2436
      %v2852 = vunpack.c.h.b16 %v2436
      %v2853 = vunpack.c.l.b16 %v2437
      %v2854 = vunpack.c.h.b16 %v2437
      %v2855 = vunpack.c.l.b16 %v2438
      %v2856 = vunpack.c.h.b16 %v2438
      %v2857 = vunpack.c.l.b16 %v2439
      %v2858 = vunpack.c.h.b16 %v2439
      %v2859 = vunpack.c.l.b16 %v2440
      %v2860 = vunpack.c.h.b16 %v2440
      %v2861 = vunpack.c.l.b16 %v2441
      %v2862 = vunpack.c.h.b16 %v2441
      %v2863 = vunpack.c.l.b16 %v2442
      %v2864 = vunpack.c.h.b16 %v2442
      %v2865 = vunpack.c.l.b16 %v2443
      %v2866 = vunpack.c.h.b16 %v2443
      %v2867 = vunpack.c.l.b16 %v2444
      %v2868 = vunpack.c.h.b16 %v2444
      %v2869 = vunpack.c.l.b16 %v2445
      %v2870 = vunpack.c.h.b16 %v2445
      %v2871 = vunpack.c.l.b16 %v2446
      %v2872 = vunpack.c.h.b16 %v2446
      %v2873 = vunpack.c.l.b16 %v2447
      %v2874 = vunpack.c.h.b16 %v2447
      %v2875 = vunpack.c.l.b16 %v2448
      %v2876 = vunpack.c.h.b16 %v2448
      %v2877 = vunpack.c.l.b16 %v2449
      %v2878 = vunpack.c.h.b16 %v2449
      %v2879 = vunpack.c.l.b16 %v2450
      %v2880 = vunpack.c.h.b16 %v2450
      %v2881 = vunpack.c.l.b16 %v2451
      %v2882 = vunpack.c.h.b16 %v2451
      %v2883 = vunpack.c.l.b16 %v2452
      %v2884 = vunpack.c.h.b16 %v2452
      %v2885 = vunpack.c.l.b16 %v2453
      %v2886 = vunpack.c.h.b16 %v2453
      %v2887 = vunpack.c.l.b16 %v2454
      %v2888 = vunpack.c.h.b16 %v2454
      %v2889 = vunpack.c.l.b16 %v2455
      %v2890 = vunpack.c.h.b16 %v2455
      %v2891 = vunpack.c.l.b16 %v2456
      %v2892 = vunpack.c.h.b16 %v2456
      %v2893 = vunpack.c.l.b16 %v2457
      %v2894 = vunpack.c.h.b16 %v2457
      %v2895 = vunpack.c.l.b16 %v2458
      %v2896 = vunpack.c.h.b16 %v2458
      %v2897 = vunpack.c.l.b16 %v2459
      %v2898 = vunpack.c.h.b16 %v2459
      %v2899 = vunpack.c.l.b16 %v2460
      %v2900 = vunpack.c.h.b16 %v2460
      %v2901 = vunpack.c.l.b16 %v2461
      %v2902 = vunpack.c.h.b16 %v2461
      %v2903 = vunpack.c.l.b16 %v2462
      %v2904 = vunpack.c.h.b16 %v2462
      %v2905 = vunpack.c.l.b16 %v2463
      %v2906 = vunpack.c.h.b16 %v2463
      %v2907 = vunpack.c.l.b16 %v2464
      %v2908 = vunpack.c.h.b16 %v2464
      %v2909 = vunpack.c.l.b16 %v2465
      %v2910 = vunpack.c.h.b16 %v2465
      %v2911 = vunpack.c.l.b16 %v2466
      %v2912 = vunpack.c.h.b16 %v2466
      %v2913 = vunpack.c.l.b16 %v2467
      %v2914 = vunpack.c.h.b16 %v2467
      %v2915 = vunpack.c.l.b16 %v2468
      %v2916 = vunpack.c.h.b16 %v2468
      %v2917 = vunpack.c.l.b16 %v2469
      %v2918 = vunpack.c.h.b16 %v2469
      %v2919 = vunpack.c.l.b16 %v2470
      %v2920 = vunpack.c.h.b16 %v2470
      %v2921 = vunpack.c.l.b16 %v2471
      %v2922 = vunpack.c.h.b16 %v2471
      %v2923 = vunpack.c.l.b16 %v2472
      %v2924 = vunpack.c.h.b16 %v2472
      %v2925 = vunpack.c.l.b16 %v2473
      %v2926 = vunpack.c.h.b16 %v2473
      %v2927 = vunpack.c.l.b16 %v2474
      %v2928 = vunpack.c.h.b16 %v2474
      %v2929 = vunpack.c.l.b16 %v2475
      %v2930 = vunpack.c.h.b16 %v2475
      %v2931 = vunpack.c.l.b16 %v2476
      %v2932 = vunpack.c.h.b16 %v2476
      %v2933 = vunpack.c.l.b16 %v2477
      %v2934 = vunpack.c.h.b16 %v2477
      %v2935 = vunpack.c.l.b16 %v2478
      %v2936 = vunpack.c.h.b16 %v2478
      %v2937 = vunpack.c.l.b16 %v2479
      %v2938 = vunpack.c.h.b16 %v2479
      %v2939 = vunpack.c.l.b16 %v2480
      %v2940 = vunpack.c.h.b16 %v2480
      %v2941 = vunpack.c.l.b16 %v2481
      %v2942 = vunpack.c.h.b16 %v2481
      %v2943 = vunpack.c.l.b16 %v2482
      %v2944 = vunpack.c.h.b16 %v2482
      %v2945 = vunpack.c.l.b16 %v2483
      %v2946 = vunpack.c.h.b16 %v2483
      %v2947 = vunpack.c.l.b16 %v2484
      %v2948 = vunpack.c.h.b16 %v2484
      %v2949 = vunpack.c.l.b16 %v2485
      %v2950 = vunpack.c.h.b16 %v2485
      %v2951 = vunpack.c.l.b16 %v2486
      %v2952 = vunpack.c.h.b16 %v2486
      %v2953 = vunpack.c.l.b16 %v2487
      %v2954 = vunpack.c.h.b16 %v2487
      %v2955 = vunpack.c.l.b16 %v2488
      %v2956 = vunpack.c.h.b16 %v2488
      %v2957 = vunpack.c.l.b16 %v2489
      %v2958 = vunpack.c.h.b16 %v2489
      %v2959 = vunpack.c.l.b16 %v2490
      %v2960 = vunpack.c.h.b16 %v2490
      %v2961 = vunpack.c.l.b16 %v2491
      %v2962 = vunpack.c.h.b16 %v2491
      %v2963 = vunpack.c.l.b16 %v2492
      %v2964 = vunpack.c.h.b16 %v2492
      %v2965 = vunpack.c.l.b16 %v2493
      %v2966 = vunpack.c.h.b16 %v2493
      %v2967 = vunpack.c.l.b16 %v2494
      %v2968 = vunpack.c.h.b16 %v2494
      %v2969 = vunpack.c.l.b16 %v2495
      %v2970 = vunpack.c.h.b16 %v2495
      %v2971 = vunpack.c.l.b16 %v2496
      %v2972 = vunpack.c.h.b16 %v2496
      %v2973 = vunpack.c.l.b16 %v2497
      %v2974 = vunpack.c.h.b16 %v2497
      %v2975 = vunpack.c.l.b16 %v2498
      %v2976 = vunpack.c.h.b16 %v2498
      %v2977 = vunpack.c.l.b16 %v2499
      %v2978 = vunpack.c.h.b16 %v2499
      %v2979 = vunpack.c.l.b16 %v2500
      %v2980 = vunpack.c.h.b16 %v2500
      %v2981 = vunpack.c.l.b16 %v2501
      %v2982 = vunpack.c.h.b16 %v2501
      %v2983 = vunpack.c.l.b16 %v2502
      %v2984 = vunpack.c.h.b16 %v2502
      %v2985 = vunpack.c.l.b16 %v2503
      %v2986 = vunpack.c.h.b16 %v2503
      %v2987 = vunpack.c.l.b16 %v2504
      %v2988 = vunpack.c.h.b16 %v2504
      %v2989 = vunpack.c.l.b16 %v2505
      %v2990 = vunpack.c.h.b16 %v2505
      %v2991 = vunpack.c.l.b16 %v2506
      %v2992 = vunpack.c.h.b16 %v2506
      %v2993 = vunpack.c.l.b16 %v2507
      %v2994 = vunpack.c.h.b16 %v2507
      %v2995 = vunpack.c.l.b16 %v2508
      %v2996 = vunpack.c.h.b16 %v2508
      %v2997 = vunpack.c.l.b16 %v2509
      %v2998 = vunpack.c.h.b16 %v2509
      %v2999 = vunpack.c.l.b16 %v2510
      %v3000 = vunpack.c.h.b16 %v2510
      %v3001 = vunpack.c.l.b16 %v2511
      %v3002 = vunpack.c.h.b16 %v2511
      %v3003 = vunpack.c.l.b16 %v2512
      %v3004 = vunpack.c.h.b16 %v2512
      %v3005 = vunpack.c.l.b16 %v2513
      %v3006 = vunpack.c.h.b16 %v2513
      %v3007 = vunpack.c.l.b16 %v2514
      %v3008 = vunpack.c.h.b16 %v2514
      %v3009 = vunpack.c.l.b16 %v2515
      %v3010 = vunpack.c.h.b16 %v2515
      %v3011 = vunpack.c.l.b16 %v2516
      %v3012 = vunpack.c.h.b16 %v2516
      %v3013 = vunpack.c.l.b16 %v2517
      %v3014 = vunpack.c.h.b16 %v2517
      %v3015 = vunpack.c.l.b16 %v2518
      %v3016 = vunpack.c.h.b16 %v2518
      %v3017 = vunpack.c.l.b16 %v2519
      %v3018 = vunpack.c.h.b16 %v2519
      %v3019 = vunpack.c.l.b16 %v2520
      %v3020 = vunpack.c.h.b16 %v2520
      %v3021 = vunpack.c.l.b16 %v2521
      %v3022 = vunpack.c.h.b16 %v2521
      %v3023 = vunpack.c.l.b16 %v2522
      %v3024 = vunpack.c.h.b16 %v2522
      %v3025 = vunpack.c.l.b16 %v2523
      %v3026 = vunpack.c.h.b16 %v2523
      %v3027 = vunpack.c.l.b16 %v2524
      %v3028 = vunpack.c.h.b16 %v2524
      %v3029 = vunpack.c.l.b16 %v2525
      %v3030 = vunpack.c.h.b16 %v2525
      %v3031 = vunpack.c.l.b16 %v2526
      %v3032 = vunpack.c.h.b16 %v2526
      %v3033 = vunpack.c.l.b16 %v2527
      %v3034 = vunpack.c.h.b16 %v2527
      %v3035 = vunpack.c.l.b16 %v2528
      %v3036 = vunpack.c.h.b16 %v2528
      %v3037 = vunpack.c.l.b16 %v2529
      %v3038 = vunpack.c.h.b16 %v2529
      %v3039 = vunpack.c.l.b16 %v2530
      %v3040 = vunpack.c.h.b16 %v2530
      %v3041 = vunpack.c.l.b16 %v2531
      %v3042 = vunpack.c.h.b16 %v2531
      %v3043 = vunpack.c.l.b16 %v2532
      %v3044 = vunpack.c.h.b16 %v2532
      %v3045 = vunpack.c.l.b16 %v2533
      %v3046 = vunpack.c.h.b16 %v2533
      %v3047 = vunpack.c.l.b16 %v2534
      %v3048 = vunpack.c.h.b16 %v2534
      %v3049 = vunpack.c.l.b16 %v2535
      %v3050 = vunpack.c.h.b16 %v2535
      %v3051 = vunpack.c.l.b16 %v2536
      %v3052 = vunpack.c.h.b16 %v2536
      %v3053 = vpack.c.b16 %v2801, %v2797
      %v3054 = vpack.c.b16 %v2802, %v2798
      %v3055 = vpack.c.b16 %v2803, %v2799
      %v3056 = vpack.c.b16 %v2804, %v2800
      %v3057 = vpack.c.b16 %v2809, %v2805
      %v3058 = vpack.c.b16 %v2810, %v2806
      %v3059 = vpack.c.b16 %v2811, %v2807
      %v3060 = vpack.c.b16 %v2812, %v2808
      %v3061 = vpack.c.b16 %v2817, %v2813
      %v3062 = vpack.c.b16 %v2818, %v2814
      %v3063 = vpack.c.b16 %v2819, %v2815
      %v3064 = vpack.c.b16 %v2820, %v2816
      %v3065 = vpack.c.b16 %v2825, %v2821
      %v3066 = vpack.c.b16 %v2826, %v2822
      %v3067 = vpack.c.b16 %v2827, %v2823
      %v3068 = vpack.c.b16 %v2828, %v2824
      %v3069 = vpack.c.b16 %v2833, %v2829
      %v3070 = vpack.c.b16 %v2834, %v2830
      %v3071 = vpack.c.b16 %v2835, %v2831
      %v3072 = vpack.c.b16 %v2836, %v2832
      %v3073 = vpack.c.b16 %v2841, %v2837
      %v3074 = vpack.c.b16 %v2842, %v2838
      %v3075 = vpack.c.b16 %v2843, %v2839
      %v3076 = vpack.c.b16 %v2844, %v2840
      %v3077 = vpack.c.b16 %v2849, %v2845
      %v3078 = vpack.c.b16 %v2850, %v2846
      %v3079 = vpack.c.b16 %v2851, %v2847
      %v3080 = vpack.c.b16 %v2852, %v2848
      %v3081 = vpack.c.b16 %v2857, %v2853
      %v3082 = vpack.c.b16 %v2858, %v2854
      %v3083 = vpack.c.b16 %v2859, %v2855
      %v3084 = vpack.c.b16 %v2860, %v2856
      %v3085 = vpack.c.b16 %v2865, %v2861
      %v3086 = vpack.c.b16 %v2866, %v2862
      %v3087 = vpack.c.b16 %v2867, %v2863
      %v3088 = vpack.c.b16 %v2868, %v2864
      %v3089 = vpack.c.b16 %v2873, %v2869
      %v3090 = vpack.c.b16 %v2874, %v2870
      %v3091 = vpack.c.b16 %v2875, %v2871
      %v3092 = vpack.c.b16 %v2876, %v2872
      %v3093 = vpack.c.b16 %v2881, %v2877
      %v3094 = vpack.c.b16 %v2882, %v2878
      %v3095 = vpack.c.b16 %v2883, %v2879
      %v3096 = vpack.c.b16 %v2884, %v2880
      %v3097 = vpack.c.b16 %v2889, %v2885
      %v3098 = vpack.c.b16 %v2890, %v2886
      %v3099 = vpack.c.b16 %v2891, %v2887
      %v3100 = vpack.c.b16 %v2892, %v2888
      %v3101 = vpack.c.b16 %v2897, %v2893
      %v3102 = vpack.c.b16 %v2898, %v2894
      %v3103 = vpack.c.b16 %v2899, %v2895
      %v3104 = vpack.c.b16 %v2900, %v2896
      %v3105 = vpack.c.b16 %v2905, %v2901
      %v3106 = vpack.c.b16 %v2906, %v2902
      %v3107 = vpack.c.b16 %v2907, %v2903
      %v3108 = vpack.c.b16 %v2908, %v2904
      %v3109 = vpack.c.b16 %v2913, %v2909
      %v3110 = vpack.c.b16 %v2914, %v2910
      %v3111 = vpack.c.b16 %v2915, %v2911
      %v3112 = vpack.c.b16 %v2916, %v2912
      %v3113 = vpack.c.b16 %v2921, %v2917
      %v3114 = vpack.c.b16 %v2922, %v2918
      %v3115 = vpack.c.b16 %v2923, %v2919
      %v3116 = vpack.c.b16 %v2924, %v2920
      %v3117 = vpack.c.b16 %v2929, %v2925
      %v3118 = vpack.c.b16 %v2930, %v2926
      %v3119 = vpack.c.b16 %v2931, %v2927
      %v3120 = vpack.c.b16 %v2932, %v2928
      %v3121 = vpack.c.b16 %v2937, %v2933
      %v3122 = vpack.c.b16 %v2938, %v2934
      %v3123 = vpack.c.b16 %v2939, %v2935
      %v3124 = vpack.c.b16 %v2940, %v2936
      %v3125 = vpack.c.b16 %v2945, %v2941
      %v3126 = vpack.c.b16 %v2946, %v2942
      %v3127 = vpack.c.b16 %v2947, %v2943
      %v3128 = vpack.c.b16 %v2948, %v2944
      %v3129 = vpack.c.b16 %v2953, %v2949
      %v3130 = vpack.c.b16 %v2954, %v2950
      %v3131 = vpack.c.b16 %v2955, %v2951
      %v3132 = vpack.c.b16 %v2956, %v2952
      %v3133 = vpack.c.b16 %v2961, %v2957
      %v3134 = vpack.c.b16 %v2962, %v2958
      %v3135 = vpack.c.b16 %v2963, %v2959
      %v3136 = vpack.c.b16 %v2964, %v2960
      %v3137 = vpack.c.b16 %v2969, %v2965
      %v3138 = vpack.c.b16 %v2970, %v2966
      %v3139 = vpack.c.b16 %v2971, %v2967
      %v3140 = vpack.c.b16 %v2972, %v2968
      %v3141 = vpack.c.b16 %v2977, %v2973
      %v3142 = vpack.c.b16 %v2978, %v2974
      %v3143 = vpack.c.b16 %v2979, %v2975
      %v3144 = vpack.c.b16 %v2980, %v2976
      %v3145 = vpack.c.b16 %v2985, %v2981
      %v3146 = vpack.c.b16 %v2986, %v2982
      %v3147 = vpack.c.b16 %v2987, %v2983
      %v3148 = vpack.c.b16 %v2988, %v2984
      %v3149 = vpack.c.b16 %v2993, %v2989
      %v3150 = vpack.c.b16 %v2994, %v2990
      %v3151 = vpack.c.b16 %v2995, %v2991
      %v3152 = vpack.c.b16 %v2996, %v2992
      %v3153 = vpack.c.b16 %v3001, %v2997
      %v3154 = vpack.c.b16 %v3002, %v2998
      %v3155 = vpack.c.b16 %v3003, %v2999
      %v3156 = vpack.c.b16 %v3004, %v3000
      %v3157 = vpack.c.b16 %v3009, %v3005
      %v3158 = vpack.c.b16 %v3010, %v3006
      %v3159 = vpack.c.b16 %v3011, %v3007
      %v3160 = vpack.c.b16 %v3012, %v3008
      %v3161 = vpack.c.b16 %v3017, %v3013
      %v3162 = vpack.c.b16 %v3018, %v3014
      %v3163 = vpack.c.b16 %v3019, %v3015
      %v3164 = vpack.c.b16 %v3020, %v3016
      %v3165 = vpack.c.b16 %v3025, %v3021
      %v3166 = vpack.c.b16 %v3026, %v3022
      %v3167 = vpack.c.b16 %v3027, %v3023
      %v3168 = vpack.c.b16 %v3028, %v3024
      %v3169 = vpack.c.b16 %v3033, %v3029
      %v3170 = vpack.c.b16 %v3034, %v3030
      %v3171 = vpack.c.b16 %v3035, %v3031
      %v3172 = vpack.c.b16 %v3036, %v3032
      %v3173 = vpack.c.b16 %v3041, %v3037
      %v3174 = vpack.c.b16 %v3042, %v3038
      %v3175 = vpack.c.b16 %v3043, %v3039
      %v3176 = vpack.c.b16 %v3044, %v3040
      %v3177 = vpack.c.b16 %v3049, %v3045
      %v3178 = vpack.c.b16 %v3050, %v3046
      %v3179 = vpack.c.b16 %v3051, %v3047
      %v3180 = vpack.c.b16 %v3052, %v3048
      %v3373 = vunpack.c.l.b16 %v2605
      %v3374 = vunpack.c.l.b16 %v2606
      %v3375 = vunpack.c.l.b16 %v2607
      %v3376 = vunpack.c.l.b16 %v2608
      %v3377 = vunpack.c.l.b16 %v2609
      %v3378 = vunpack.c.l.b16 %v2610
      %v3379 = vunpack.c.l.b16 %v2611
      %v3380 = vunpack.c.l.b16 %v2612
      %v3381 = vunpack.c.l.b16 %v2613
      %v3382 = vunpack.c.l.b16 %v2614
      %v3383 = vunpack.c.l.b16 %v2615
      %v3384 = vunpack.c.l.b16 %v2616
      %v3385 = vunpack.c.l.b16 %v2617
      %v3386 = vunpack.c.l.b16 %v2618
      %v3387 = vunpack.c.l.b16 %v2619
      %v3388 = vunpack.c.l.b16 %v2620
      %v3389 = vunpack.c.l.b16 %v2621
      %v3390 = vunpack.c.l.b16 %v2622
      %v3391 = vunpack.c.l.b16 %v2623
      %v3392 = vunpack.c.l.b16 %v2624
      %v3393 = vunpack.c.l.b16 %v2625
      %v3394 = vunpack.c.l.b16 %v2626
      %v3395 = vunpack.c.l.b16 %v2627
      %v3396 = vunpack.c.l.b16 %v2628
      %v3397 = vunpack.c.l.b16 %v2629
      %v3398 = vunpack.c.l.b16 %v2630
      %v3399 = vunpack.c.l.b16 %v2631
      %v3400 = vunpack.c.l.b16 %v2632
      %v3401 = vunpack.c.l.b16 %v2633
      %v3402 = vunpack.c.l.b16 %v2634
      %v3403 = vunpack.c.l.b16 %v2635
      %v3404 = vunpack.c.l.b16 %v2636
      %v3405 = vunpack.c.l.b16 %v2637
      %v3406 = vunpack.c.l.b16 %v2638
      %v3407 = vunpack.c.l.b16 %v2639
      %v3408 = vunpack.c.l.b16 %v2640
      %v3409 = vunpack.c.l.b16 %v2641
      %v3410 = vunpack.c.l.b16 %v2642
      %v3411 = vunpack.c.l.b16 %v2643
      %v3412 = vunpack.c.l.b16 %v2644
      %v3413 = vunpack.c.l.b16 %v2645
      %v3414 = vunpack.c.l.b16 %v2646
      %v3415 = vunpack.c.l.b16 %v2647
      %v3416 = vunpack.c.l.b16 %v2648
      %v3417 = vunpack.c.l.b16 %v2649
      %v3418 = vunpack.c.l.b16 %v2650
      %v3419 = vunpack.c.l.b16 %v2651
      %v3420 = vunpack.c.l.b16 %v2652
      %v3421 = vunpack.c.l.b16 %v2653
      %v3422 = vunpack.c.l.b16 %v2654
      %v3423 = vunpack.c.l.b16 %v2655
      %v3424 = vunpack.c.l.b16 %v2656
      %v3425 = vunpack.c.l.b16 %v2657
      %v3426 = vunpack.c.l.b16 %v2658
      %v3427 = vunpack.c.l.b16 %v2659
      %v3428 = vunpack.c.l.b16 %v2660
      %v3429 = vunpack.c.l.b16 %v2661
      %v3430 = vunpack.c.l.b16 %v2662
      %v3431 = vunpack.c.l.b16 %v2663
      %v3432 = vunpack.c.l.b16 %v2664
      %v3433 = vunpack.c.l.b16 %v2665
      %v3434 = vunpack.c.l.b16 %v2666
      %v3435 = vunpack.c.l.b16 %v2667
      %v3436 = vunpack.c.l.b16 %v2668
      %v3437 = vpack.c.b16 %v3374, %v3373
      %v3438 = vpack.c.b16 %v3376, %v3375
      %v3439 = vpack.c.b16 %v3378, %v3377
      %v3440 = vpack.c.b16 %v3380, %v3379
      %v3441 = vpack.c.b16 %v3382, %v3381
      %v3442 = vpack.c.b16 %v3384, %v3383
      %v3443 = vpack.c.b16 %v3386, %v3385
      %v3444 = vpack.c.b16 %v3388, %v3387
      %v3445 = vpack.c.b16 %v3390, %v3389
      %v3446 = vpack.c.b16 %v3392, %v3391
      %v3447 = vpack.c.b16 %v3394, %v3393
      %v3448 = vpack.c.b16 %v3396, %v3395
      %v3449 = vpack.c.b16 %v3398, %v3397
      %v3450 = vpack.c.b16 %v3400, %v3399
      %v3451 = vpack.c.b16 %v3402, %v3401
      %v3452 = vpack.c.b16 %v3404, %v3403
      %v3453 = vpack.c.b16 %v3406, %v3405
      %v3454 = vpack.c.b16 %v3408, %v3407
      %v3455 = vpack.c.b16 %v3410, %v3409
      %v3456 = vpack.c.b16 %v3412, %v3411
      %v3457 = vpack.c.b16 %v3414, %v3413
      %v3458 = vpack.c.b16 %v3416, %v3415
      %v3459 = vpack.c.b16 %v3418, %v3417
      %v3460 = vpack.c.b16 %v3420, %v3419
      %v3461 = vpack.c.b16 %v3422, %v3421
      %v3462 = vpack.c.b16 %v3424, %v3423
      %v3463 = vpack.c.b16 %v3426, %v3425
      %v3464 = vpack.c.b16 %v3428, %v3427
      %v3465 = vpack.c.b16 %v3430, %v3429
      %v3466 = vpack.c.b16 %v3432, %v3431
      %v3467 = vpack.c.b16 %v3434, %v3433
      %v3468 = vpack.c.b16 %v3436, %v3435
      %3501 = vmatprep.subr.bf16.mxu0 0
      %3502 = vmatpush1.bf16.msra.mxu0 %v3444
      %3503 = vmatprep.subr.bf16.mxu0 0
      %3504 = vmatpush1.bf16.msra.mxu0 %v3443
      %3505 = vmatprep.subr.bf16.mxu0 0
      %3506 = vmatpush1.bf16.msra.mxu0 %v3442
      %3507 = vmatprep.subr.bf16.mxu0 0
      %3508 = vmatpush1.bf16.msra.mxu0 %v3441
      %3509 = vmatprep.subr.bf16.mxu0 0
      %3510 = vmatpush1.bf16.msra.mxu0 %v3440
      %3511 = vmatprep.subr.bf16.mxu0 0
      %3512 = vmatpush1.bf16.msra.mxu0 %v3439
      %3513 = vmatprep.subr.bf16.mxu0 0
      %3514 = vmatpush1.bf16.msra.mxu0 %v3438
      %3515 = vmatprep.subr.bf16.mxu0 0
      %3516 = vmatpush1.bf16.msra.mxu0 %v3437
      %3517 = vmatprep.subr.bf16.mxu0 0
      %3518 = vmatpush2.bf16.msra.mxu0 %v3452
      %3519 = vmatprep.subr.bf16.mxu0 0
      %3520 = vmatpush2.bf16.msra.mxu0 %v3451
      %3521 = vmatprep.subr.bf16.mxu0 0
      %3522 = vmatpush2.bf16.msra.mxu0 %v3450
      %3523 = vmatprep.subr.bf16.mxu0 0
      %3524 = vmatpush2.bf16.msra.mxu0 %v3449
      %3525 = vmatprep.subr.bf16.mxu0 0
      %3526 = vmatpush2.bf16.msra.mxu0 %v3448
      %3527 = vmatprep.subr.bf16.mxu0 0
      %3528 = vmatpush2.bf16.msra.mxu0 %v3447
      %3529 = vmatprep.subr.bf16.mxu0 0
      %3530 = vmatpush2.bf16.msra.mxu0 %v3446
      %3531 = vmatprep.subr.bf16.mxu0 0
      %3532 = vmatpush2.bf16.msra.mxu0 %v3445
      %3533 = vmatprep.mubr.bf16.mxu0 %v3054
      %3534 = vmatmul.mubr.bf16.gmra.mxu0 %v3053
      %v3535 = vpop.f32.mrf.mxu0
      %v3536 = vadd.f32 0.0, %v3535
      %v3537 = vpop.f32.mrf.mxu0
      %v3538 = vpop.f32.mrf.mxu0
      %v3539 = vadd.f32 0.0, %v3538
      %v3540 = vpop.f32.mrf.mxu0
      %3541 = vmatprep.mubr.bf16.mxu0 %v3058
      %3542 = vmatmul.mubr.bf16.gmra.mxu0 %v3057
      %v3543 = vpop.f32.mrf.mxu0
      %v3544 = vadd.f32 0.0, %v3543
      %v3545 = vpop.f32.mrf.mxu0
      %v3546 = vpop.f32.mrf.mxu0
      %v3547 = vadd.f32 0.0, %v3546
      %v3548 = vpop.f32.mrf.mxu0
      %3549 = vmatprep.mubr.bf16.mxu0 %v3062
      %3550 = vmatmul.mubr.bf16.gmra.mxu0 %v3061
      %v3551 = vpop.f32.mrf.mxu0
      %v3552 = vadd.f32 0.0, %v3551
      %v3553 = vpop.f32.mrf.mxu0
      %v3554 = vpop.f32.mrf.mxu0
      %v3555 = vadd.f32 0.0, %v3554
      %v3556 = vpop.f32.mrf.mxu0
      %3557 = vmatprep.mubr.bf16.mxu0 %v3066
      %3558 = vmatmul.mubr.bf16.gmra.mxu0 %v3065
      %v3559 = vpop.f32.mrf.mxu0
      %v3560 = vadd.f32 0.0, %v3559
      %v3561 = vpop.f32.mrf.mxu0
      %v3562 = vpop.f32.mrf.mxu0
      %v3563 = vadd.f32 0.0, %v3562
      %v3564 = vpop.f32.mrf.mxu0
      %3565 = vmatprep.mubr.bf16.mxu0 %v3070
      %3566 = vmatmul.mubr.bf16.gmra.mxu0 %v3069
      %v3567 = vpop.f32.mrf.mxu0
      %v3568 = vadd.f32 0.0, %v3567
      %v3569 = vpop.f32.mrf.mxu0
      %v3570 = vpop.f32.mrf.mxu0
      %v3571 = vadd.f32 0.0, %v3570
      %v3572 = vpop.f32.mrf.mxu0
      %3573 = vmatprep.mubr.bf16.mxu0 %v3074
      %3574 = vmatmul.mubr.bf16.gmra.mxu0 %v3073
      %v3575 = vpop.f32.mrf.mxu0
      %v3576 = vadd.f32 0.0, %v3575
      %v3577 = vpop.f32.mrf.mxu0
      %v3578 = vpop.f32.mrf.mxu0
      %v3579 = vadd.f32 0.0, %v3578
      %v3580 = vpop.f32.mrf.mxu0
      %3581 = vmatprep.mubr.bf16.mxu0 %v3078
      %3582 = vmatmul.mubr.bf16.gmra.mxu0 %v3077
      %v3583 = vpop.f32.mrf.mxu0
      %v3584 = vadd.f32 0.0, %v3583
      %v3585 = vpop.f32.mrf.mxu0
      %v3586 = vpop.f32.mrf.mxu0
      %v3587 = vadd.f32 0.0, %v3586
      %v3588 = vpop.f32.mrf.mxu0
      %3589 = vmatprep.mubr.bf16.mxu0 %v3082
      %3590 = vmatmul.mubr.bf16.gmra.mxu0 %v3081
      %v3591 = vpop.f32.mrf.mxu0
      %v3592 = vadd.f32 0.0, %v3591
      %v3593 = vpop.f32.mrf.mxu0
      %v3594 = vpop.f32.mrf.mxu0
      %v3595 = vadd.f32 0.0, %v3594
      %v3596 = vpop.f32.mrf.mxu0
      %3597 = vmatprep.mubr.bf16.mxu0 %v3086
      %3598 = vmatmul.mubr.bf16.gmra.mxu0 %v3085
      %v3599 = vpop.f32.mrf.mxu0
      %v3600 = vadd.f32 0.0, %v3599
      %v3601 = vpop.f32.mrf.mxu0
      %v3602 = vpop.f32.mrf.mxu0
      %v3603 = vadd.f32 0.0, %v3602
      %v3604 = vpop.f32.mrf.mxu0
      %3605 = vmatprep.mubr.bf16.mxu0 %v3090
      %3606 = vmatmul.mubr.bf16.gmra.mxu0 %v3089
      %v3607 = vpop.f32.mrf.mxu0
      %v3608 = vadd.f32 0.0, %v3607
      %v3609 = vpop.f32.mrf.mxu0
      %v3610 = vpop.f32.mrf.mxu0
      %v3611 = vadd.f32 0.0, %v3610
      %v3612 = vpop.f32.mrf.mxu0
      %3613 = vmatprep.mubr.bf16.mxu0 %v3094
      %3614 = vmatmul.mubr.bf16.gmra.mxu0 %v3093
      %v3615 = vpop.f32.mrf.mxu0
      %v3616 = vadd.f32 0.0, %v3615
      %v3617 = vpop.f32.mrf.mxu0
      %v3618 = vpop.f32.mrf.mxu0
      %v3619 = vadd.f32 0.0, %v3618
      %v3620 = vpop.f32.mrf.mxu0
      %3621 = vmatprep.mubr.bf16.mxu0 %v3098
      %3622 = vmatmul.mubr.bf16.gmra.mxu0 %v3097
      %v3623 = vpop.f32.mrf.mxu0
      %v3624 = vadd.f32 0.0, %v3623
      %v3625 = vpop.f32.mrf.mxu0
      %v3626 = vpop.f32.mrf.mxu0
      %v3627 = vadd.f32 0.0, %v3626
      %v3628 = vpop.f32.mrf.mxu0
      %3629 = vmatprep.mubr.bf16.mxu0 %v3102
      %3630 = vmatmul.mubr.bf16.gmra.mxu0 %v3101
      %v3631 = vpop.f32.mrf.mxu0
      %v3632 = vadd.f32 0.0, %v3631
      %v3633 = vpop.f32.mrf.mxu0
      %v3634 = vpop.f32.mrf.mxu0
      %v3635 = vadd.f32 0.0, %v3634
      %v3636 = vpop.f32.mrf.mxu0
      %3637 = vmatprep.mubr.bf16.mxu0 %v3106
      %3638 = vmatmul.mubr.bf16.gmra.mxu0 %v3105
      %v3639 = vpop.f32.mrf.mxu0
      %v3640 = vadd.f32 0.0, %v3639
      %v3641 = vpop.f32.mrf.mxu0
      %v3642 = vpop.f32.mrf.mxu0
      %v3643 = vadd.f32 0.0, %v3642
      %v3644 = vpop.f32.mrf.mxu0
      %3645 = vmatprep.mubr.bf16.mxu0 %v3110
      %3646 = vmatmul.mubr.bf16.gmra.mxu0 %v3109
      %v3647 = vpop.f32.mrf.mxu0
      %v3648 = vadd.f32 0.0, %v3647
      %v3649 = vpop.f32.mrf.mxu0
      %v3650 = vpop.f32.mrf.mxu0
      %v3651 = vadd.f32 0.0, %v3650
      %v3652 = vpop.f32.mrf.mxu0
      %3653 = vmatprep.mubr.bf16.mxu0 %v3114
      %3654 = vmatmul.mubr.bf16.gmra.mxu0 %v3113
      %v3655 = vpop.f32.mrf.mxu0
      %v3656 = vadd.f32 0.0, %v3655
      %v3657 = vpop.f32.mrf.mxu0
      %v3658 = vpop.f32.mrf.mxu0
      %v3659 = vadd.f32 0.0, %v3658
      %v3660 = vpop.f32.mrf.mxu0
      %3661 = vmatprep.mubr.bf16.mxu0 %v3118
      %3662 = vmatmul.mubr.bf16.gmra.mxu0 %v3117
      %v3663 = vpop.f32.mrf.mxu0
      %v3664 = vadd.f32 0.0, %v3663
      %v3665 = vpop.f32.mrf.mxu0
      %v3666 = vpop.f32.mrf.mxu0
      %v3667 = vadd.f32 0.0, %v3666
      %v3668 = vpop.f32.mrf.mxu0
      %3669 = vmatprep.mubr.bf16.mxu0 %v3122
      %3670 = vmatmul.mubr.bf16.gmra.mxu0 %v3121
      %v3671 = vpop.f32.mrf.mxu0
      %v3672 = vadd.f32 0.0, %v3671
      %v3673 = vpop.f32.mrf.mxu0
      %v3674 = vpop.f32.mrf.mxu0
      %v3675 = vadd.f32 0.0, %v3674
      %v3676 = vpop.f32.mrf.mxu0
      %3677 = vmatprep.mubr.bf16.mxu0 %v3126
      %3678 = vmatmul.mubr.bf16.gmra.mxu0 %v3125
      %v3679 = vpop.f32.mrf.mxu0
      %v3680 = vadd.f32 0.0, %v3679
      %v3681 = vpop.f32.mrf.mxu0
      %v3682 = vpop.f32.mrf.mxu0
      %v3683 = vadd.f32 0.0, %v3682
      %v3684 = vpop.f32.mrf.mxu0
      %3685 = vmatprep.mubr.bf16.mxu0 %v3130
      %3686 = vmatmul.mubr.bf16.gmra.mxu0 %v3129
      %v3687 = vpop.f32.mrf.mxu0
      %v3688 = vadd.f32 0.0, %v3687
      %v3689 = vpop.f32.mrf.mxu0
      %v3690 = vpop.f32.mrf.mxu0
      %v3691 = vadd.f32 0.0, %v3690
      %v3692 = vpop.f32.mrf.mxu0
      %3693 = vmatprep.mubr.bf16.mxu0 %v3134
      %3694 = vmatmul.mubr.bf16.gmra.mxu0 %v3133
      %v3695 = vpop.f32.mrf.mxu0
      %v3696 = vadd.f32 0.0, %v3695
      %v3697 = vpop.f32.mrf.mxu0
      %v3698 = vpop.f32.mrf.mxu0
      %v3699 = vadd.f32 0.0, %v3698
      %v3700 = vpop.f32.mrf.mxu0
      %3701 = vmatprep.mubr.bf16.mxu0 %v3138
      %3702 = vmatmul.mubr.bf16.gmra.mxu0 %v3137
      %v3703 = vpop.f32.mrf.mxu0
      %v3704 = vadd.f32 0.0, %v3703
      %v3705 = vpop.f32.mrf.mxu0
      %v3706 = vpop.f32.mrf.mxu0
      %v3707 = vadd.f32 0.0, %v3706
      %v3708 = vpop.f32.mrf.mxu0
      %3709 = vmatprep.mubr.bf16.mxu0 %v3142
      %3710 = vmatmul.mubr.bf16.gmra.mxu0 %v3141
      %v3711 = vpop.f32.mrf.mxu0
      %v3712 = vadd.f32 0.0, %v3711
      %v3713 = vpop.f32.mrf.mxu0
      %v3714 = vpop.f32.mrf.mxu0
      %v3715 = vadd.f32 0.0, %v3714
      %v3716 = vpop.f32.mrf.mxu0
      %3717 = vmatprep.mubr.bf16.mxu0 %v3146
      %3718 = vmatmul.mubr.bf16.gmra.mxu0 %v3145
      %v3719 = vpop.f32.mrf.mxu0
      %v3720 = vadd.f32 0.0, %v3719
      %v3721 = vpop.f32.mrf.mxu0
      %v3722 = vpop.f32.mrf.mxu0
      %v3723 = vadd.f32 0.0, %v3722
      %v3724 = vpop.f32.mrf.mxu0
      %3725 = vmatprep.mubr.bf16.mxu0 %v3150
      %3726 = vmatmul.mubr.bf16.gmra.mxu0 %v3149
      %v3727 = vpop.f32.mrf.mxu0
      %v3728 = vadd.f32 0.0, %v3727
      %v3729 = vpop.f32.mrf.mxu0
      %v3730 = vpop.f32.mrf.mxu0
      %v3731 = vadd.f32 0.0, %v3730
      %v3732 = vpop.f32.mrf.mxu0
      %3733 = vmatprep.mubr.bf16.mxu0 %v3154
      %3734 = vmatmul.mubr.bf16.gmra.mxu0 %v3153
      %v3735 = vpop.f32.mrf.mxu0
      %v3736 = vadd.f32 0.0, %v3735
      %v3737 = vpop.f32.mrf.mxu0
      %v3738 = vpop.f32.mrf.mxu0
      %v3739 = vadd.f32 0.0, %v3738
      %v3740 = vpop.f32.mrf.mxu0
      %3741 = vmatprep.mubr.bf16.mxu0 %v3158
      %3742 = vmatmul.mubr.bf16.gmra.mxu0 %v3157
      %v3743 = vpop.f32.mrf.mxu0
      %v3744 = vadd.f32 0.0, %v3743
      %v3745 = vpop.f32.mrf.mxu0
      %v3746 = vpop.f32.mrf.mxu0
      %v3747 = vadd.f32 0.0, %v3746
      %v3748 = vpop.f32.mrf.mxu0
      %3749 = vmatprep.mubr.bf16.mxu0 %v3162
      %3750 = vmatmul.mubr.bf16.gmra.mxu0 %v3161
      %v3751 = vpop.f32.mrf.mxu0
      %v3752 = vadd.f32 0.0, %v3751
      %v3753 = vpop.f32.mrf.mxu0
      %v3754 = vpop.f32.mrf.mxu0
      %v3755 = vadd.f32 0.0, %v3754
      %v3756 = vpop.f32.mrf.mxu0
      %3757 = vmatprep.mubr.bf16.mxu0 %v3166
      %3758 = vmatmul.mubr.bf16.gmra.mxu0 %v3165
      %v3759 = vpop.f32.mrf.mxu0
      %v3760 = vadd.f32 0.0, %v3759
      %v3761 = vpop.f32.mrf.mxu0
      %v3762 = vpop.f32.mrf.mxu0
      %v3763 = vadd.f32 0.0, %v3762
      %v3764 = vpop.f32.mrf.mxu0
      %3765 = vmatprep.mubr.bf16.mxu0 %v3170
      %3766 = vmatmul.mubr.bf16.gmra.mxu0 %v3169
      %v3767 = vpop.f32.mrf.mxu0
      %v3768 = vadd.f32 0.0, %v3767
      %v3769 = vpop.f32.mrf.mxu0
      %v3770 = vpop.f32.mrf.mxu0
      %v3771 = vadd.f32 0.0, %v3770
      %v3772 = vpop.f32.mrf.mxu0
      %3773 = vmatprep.mubr.bf16.mxu0 %v3174
      %3774 = vmatmul.mubr.bf16.gmra.mxu0 %v3173
      %v3775 = vpop.f32.mrf.mxu0
      %v3776 = vadd.f32 0.0, %v3775
      %v3777 = vpop.f32.mrf.mxu0
      %v3778 = vpop.f32.mrf.mxu0
      %v3779 = vadd.f32 0.0, %v3778
      %v3780 = vpop.f32.mrf.mxu0
      %3781 = vmatprep.mubr.bf16.mxu0 %v3178
      %3782 = vmatmul.mubr.bf16.gmra.mxu0 %v3177
      %v3783 = vpop.f32.mrf.mxu0
      %v3784 = vadd.f32 0.0, %v3783
      %v3785 = vpop.f32.mrf.mxu0
      %v3786 = vpop.f32.mrf.mxu0
      %v3787 = vadd.f32 0.0, %v3786
      %v3788 = vpop.f32.mrf.mxu0
      %3789 = vdwg.mxu0
      %3790 = vmatprep.subr.bf16.mxu0 0
      %3791 = vmatpush1.bf16.msra.mxu0 %v3460
      %3792 = vmatprep.subr.bf16.mxu0 0
      %3793 = vmatpush1.bf16.msra.mxu0 %v3459
      %3794 = vmatprep.subr.bf16.mxu0 0
      %3795 = vmatpush1.bf16.msra.mxu0 %v3458
      %3796 = vmatprep.subr.bf16.mxu0 0
      %3797 = vmatpush1.bf16.msra.mxu0 %v3457
      %3798 = vmatprep.subr.bf16.mxu0 0
      %3799 = vmatpush1.bf16.msra.mxu0 %v3456
      %3800 = vmatprep.subr.bf16.mxu0 0
      %3801 = vmatpush1.bf16.msra.mxu0 %v3455
      %3802 = vmatprep.subr.bf16.mxu0 0
      %3803 = vmatpush1.bf16.msra.mxu0 %v3454
      %3804 = vmatprep.subr.bf16.mxu0 0
      %3805 = vmatpush1.bf16.msra.mxu0 %v3453
      %3806 = vmatprep.subr.bf16.mxu0 0
      %3807 = vmatpush2.bf16.msra.mxu0 %v3468
      %3808 = vmatprep.subr.bf16.mxu0 0
      %3809 = vmatpush2.bf16.msra.mxu0 %v3467
      %3810 = vmatprep.subr.bf16.mxu0 0
      %3811 = vmatpush2.bf16.msra.mxu0 %v3466
      %3812 = vmatprep.subr.bf16.mxu0 0
      %3813 = vmatpush2.bf16.msra.mxu0 %v3465
      %3814 = vmatprep.subr.bf16.mxu0 0
      %3815 = vmatpush2.bf16.msra.mxu0 %v3464
      %3816 = vmatprep.subr.bf16.mxu0 0
      %3817 = vmatpush2.bf16.msra.mxu0 %v3463
      %3818 = vmatprep.subr.bf16.mxu0 0
      %3819 = vmatpush2.bf16.msra.mxu0 %v3462
      %3820 = vmatprep.subr.bf16.mxu0 0
      %3821 = vmatpush2.bf16.msra.mxu0 %v3461
      %3822 = vmatprep.mubr.bf16.mxu0 %v3056
      %3823 = vmatmul.mubr.bf16.gmra.mxu0 %v3055
      %v3824 = vpop.f32.mrf.mxu0
      %v3825 = vadd.f32 %v3536, %v3824
      %v3826 = vpop.f32.mrf.mxu0
      %v3827 = vpop.f32.mrf.mxu0
      %v3828 = vadd.f32 %v3539, %v3827
      %v3829 = vpop.f32.mrf.mxu0
      %3830 = vmatprep.mubr.bf16.mxu0 %v3060
      %3831 = vmatmul.mubr.bf16.gmra.mxu0 %v3059
      %v3832 = vpop.f32.mrf.mxu0
      %v3833 = vadd.f32 %v3544, %v3832
      %v3834 = vpop.f32.mrf.mxu0
      %v3835 = vpop.f32.mrf.mxu0
      %v3836 = vadd.f32 %v3547, %v3835
      %v3837 = vpop.f32.mrf.mxu0
      %3838 = vmatprep.mubr.bf16.mxu0 %v3064
      %3839 = vmatmul.mubr.bf16.gmra.mxu0 %v3063
      %v3840 = vpop.f32.mrf.mxu0
      %v3841 = vadd.f32 %v3552, %v3840
      %v3842 = vpop.f32.mrf.mxu0
      %v3843 = vpop.f32.mrf.mxu0
      %v3844 = vadd.f32 %v3555, %v3843
      %v3845 = vpop.f32.mrf.mxu0
      %3846 = vmatprep.mubr.bf16.mxu0 %v3068
      %3847 = vmatmul.mubr.bf16.gmra.mxu0 %v3067
      %v3848 = vpop.f32.mrf.mxu0
      %v3849 = vadd.f32 %v3560, %v3848
      %v3850 = vpop.f32.mrf.mxu0
      %v3851 = vpop.f32.mrf.mxu0
      %v3852 = vadd.f32 %v3563, %v3851
      %v3853 = vpop.f32.mrf.mxu0
      %3854 = vmatprep.mubr.bf16.mxu0 %v3072
      %3855 = vmatmul.mubr.bf16.gmra.mxu0 %v3071
      %v3856 = vpop.f32.mrf.mxu0
      %v3857 = vadd.f32 %v3568, %v3856
      %v3858 = vpop.f32.mrf.mxu0
      %v3859 = vpop.f32.mrf.mxu0
      %v3860 = vadd.f32 %v3571, %v3859
      %v3861 = vpop.f32.mrf.mxu0
      %3862 = vmatprep.mubr.bf16.mxu0 %v3076
      %3863 = vmatmul.mubr.bf16.gmra.mxu0 %v3075
      %v3864 = vpop.f32.mrf.mxu0
      %v3865 = vadd.f32 %v3576, %v3864
      %v3866 = vpop.f32.mrf.mxu0
      %v3867 = vpop.f32.mrf.mxu0
      %v3868 = vadd.f32 %v3579, %v3867
      %v3869 = vpop.f32.mrf.mxu0
      %3870 = vmatprep.mubr.bf16.mxu0 %v3080
      %3871 = vmatmul.mubr.bf16.gmra.mxu0 %v3079
      %v3872 = vpop.f32.mrf.mxu0
      %v3873 = vadd.f32 %v3584, %v3872
      %v3874 = vpop.f32.mrf.mxu0
      %v3875 = vpop.f32.mrf.mxu0
      %v3876 = vadd.f32 %v3587, %v3875
      %v3877 = vpop.f32.mrf.mxu0
      %3878 = vmatprep.mubr.bf16.mxu0 %v3084
      %3879 = vmatmul.mubr.bf16.gmra.mxu0 %v3083
      %v3880 = vpop.f32.mrf.mxu0
      %v3881 = vadd.f32 %v3592, %v3880
      %v3882 = vpop.f32.mrf.mxu0
      %v3883 = vpop.f32.mrf.mxu0
      %v3884 = vadd.f32 %v3595, %v3883
      %v3885 = vpop.f32.mrf.mxu0
      %3886 = vmatprep.mubr.bf16.mxu0 %v3088
      %3887 = vmatmul.mubr.bf16.gmra.mxu0 %v3087
      %v3888 = vpop.f32.mrf.mxu0
      %v3889 = vadd.f32 %v3600, %v3888
      %v3890 = vpop.f32.mrf.mxu0
      %v3891 = vpop.f32.mrf.mxu0
      %v3892 = vadd.f32 %v3603, %v3891
      %v3893 = vpop.f32.mrf.mxu0
      %3894 = vmatprep.mubr.bf16.mxu0 %v3092
      %3895 = vmatmul.mubr.bf16.gmra.mxu0 %v3091
      %v3896 = vpop.f32.mrf.mxu0
      %v3897 = vadd.f32 %v3608, %v3896
      %v3898 = vpop.f32.mrf.mxu0
      %v3899 = vpop.f32.mrf.mxu0
      %v3900 = vadd.f32 %v3611, %v3899
      %v3901 = vpop.f32.mrf.mxu0
      %3902 = vmatprep.mubr.bf16.mxu0 %v3096
      %3903 = vmatmul.mubr.bf16.gmra.mxu0 %v3095
      %v3904 = vpop.f32.mrf.mxu0
      %v3905 = vadd.f32 %v3616, %v3904
      %v3906 = vpop.f32.mrf.mxu0
      %v3907 = vpop.f32.mrf.mxu0
      %v3908 = vadd.f32 %v3619, %v3907
      %v3909 = vpop.f32.mrf.mxu0
      %3910 = vmatprep.mubr.bf16.mxu0 %v3100
      %3911 = vmatmul.mubr.bf16.gmra.mxu0 %v3099
      %v3912 = vpop.f32.mrf.mxu0
      %v3913 = vadd.f32 %v3624, %v3912
      %v3914 = vpop.f32.mrf.mxu0
      %v3915 = vpop.f32.mrf.mxu0
      %v3916 = vadd.f32 %v3627, %v3915
      %v3917 = vpop.f32.mrf.mxu0
      %3918 = vmatprep.mubr.bf16.mxu0 %v3104
      %3919 = vmatmul.mubr.bf16.gmra.mxu0 %v3103
      %v3920 = vpop.f32.mrf.mxu0
      %v3921 = vadd.f32 %v3632, %v3920
      %v3922 = vpop.f32.mrf.mxu0
      %v3923 = vpop.f32.mrf.mxu0
      %v3924 = vadd.f32 %v3635, %v3923
      %v3925 = vpop.f32.mrf.mxu0
      %3926 = vmatprep.mubr.bf16.mxu0 %v3108
      %3927 = vmatmul.mubr.bf16.gmra.mxu0 %v3107
      %v3928 = vpop.f32.mrf.mxu0
      %v3929 = vadd.f32 %v3640, %v3928
      %v3930 = vpop.f32.mrf.mxu0
      %v3931 = vpop.f32.mrf.mxu0
      %v3932 = vadd.f32 %v3643, %v3931
      %v3933 = vpop.f32.mrf.mxu0
      %3934 = vmatprep.mubr.bf16.mxu0 %v3112
      %3935 = vmatmul.mubr.bf16.gmra.mxu0 %v3111
      %v3936 = vpop.f32.mrf.mxu0
      %v3937 = vadd.f32 %v3648, %v3936
      %v3938 = vpop.f32.mrf.mxu0
      %v3939 = vpop.f32.mrf.mxu0
      %v3940 = vadd.f32 %v3651, %v3939
      %v3941 = vpop.f32.mrf.mxu0
      %3942 = vmatprep.mubr.bf16.mxu0 %v3116
      %3943 = vmatmul.mubr.bf16.gmra.mxu0 %v3115
      %v3944 = vpop.f32.mrf.mxu0
      %v3945 = vadd.f32 %v3656, %v3944
      %v3946 = vpop.f32.mrf.mxu0
      %v3947 = vpop.f32.mrf.mxu0
      %v3948 = vadd.f32 %v3659, %v3947
      %v3949 = vpop.f32.mrf.mxu0
      %3950 = vmatprep.mubr.bf16.mxu0 %v3120
      %3951 = vmatmul.mubr.bf16.gmra.mxu0 %v3119
      %v3952 = vpop.f32.mrf.mxu0
      %v3953 = vadd.f32 %v3664, %v3952
      %v3954 = vpop.f32.mrf.mxu0
      %v3955 = vpop.f32.mrf.mxu0
      %v3956 = vadd.f32 %v3667, %v3955
      %v3957 = vpop.f32.mrf.mxu0
      %3958 = vmatprep.mubr.bf16.mxu0 %v3124
      %3959 = vmatmul.mubr.bf16.gmra.mxu0 %v3123
      %v3960 = vpop.f32.mrf.mxu0
      %v3961 = vadd.f32 %v3672, %v3960
      %v3962 = vpop.f32.mrf.mxu0
      %v3963 = vpop.f32.mrf.mxu0
      %v3964 = vadd.f32 %v3675, %v3963
      %v3965 = vpop.f32.mrf.mxu0
      %3966 = vmatprep.mubr.bf16.mxu0 %v3128
      %3967 = vmatmul.mubr.bf16.gmra.mxu0 %v3127
      %v3968 = vpop.f32.mrf.mxu0
      %v3969 = vadd.f32 %v3680, %v3968
      %v3970 = vpop.f32.mrf.mxu0
      %v3971 = vpop.f32.mrf.mxu0
      %v3972 = vadd.f32 %v3683, %v3971
      %v3973 = vpop.f32.mrf.mxu0
      %3974 = vmatprep.mubr.bf16.mxu0 %v3132
      %3975 = vmatmul.mubr.bf16.gmra.mxu0 %v3131
      %v3976 = vpop.f32.mrf.mxu0
      %v3977 = vadd.f32 %v3688, %v3976
      %v3978 = vpop.f32.mrf.mxu0
      %v3979 = vpop.f32.mrf.mxu0
      %v3980 = vadd.f32 %v3691, %v3979
      %v3981 = vpop.f32.mrf.mxu0
      %3982 = vmatprep.mubr.bf16.mxu0 %v3136
      %3983 = vmatmul.mubr.bf16.gmra.mxu0 %v3135
      %v3984 = vpop.f32.mrf.mxu0
      %v3985 = vadd.f32 %v3696, %v3984
      %v3986 = vpop.f32.mrf.mxu0
      %v3987 = vpop.f32.mrf.mxu0
      %v3988 = vadd.f32 %v3699, %v3987
      %v3989 = vpop.f32.mrf.mxu0
      %3990 = vmatprep.mubr.bf16.mxu0 %v3140
      %3991 = vmatmul.mubr.bf16.gmra.mxu0 %v3139
      %v3992 = vpop.f32.mrf.mxu0
      %v3993 = vadd.f32 %v3704, %v3992
      %v3994 = vpop.f32.mrf.mxu0
      %v3995 = vpop.f32.mrf.mxu0
      %v3996 = vadd.f32 %v3707, %v3995
      %v3997 = vpop.f32.mrf.mxu0
      %3998 = vmatprep.mubr.bf16.mxu0 %v3144
      %3999 = vmatmul.mubr.bf16.gmra.mxu0 %v3143
      %v4000 = vpop.f32.mrf.mxu0
      %v4001 = vadd.f32 %v3712, %v4000
      %v4002 = vpop.f32.mrf.mxu0
      %v4003 = vpop.f32.mrf.mxu0
      %v4004 = vadd.f32 %v3715, %v4003
      %v4005 = vpop.f32.mrf.mxu0
      %4006 = vmatprep.mubr.bf16.mxu0 %v3148
      %4007 = vmatmul.mubr.bf16.gmra.mxu0 %v3147
      %v4008 = vpop.f32.mrf.mxu0
      %v4009 = vadd.f32 %v3720, %v4008
      %v4010 = vpop.f32.mrf.mxu0
      %v4011 = vpop.f32.mrf.mxu0
      %v4012 = vadd.f32 %v3723, %v4011
      %v4013 = vpop.f32.mrf.mxu0
      %4014 = vmatprep.mubr.bf16.mxu0 %v3152
      %4015 = vmatmul.mubr.bf16.gmra.mxu0 %v3151
      %v4016 = vpop.f32.mrf.mxu0
      %v4017 = vadd.f32 %v3728, %v4016
      %v4018 = vpop.f32.mrf.mxu0
      %v4019 = vpop.f32.mrf.mxu0
      %v4020 = vadd.f32 %v3731, %v4019
      %v4021 = vpop.f32.mrf.mxu0
      %4022 = vmatprep.mubr.bf16.mxu0 %v3156
      %4023 = vmatmul.mubr.bf16.gmra.mxu0 %v3155
      %v4024 = vpop.f32.mrf.mxu0
      %v4025 = vadd.f32 %v3736, %v4024
      %v4026 = vpop.f32.mrf.mxu0
      %v4027 = vpop.f32.mrf.mxu0
      %v4028 = vadd.f32 %v3739, %v4027
      %v4029 = vpop.f32.mrf.mxu0
      %4030 = vmatprep.mubr.bf16.mxu0 %v3160
      %4031 = vmatmul.mubr.bf16.gmra.mxu0 %v3159
      %v4032 = vpop.f32.mrf.mxu0
      %v4033 = vadd.f32 %v3744, %v4032
      %v4034 = vpop.f32.mrf.mxu0
      %v4035 = vpop.f32.mrf.mxu0
      %v4036 = vadd.f32 %v3747, %v4035
      %v4037 = vpop.f32.mrf.mxu0
      %4038 = vmatprep.mubr.bf16.mxu0 %v3164
      %4039 = vmatmul.mubr.bf16.gmra.mxu0 %v3163
      %v4040 = vpop.f32.mrf.mxu0
      %v4041 = vadd.f32 %v3752, %v4040
      %v4042 = vpop.f32.mrf.mxu0
      %v4043 = vpop.f32.mrf.mxu0
      %v4044 = vadd.f32 %v3755, %v4043
      %v4045 = vpop.f32.mrf.mxu0
      %4046 = vmatprep.mubr.bf16.mxu0 %v3168
      %4047 = vmatmul.mubr.bf16.gmra.mxu0 %v3167
      %v4048 = vpop.f32.mrf.mxu0
      %v4049 = vadd.f32 %v3760, %v4048
      %v4050 = vpop.f32.mrf.mxu0
      %v4051 = vpop.f32.mrf.mxu0
      %v4052 = vadd.f32 %v3763, %v4051
      %v4053 = vpop.f32.mrf.mxu0
      %4054 = vmatprep.mubr.bf16.mxu0 %v3172
      %4055 = vmatmul.mubr.bf16.gmra.mxu0 %v3171
      %v4056 = vpop.f32.mrf.mxu0
      %v4057 = vadd.f32 %v3768, %v4056
      %v4058 = vpop.f32.mrf.mxu0
      %v4059 = vpop.f32.mrf.mxu0
      %v4060 = vadd.f32 %v3771, %v4059
      %v4061 = vpop.f32.mrf.mxu0
      %4062 = vmatprep.mubr.bf16.mxu0 %v3176
      %4063 = vmatmul.mubr.bf16.gmra.mxu0 %v3175
      %v4064 = vpop.f32.mrf.mxu0
      %v4065 = vadd.f32 %v3776, %v4064
      %v4066 = vpop.f32.mrf.mxu0
      %v4067 = vpop.f32.mrf.mxu0
      %v4068 = vadd.f32 %v3779, %v4067
      %v4069 = vpop.f32.mrf.mxu0
      %4070 = vmatprep.mubr.bf16.mxu0 %v3180
      %4071 = vmatmul.mubr.bf16.gmra.mxu0 %v3179
      %v4072 = vpop.f32.mrf.mxu0
      %v4073 = vadd.f32 %v3784, %v4072
      %v4074 = vpop.f32.mrf.mxu0
      %v4075 = vpop.f32.mrf.mxu0
      %v4076 = vadd.f32 %v3787, %v4075
      %v4077 = vpop.f32.mrf.mxu0
      %4078 = vdwg.mxu0
      %v4079 = vadd.f32 %v2537, %v3825
      %v4080 = vadd.f32 %v2538, %v3828
      %v4081 = vadd.f32 %v2539, %v3833
      %v4082 = vadd.f32 %v2540, %v3836
      %v4083 = vadd.f32 %v2541, %v3841
      %v4084 = vadd.f32 %v2542, %v3844
      %v4085 = vadd.f32 %v2543, %v3849
      %v4086 = vadd.f32 %v2544, %v3852
      %v4087 = vadd.f32 %v2545, %v3857
      %v4088 = vadd.f32 %v2546, %v3860
      %v4089 = vadd.f32 %v2547, %v3865
      %v4090 = vadd.f32 %v2548, %v3868
      %v4091 = vadd.f32 %v2549, %v3873
      %v4092 = vadd.f32 %v2550, %v3876
      %v4093 = vadd.f32 %v2551, %v3881
      %v4094 = vadd.f32 %v2552, %v3884
      %v4095 = vadd.f32 %v2553, %v3889
      %v4096 = vadd.f32 %v2554, %v3892
      %v4097 = vadd.f32 %v2555, %v3897
      %v4098 = vadd.f32 %v2556, %v3900
      %v4099 = vadd.f32 %v2557, %v3905
      %v4100 = vadd.f32 %v2558, %v3908
      %v4101 = vadd.f32 %v2559, %v3913
      %v4102 = vadd.f32 %v2560, %v3916
      %v4103 = vadd.f32 %v2561, %v3921
      %v4104 = vadd.f32 %v2562, %v3924
      %v4105 = vadd.f32 %v2563, %v3929
      %v4106 = vadd.f32 %v2564, %v3932
      %v4107 = vadd.f32 %v2565, %v3937
      %v4108 = vadd.f32 %v2566, %v3940
      %v4109 = vadd.f32 %v2567, %v3945
      %v4110 = vadd.f32 %v2568, %v3948
      %v4111 = vadd.f32 %v2569, %v3953
      %v4112 = vadd.f32 %v2570, %v3956
      %v4113 = vadd.f32 %v2571, %v3961
      %v4114 = vadd.f32 %v2572, %v3964
      %v4115 = vadd.f32 %v2573, %v3969
      %v4116 = vadd.f32 %v2574, %v3972
      %v4117 = vadd.f32 %v2575, %v3977
      %v4118 = vadd.f32 %v2576, %v3980
      %v4119 = vadd.f32 %v2577, %v3985
      %v4120 = vadd.f32 %v2578, %v3988
      %v4121 = vadd.f32 %v2579, %v3993
      %v4122 = vadd.f32 %v2580, %v3996
      %v4123 = vadd.f32 %v2581, %v4001
      %v4124 = vadd.f32 %v2582, %v4004
      %v4125 = vadd.f32 %v2583, %v4009
      %v4126 = vadd.f32 %v2584, %v4012
      %v4127 = vadd.f32 %v2585, %v4017
      %v4128 = vadd.f32 %v2586, %v4020
      %v4129 = vadd.f32 %v2587, %v4025
      %v4130 = vadd.f32 %v2588, %v4028
      %v4131 = vadd.f32 %v2589, %v4033
      %v4132 = vadd.f32 %v2590, %v4036
      %v4133 = vadd.f32 %v2591, %v4041
      %v4134 = vadd.f32 %v2592, %v4044
      %v4135 = vadd.f32 %v2593, %v4049
      %v4136 = vadd.f32 %v2594, %v4052
      %v4137 = vadd.f32 %v2595, %v4057
      %v4138 = vadd.f32 %v2596, %v4060
      %v4139 = vadd.f32 %v2597, %v4065
      %v4140 = vadd.f32 %v2598, %v4068
      %v4141 = vadd.f32 %v2599, %v4073
      %v4142 = vadd.f32 %v2600, %v4076
      %4143 = vst [vmem:[#allocation5] sm:$0xff] %v4079
      %4144 = vst [vmem:[#allocation5 + $0x8] sm:$0xff] %v4080
      %4145 = vst [vmem:[#allocation5 + $0x10] sm:$0xff] %v4081
      %4146 = vst [vmem:[#allocation5 + $0x18] sm:$0xff] %v4082
      %4147 = vst [vmem:[#allocation5 + $0x20] sm:$0xff] %v4083
      %4148 = vst [vmem:[#allocation5 + $0x28] sm:$0xff] %v4084
      %4149 = vst [vmem:[#allocation5 + $0x30] sm:$0xff] %v4085
      %4150 = vst [vmem:[#allocation5 + $0x38] sm:$0xff] %v4086
      %4151 = vst [vmem:[#allocation5 + $0x40] sm:$0xff] %v4087
      %4152 = vst [vmem:[#allocation5 + $0x48] sm:$0xff] %v4088
      %4153 = vst [vmem:[#allocation5 + $0x50] sm:$0xff] %v4089
      %4154 = vst [vmem:[#allocation5 + $0x58] sm:$0xff] %v4090
      %4155 = vst [vmem:[#allocation5 + $0x60] sm:$0xff] %v4091
      %4156 = vst [vmem:[#allocation5 + $0x68] sm:$0xff] %v4092
      %4157 = vst [vmem:[#allocation5 + $0x70] sm:$0xff] %v4093
      %4158 = vst [vmem:[#allocation5 + $0x78] sm:$0xff] %v4094
      %4159 = vst [vmem:[#allocation5 + $0x80] sm:$0xff] %v4095
      %4160 = vst [vmem:[#allocation5 + $0x88] sm:$0xff] %v4096
      %4161 = vst [vmem:[#allocation5 + $0x90] sm:$0xff] %v4097
      %4162 = vst [vmem:[#allocation5 + $0x98] sm:$0xff] %v4098
      %4163 = vst [vmem:[#allocation5 + $0xa0] sm:$0xff] %v4099
      %4164 = vst [vmem:[#allocation5 + $0xa8] sm:$0xff] %v4100
      %4165 = vst [vmem:[#allocation5 + $0xb0] sm:$0xff] %v4101
      %4166 = vst [vmem:[#allocation5 + $0xb8] sm:$0xff] %v4102
      %4167 = vst [vmem:[#allocation5 + $0xc0] sm:$0xff] %v4103
      %4168 = vst [vmem:[#allocation5 + $0xc8] sm:$0xff] %v4104
      %4169 = vst [vmem:[#allocation5 + $0xd0] sm:$0xff] %v4105
      %4170 = vst [vmem:[#allocation5 + $0xd8] sm:$0xff] %v4106
      %4171 = vst [vmem:[#allocation5 + $0xe0] sm:$0xff] %v4107
      %4172 = vst [vmem:[#allocation5 + $0xe8] sm:$0xff] %v4108
      %4173 = vst [vmem:[#allocation5 + $0xf0] sm:$0xff] %v4109
      %4174 = vst [vmem:[#allocation5 + $0xf8] sm:$0xff] %v4110
      %4175 = vst [vmem:[#allocation5 + $0x100] sm:$0xff] %v4111
      %4176 = vst [vmem:[#allocation5 + $0x108] sm:$0xff] %v4112
      %4177 = vst [vmem:[#allocation5 + $0x110] sm:$0xff] %v4113
      %4178 = vst [vmem:[#allocation5 + $0x118] sm:$0xff] %v4114
      %4179 = vst [vmem:[#allocation5 + $0x120] sm:$0xff] %v4115
      %4180 = vst [vmem:[#allocation5 + $0x128] sm:$0xff] %v4116
      %4181 = vst [vmem:[#allocation5 + $0x130] sm:$0xff] %v4117
      %4182 = vst [vmem:[#allocation5 + $0x138] sm:$0xff] %v4118
      %4183 = vst [vmem:[#allocation5 + $0x140] sm:$0xff] %v4119
      %4184 = vst [vmem:[#allocation5 + $0x148] sm:$0xff] %v4120
      %4185 = vst [vmem:[#allocation5 + $0x150] sm:$0xff] %v4121
      %4186 = vst [vmem:[#allocation5 + $0x158] sm:$0xff] %v4122
      %4187 = vst [vmem:[#allocation5 + $0x160] sm:$0xff] %v4123
      %4188 = vst [vmem:[#allocation5 + $0x168] sm:$0xff] %v4124
      %4189 = vst [vmem:[#allocation5 + $0x170] sm:$0xff] %v4125
      %4190 = vst [vmem:[#allocation5 + $0x178] sm:$0xff] %v4126
      %4191 = vst [vmem:[#allocation5 + $0x180] sm:$0xff] %v4127
      %4192 = vst [vmem:[#allocation5 + $0x188] sm:$0xff] %v4128
      %4193 = vst [vmem:[#allocation5 + $0x190] sm:$0xff] %v4129
      %4194 = vst [vmem:[#allocation5 + $0x198] sm:$0xff] %v4130
      %4195 = vst [vmem:[#allocation5 + $0x1a0] sm:$0xff] %v4131
      %4196 = vst [vmem:[#allocation5 + $0x1a8] sm:$0xff] %v4132
      %4197 = vst [vmem:[#allocation5 + $0x1b0] sm:$0xff] %v4133
      %4198 = vst [vmem:[#allocation5 + $0x1b8] sm:$0xff] %v4134
      %4199 = vst [vmem:[#allocation5 + $0x1c0] sm:$0xff] %v4135
      %4200 = vst [vmem:[#allocation5 + $0x1c8] sm:$0xff] %v4136
      %4201 = vst [vmem:[#allocation5 + $0x1d0] sm:$0xff] %v4137
      %4202 = vst [vmem:[#allocation5 + $0x1d8] sm:$0xff] %v4138
      %4203 = vst [vmem:[#allocation5 + $0x1e0] sm:$0xff] %v4139
      %4204 = vst [vmem:[#allocation5 + $0x1e8] sm:$0xff] %v4140
      %4205 = vst [vmem:[#allocation5 + $0x1f0] sm:$0xff] %v4141
      %4206 = vst [vmem:[#allocation5 + $0x1f8] sm:$0xff] %v4142
      %p4207 = scmp.eq.s32.totalorder %s22, 1
      // Predicated region
      $region57: #{gcn_forward_pallas.1} parent=35 // pred_check
        %p4208 = pneg %p4207
      $region58: #{gcn_forward_pallas.1} parent=35 // pred_check_branch
        %4210 = sbr.rel (%p4208) target = $region60
      $region59: #{gcn_forward_pallas.1} parent=35 // pred_region
        %v4211 = vld [vmem:[#allocation5] sm:$0xff]
        %v4212 = vld [vmem:[#allocation5 + $0x8] sm:$0xff]
        %v4213 = vld [vmem:[#allocation5 + $0x10] sm:$0xff]
        %v4214 = vld [vmem:[#allocation5 + $0x18] sm:$0xff]
        %v4215 = vld [vmem:[#allocation5 + $0x20] sm:$0xff]
        %v4216 = vld [vmem:[#allocation5 + $0x28] sm:$0xff]
        %v4217 = vld [vmem:[#allocation5 + $0x30] sm:$0xff]
        %v4218 = vld [vmem:[#allocation5 + $0x38] sm:$0xff]
        %v4219 = vld [vmem:[#allocation5 + $0x40] sm:$0xff]
        %v4220 = vld [vmem:[#allocation5 + $0x48] sm:$0xff]
        %v4221 = vld [vmem:[#allocation5 + $0x50] sm:$0xff]
        %v4222 = vld [vmem:[#allocation5 + $0x58] sm:$0xff]
        %v4223 = vld [vmem:[#allocation5 + $0x60] sm:$0xff]
        %v4224 = vld [vmem:[#allocation5 + $0x68] sm:$0xff]
        %v4225 = vld [vmem:[#allocation5 + $0x70] sm:$0xff]
        %v4226 = vld [vmem:[#allocation5 + $0x78] sm:$0xff]
        %v4227 = vld [vmem:[#allocation5 + $0x80] sm:$0xff]
        %v4228 = vld [vmem:[#allocation5 + $0x88] sm:$0xff]
        %v4229 = vld [vmem:[#allocation5 + $0x90] sm:$0xff]
        %v4230 = vld [vmem:[#allocation5 + $0x98] sm:$0xff]
        %v4231 = vld [vmem:[#allocation5 + $0xa0] sm:$0xff]
        %v4232 = vld [vmem:[#allocation5 + $0xa8] sm:$0xff]
        %v4233 = vld [vmem:[#allocation5 + $0xb0] sm:$0xff]
        %v4234 = vld [vmem:[#allocation5 + $0xb8] sm:$0xff]
        %v4235 = vld [vmem:[#allocation5 + $0xc0] sm:$0xff]
        %v4236 = vld [vmem:[#allocation5 + $0xc8] sm:$0xff]
        %v4237 = vld [vmem:[#allocation5 + $0xd0] sm:$0xff]
        %v4238 = vld [vmem:[#allocation5 + $0xd8] sm:$0xff]
        %v4239 = vld [vmem:[#allocation5 + $0xe0] sm:$0xff]
        %v4240 = vld [vmem:[#allocation5 + $0xe8] sm:$0xff]
        %v4241 = vld [vmem:[#allocation5 + $0xf0] sm:$0xff]
        %v4242 = vld [vmem:[#allocation5 + $0xf8] sm:$0xff]
        %v4243 = vld [vmem:[#allocation5 + $0x100] sm:$0xff]
        %v4244 = vld [vmem:[#allocation5 + $0x108] sm:$0xff]
        %v4245 = vld [vmem:[#allocation5 + $0x110] sm:$0xff]
        %v4246 = vld [vmem:[#allocation5 + $0x118] sm:$0xff]
        %v4247 = vld [vmem:[#allocation5 + $0x120] sm:$0xff]
        %v4248 = vld [vmem:[#allocation5 + $0x128] sm:$0xff]
        %v4249 = vld [vmem:[#allocation5 + $0x130] sm:$0xff]
        %v4250 = vld [vmem:[#allocation5 + $0x138] sm:$0xff]
        %v4251 = vld [vmem:[#allocation5 + $0x140] sm:$0xff]
        %v4252 = vld [vmem:[#allocation5 + $0x148] sm:$0xff]
        %v4253 = vld [vmem:[#allocation5 + $0x150] sm:$0xff]
        %v4254 = vld [vmem:[#allocation5 + $0x158] sm:$0xff]
        %v4255 = vld [vmem:[#allocation5 + $0x160] sm:$0xff]
        %v4256 = vld [vmem:[#allocation5 + $0x168] sm:$0xff]
        %v4257 = vld [vmem:[#allocation5 + $0x170] sm:$0xff]
        %v4258 = vld [vmem:[#allocation5 + $0x178] sm:$0xff]
        %v4259 = vld [vmem:[#allocation5 + $0x180] sm:$0xff]
        %v4260 = vld [vmem:[#allocation5 + $0x188] sm:$0xff]
        %v4261 = vld [vmem:[#allocation5 + $0x190] sm:$0xff]
        %v4262 = vld [vmem:[#allocation5 + $0x198] sm:$0xff]
        %v4263 = vld [vmem:[#allocation5 + $0x1a0] sm:$0xff]
        %v4264 = vld [vmem:[#allocation5 + $0x1a8] sm:$0xff]
        %v4265 = vld [vmem:[#allocation5 + $0x1b0] sm:$0xff]
        %v4266 = vld [vmem:[#allocation5 + $0x1b8] sm:$0xff]
        %v4267 = vld [vmem:[#allocation5 + $0x1c0] sm:$0xff]
        %v4268 = vld [vmem:[#allocation5 + $0x1c8] sm:$0xff]
        %v4269 = vld [vmem:[#allocation5 + $0x1d0] sm:$0xff]
        %v4270 = vld [vmem:[#allocation5 + $0x1d8] sm:$0xff]
        %v4271 = vld [vmem:[#allocation5 + $0x1e0] sm:$0xff]
        %v4272 = vld [vmem:[#allocation5 + $0x1e8] sm:$0xff]
        %v4273 = vld [vmem:[#allocation5 + $0x1f0] sm:$0xff]
        %v4274 = vld [vmem:[#allocation5 + $0x1f8] sm:$0xff]
        %v4275 = vld [vmem:[%s288] sm:$0x1]
        %v4277 = vlaneseq
        %v4278 = vshrl.u32 %v4277, 7
        %v4279 = vsub.s32 0, %v4278
        %v4280 = vrot.slane %v4275, %v4279
        %v4282 = vadd.f32 %v4211, %v4280
        %v4283 = vadd.f32 %v4212, %v4280
        %v4284 = vadd.f32 %v4213, %v4280
        %v4285 = vadd.f32 %v4214, %v4280
        %v4286 = vadd.f32 %v4215, %v4280
        %v4287 = vadd.f32 %v4216, %v4280
        %v4288 = vadd.f32 %v4217, %v4280
        %v4289 = vadd.f32 %v4218, %v4280
        %v4290 = vadd.f32 %v4219, %v4280
        %v4291 = vadd.f32 %v4220, %v4280
        %v4292 = vadd.f32 %v4221, %v4280
        %v4293 = vadd.f32 %v4222, %v4280
        %v4294 = vadd.f32 %v4223, %v4280
        %v4295 = vadd.f32 %v4224, %v4280
        %v4296 = vadd.f32 %v4225, %v4280
        %v4297 = vadd.f32 %v4226, %v4280
        %v4298 = vadd.f32 %v4227, %v4280
        %v4299 = vadd.f32 %v4228, %v4280
        %v4300 = vadd.f32 %v4229, %v4280
        %v4301 = vadd.f32 %v4230, %v4280
        %v4302 = vadd.f32 %v4231, %v4280
        %v4303 = vadd.f32 %v4232, %v4280
        %v4304 = vadd.f32 %v4233, %v4280
        %v4305 = vadd.f32 %v4234, %v4280
        %v4306 = vadd.f32 %v4235, %v4280
        %v4307 = vadd.f32 %v4236, %v4280
        %v4308 = vadd.f32 %v4237, %v4280
        %v4309 = vadd.f32 %v4238, %v4280
        %v4310 = vadd.f32 %v4239, %v4280
        %v4311 = vadd.f32 %v4240, %v4280
        %v4312 = vadd.f32 %v4241, %v4280
        %v4313 = vadd.f32 %v4242, %v4280
        %v4314 = vadd.f32 %v4243, %v4280
        %v4315 = vadd.f32 %v4244, %v4280
        %v4316 = vadd.f32 %v4245, %v4280
        %v4317 = vadd.f32 %v4246, %v4280
        %v4318 = vadd.f32 %v4247, %v4280
        %v4319 = vadd.f32 %v4248, %v4280
        %v4320 = vadd.f32 %v4249, %v4280
        %v4321 = vadd.f32 %v4250, %v4280
        %v4322 = vadd.f32 %v4251, %v4280
        %v4323 = vadd.f32 %v4252, %v4280
        %v4324 = vadd.f32 %v4253, %v4280
        %v4325 = vadd.f32 %v4254, %v4280
        %v4326 = vadd.f32 %v4255, %v4280
        %v4327 = vadd.f32 %v4256, %v4280
        %v4328 = vadd.f32 %v4257, %v4280
        %v4329 = vadd.f32 %v4258, %v4280
        %v4330 = vadd.f32 %v4259, %v4280
        %v4331 = vadd.f32 %v4260, %v4280
        %v4332 = vadd.f32 %v4261, %v4280
        %v4333 = vadd.f32 %v4262, %v4280
        %v4334 = vadd.f32 %v4263, %v4280
        %v4335 = vadd.f32 %v4264, %v4280
        %v4336 = vadd.f32 %v4265, %v4280
        %v4337 = vadd.f32 %v4266, %v4280
        %v4338 = vadd.f32 %v4267, %v4280
        %v4339 = vadd.f32 %v4268, %v4280
        %v4340 = vadd.f32 %v4269, %v4280
        %v4341 = vadd.f32 %v4270, %v4280
        %v4342 = vadd.f32 %v4271, %v4280
        %v4343 = vadd.f32 %v4272, %v4280
        %v4344 = vadd.f32 %v4273, %v4280
        %v4345 = vadd.f32 %v4274, %v4280
        %v4346 = vmax.f32 %v4282, 0.0
        %v4347 = vmax.f32 %v4283, 0.0
        %v4348 = vmax.f32 %v4284, 0.0
        %v4349 = vmax.f32 %v4285, 0.0
        %v4350 = vmax.f32 %v4286, 0.0
        %v4351 = vmax.f32 %v4287, 0.0
        %v4352 = vmax.f32 %v4288, 0.0
        %v4353 = vmax.f32 %v4289, 0.0
        %v4354 = vmax.f32 %v4290, 0.0
        %v4355 = vmax.f32 %v4291, 0.0
        %v4356 = vmax.f32 %v4292, 0.0
        %v4357 = vmax.f32 %v4293, 0.0
        %v4358 = vmax.f32 %v4294, 0.0
        %v4359 = vmax.f32 %v4295, 0.0
        %v4360 = vmax.f32 %v4296, 0.0
        %v4361 = vmax.f32 %v4297, 0.0
        %v4362 = vmax.f32 %v4298, 0.0
        %v4363 = vmax.f32 %v4299, 0.0
        %v4364 = vmax.f32 %v4300, 0.0
        %v4365 = vmax.f32 %v4301, 0.0
        %v4366 = vmax.f32 %v4302, 0.0
        %v4367 = vmax.f32 %v4303, 0.0
        %v4368 = vmax.f32 %v4304, 0.0
        %v4369 = vmax.f32 %v4305, 0.0
        %v4370 = vmax.f32 %v4306, 0.0
        %v4371 = vmax.f32 %v4307, 0.0
        %v4372 = vmax.f32 %v4308, 0.0
        %v4373 = vmax.f32 %v4309, 0.0
        %v4374 = vmax.f32 %v4310, 0.0
        %v4375 = vmax.f32 %v4311, 0.0
        %v4376 = vmax.f32 %v4312, 0.0
        %v4377 = vmax.f32 %v4313, 0.0
        %v4378 = vmax.f32 %v4314, 0.0
        %v4379 = vmax.f32 %v4315, 0.0
        %v4380 = vmax.f32 %v4316, 0.0
        %v4381 = vmax.f32 %v4317, 0.0
        %v4382 = vmax.f32 %v4318, 0.0
        %v4383 = vmax.f32 %v4319, 0.0
        %v4384 = vmax.f32 %v4320, 0.0
        %v4385 = vmax.f32 %v4321, 0.0
        %v4386 = vmax.f32 %v4322, 0.0
        %v4387 = vmax.f32 %v4323, 0.0
        %v4388 = vmax.f32 %v4324, 0.0
        %v4389 = vmax.f32 %v4325, 0.0
        %v4390 = vmax.f32 %v4326, 0.0
        %v4391 = vmax.f32 %v4327, 0.0
        %v4392 = vmax.f32 %v4328, 0.0
        %v4393 = vmax.f32 %v4329, 0.0
        %v4394 = vmax.f32 %v4330, 0.0
        %v4395 = vmax.f32 %v4331, 0.0
        %v4396 = vmax.f32 %v4332, 0.0
        %v4397 = vmax.f32 %v4333, 0.0
        %v4398 = vmax.f32 %v4334, 0.0
        %v4399 = vmax.f32 %v4335, 0.0
        %v4400 = vmax.f32 %v4336, 0.0
        %v4401 = vmax.f32 %v4337, 0.0
        %v4402 = vmax.f32 %v4338, 0.0
        %v4403 = vmax.f32 %v4339, 0.0
        %v4404 = vmax.f32 %v4340, 0.0
        %v4405 = vmax.f32 %v4341, 0.0
        %v4406 = vmax.f32 %v4342, 0.0
        %v4407 = vmax.f32 %v4343, 0.0
        %v4408 = vmax.f32 %v4344, 0.0
        %v4409 = vmax.f32 %v4345, 0.0
        %p4410 = scmp.lt.s32.totalorder %s20, 3
        %p4411 = scmp.lt.s32.totalorder %s20, 0
        %s4412 = ssub.s32 0, %s20
        %s4413 = scalar_select %p4411, %s4412, %s20
        %s4414 = sand.u32 %s4413, 1
        %s4415 = ssub.s32 0, %s4414
        %s4416 = scalar_select %p4411, %s4415, %s4414
        %p4417 = scmp.ne.s32.totalorder %s4416, 0
        %p4418 = scmp.lt.s32.totalorder %s4416, 0
        %p4419 = pnand %p4418, %p4417
        %p4420 = pneg %p4419
        %s4421 = sadd.s32 %s4416, 2
        %s4422 = scalar_select %p4420, %s4421, %s4416
        %p4423 = scmp.eq.s32.totalorder %s4422, 0
        %p4424 = pnand %p4410, %p4423
        %p4425 = pneg %p4424
        // Predicated region
        $region61: #{gcn_forward_pallas.1} parent=59 // pred_check
          _
        $region62: #{gcn_forward_pallas.1} parent=59 // pred_check_branch
          %4427 = sbr.rel (%p4424) target = $region64
        $region63: #{gcn_forward_pallas.1} parent=59 // pred_region
          %v4428 = vpack.c.bf16 %v4347, %v4346
          %v4429 = vpack.c.bf16 %v4349, %v4348
          %v4430 = vpack.c.bf16 %v4351, %v4350
          %v4431 = vpack.c.bf16 %v4353, %v4352
          %v4432 = vpack.c.bf16 %v4355, %v4354
          %v4433 = vpack.c.bf16 %v4357, %v4356
          %v4434 = vpack.c.bf16 %v4359, %v4358
          %v4435 = vpack.c.bf16 %v4361, %v4360
          %v4436 = vpack.c.bf16 %v4363, %v4362
          %v4437 = vpack.c.bf16 %v4365, %v4364
          %v4438 = vpack.c.bf16 %v4367, %v4366
          %v4439 = vpack.c.bf16 %v4369, %v4368
          %v4440 = vpack.c.bf16 %v4371, %v4370
          %v4441 = vpack.c.bf16 %v4373, %v4372
          %v4442 = vpack.c.bf16 %v4375, %v4374
          %v4443 = vpack.c.bf16 %v4377, %v4376
          %v4444 = vpack.c.bf16 %v4379, %v4378
          %v4445 = vpack.c.bf16 %v4381, %v4380
          %v4446 = vpack.c.bf16 %v4383, %v4382
          %v4447 = vpack.c.bf16 %v4385, %v4384
          %v4448 = vpack.c.bf16 %v4387, %v4386
          %v4449 = vpack.c.bf16 %v4389, %v4388
          %v4450 = vpack.c.bf16 %v4391, %v4390
          %v4451 = vpack.c.bf16 %v4393, %v4392
          %v4452 = vpack.c.bf16 %v4395, %v4394
          %v4453 = vpack.c.bf16 %v4397, %v4396
          %v4454 = vpack.c.bf16 %v4399, %v4398
          %v4455 = vpack.c.bf16 %v4401, %v4400
          %v4456 = vpack.c.bf16 %v4403, %v4402
          %v4457 = vpack.c.bf16 %v4405, %v4404
          %v4458 = vpack.c.bf16 %v4407, %v4406
          %v4459 = vpack.c.bf16 %v4409, %v4408
          %v4492 = vunpack.c.l.b16 %v4428
          %v4493 = vunpack.c.h.b16 %v4428
          %v4494 = vunpack.c.l.b16 %v4429
          %v4495 = vunpack.c.h.b16 %v4429
          %v4496 = vunpack.c.l.b16 %v4430
          %v4497 = vunpack.c.h.b16 %v4430
          %v4498 = vunpack.c.l.b16 %v4431
          %v4499 = vunpack.c.h.b16 %v4431
          %v4500 = vunpack.c.l.b16 %v4432
          %v4501 = vunpack.c.h.b16 %v4432
          %v4502 = vunpack.c.l.b16 %v4433
          %v4503 = vunpack.c.h.b16 %v4433
          %v4504 = vunpack.c.l.b16 %v4434
          %v4505 = vunpack.c.h.b16 %v4434
          %v4506 = vunpack.c.l.b16 %v4435
          %v4507 = vunpack.c.h.b16 %v4435
          %v4508 = vunpack.c.l.b16 %v4436
          %v4509 = vunpack.c.h.b16 %v4436
          %v4510 = vunpack.c.l.b16 %v4437
          %v4511 = vunpack.c.h.b16 %v4437
          %v4512 = vunpack.c.l.b16 %v4438
          %v4513 = vunpack.c.h.b16 %v4438
          %v4514 = vunpack.c.l.b16 %v4439
          %v4515 = vunpack.c.h.b16 %v4439
          %v4516 = vunpack.c.l.b16 %v4440
          %v4517 = vunpack.c.h.b16 %v4440
          %v4518 = vunpack.c.l.b16 %v4441
          %v4519 = vunpack.c.h.b16 %v4441
          %v4520 = vunpack.c.l.b16 %v4442
          %v4521 = vunpack.c.h.b16 %v4442
          %v4522 = vunpack.c.l.b16 %v4443
          %v4523 = vunpack.c.h.b16 %v4443
          %v4524 = vunpack.c.l.b16 %v4444
          %v4525 = vunpack.c.h.b16 %v4444
          %v4526 = vunpack.c.l.b16 %v4445
          %v4527 = vunpack.c.h.b16 %v4445
          %v4528 = vunpack.c.l.b16 %v4446
          %v4529 = vunpack.c.h.b16 %v4446
          %v4530 = vunpack.c.l.b16 %v4447
          %v4531 = vunpack.c.h.b16 %v4447
          %v4532 = vunpack.c.l.b16 %v4448
          %v4533 = vunpack.c.h.b16 %v4448
          %v4534 = vunpack.c.l.b16 %v4449
          %v4535 = vunpack.c.h.b16 %v4449
          %v4536 = vunpack.c.l.b16 %v4450
          %v4537 = vunpack.c.h.b16 %v4450
          %v4538 = vunpack.c.l.b16 %v4451
          %v4539 = vunpack.c.h.b16 %v4451
          %v4540 = vunpack.c.l.b16 %v4452
          %v4541 = vunpack.c.h.b16 %v4452
          %v4542 = vunpack.c.l.b16 %v4453
          %v4543 = vunpack.c.h.b16 %v4453
          %v4544 = vunpack.c.l.b16 %v4454
          %v4545 = vunpack.c.h.b16 %v4454
          %v4546 = vunpack.c.l.b16 %v4455
          %v4547 = vunpack.c.h.b16 %v4455
          %v4548 = vunpack.c.l.b16 %v4456
          %v4549 = vunpack.c.h.b16 %v4456
          %v4550 = vunpack.c.l.b16 %v4457
          %v4551 = vunpack.c.h.b16 %v4457
          %v4552 = vunpack.c.l.b16 %v4458
          %v4553 = vunpack.c.h.b16 %v4458
          %v4554 = vunpack.c.l.b16 %v4459
          %v4555 = vunpack.c.h.b16 %v4459
          %v4556 = vpack.c.b16 %v4492, %v4492
          %v4557 = vpack.c.b16 %v4493, %v4493
          %v4558 = vpack.c.b16 %v4494, %v4494
          %v4559 = vpack.c.b16 %v4495, %v4495
          %v4560 = vpack.c.b16 %v4496, %v4496
          %v4561 = vpack.c.b16 %v4497, %v4497
          %v4562 = vpack.c.b16 %v4498, %v4498
          %v4563 = vpack.c.b16 %v4499, %v4499
          %v4564 = vpack.c.b16 %v4500, %v4500
          %v4565 = vpack.c.b16 %v4501, %v4501
          %v4566 = vpack.c.b16 %v4502, %v4502
          %v4567 = vpack.c.b16 %v4503, %v4503
          %v4568 = vpack.c.b16 %v4504, %v4504
          %v4569 = vpack.c.b16 %v4505, %v4505
          %v4570 = vpack.c.b16 %v4506, %v4506
          %v4571 = vpack.c.b16 %v4507, %v4507
          %v4572 = vpack.c.b16 %v4508, %v4508
          %v4573 = vpack.c.b16 %v4509, %v4509
          %v4574 = vpack.c.b16 %v4510, %v4510
          %v4575 = vpack.c.b16 %v4511, %v4511
          %v4576 = vpack.c.b16 %v4512, %v4512
          %v4577 = vpack.c.b16 %v4513, %v4513
          %v4578 = vpack.c.b16 %v4514, %v4514
          %v4579 = vpack.c.b16 %v4515, %v4515
          %v4580 = vpack.c.b16 %v4516, %v4516
          %v4581 = vpack.c.b16 %v4517, %v4517
          %v4582 = vpack.c.b16 %v4518, %v4518
          %v4583 = vpack.c.b16 %v4519, %v4519
          %v4584 = vpack.c.b16 %v4520, %v4520
          %v4585 = vpack.c.b16 %v4521, %v4521
          %v4586 = vpack.c.b16 %v4522, %v4522
          %v4587 = vpack.c.b16 %v4523, %v4523
          %v4588 = vpack.c.b16 %v4524, %v4524
          %v4589 = vpack.c.b16 %v4525, %v4525
          %v4590 = vpack.c.b16 %v4526, %v4526
          %v4591 = vpack.c.b16 %v4527, %v4527
          %v4592 = vpack.c.b16 %v4528, %v4528
          %v4593 = vpack.c.b16 %v4529, %v4529
          %v4594 = vpack.c.b16 %v4530, %v4530
          %v4595 = vpack.c.b16 %v4531, %v4531
          %v4596 = vpack.c.b16 %v4532, %v4532
          %v4597 = vpack.c.b16 %v4533, %v4533
          %v4598 = vpack.c.b16 %v4534, %v4534
          %v4599 = vpack.c.b16 %v4535, %v4535
          %v4600 = vpack.c.b16 %v4536, %v4536
          %v4601 = vpack.c.b16 %v4537, %v4537
          %v4602 = vpack.c.b16 %v4538, %v4538
          %v4603 = vpack.c.b16 %v4539, %v4539
          %v4604 = vpack.c.b16 %v4540, %v4540
          %v4605 = vpack.c.b16 %v4541, %v4541
          %v4606 = vpack.c.b16 %v4542, %v4542
          %v4607 = vpack.c.b16 %v4543, %v4543
          %v4608 = vpack.c.b16 %v4544, %v4544
          %v4609 = vpack.c.b16 %v4545, %v4545
          %v4610 = vpack.c.b16 %v4546, %v4546
          %v4611 = vpack.c.b16 %v4547, %v4547
          %v4612 = vpack.c.b16 %v4548, %v4548
          %v4613 = vpack.c.b16 %v4549, %v4549
          %v4614 = vpack.c.b16 %v4550, %v4550
          %v4615 = vpack.c.b16 %v4551, %v4551
          %v4616 = vpack.c.b16 %v4552, %v4552
          %v4617 = vpack.c.b16 %v4553, %v4553
          %v4618 = vpack.c.b16 %v4554, %v4554
          %v4619 = vpack.c.b16 %v4555, %v4555
          %s4684 = smul.addr %s2404, 4
          %s4685 = scalar_lea.vmem [#allocation2], %s4684
          %4686 = vst [vmem:[%s4685] sm:$0xf] %v4556
          %4687 = vst [vmem:[%s4685 + $0x4] sm:$0xf] %v4557
          %4688 = vst [vmem:[%s4685 + $0x8] sm:$0xf] %v4558
          %4689 = vst [vmem:[%s4685 + $0xc] sm:$0xf] %v4559
          %4690 = vst [vmem:[%s4685 + $0x10] sm:$0xf] %v4560
          %4691 = vst [vmem:[%s4685 + $0x14] sm:$0xf] %v4561
          %4692 = vst [vmem:[%s4685 + $0x18] sm:$0xf] %v4562
          %4693 = vst [vmem:[%s4685 + $0x1c] sm:$0xf] %v4563
          %4694 = vst [vmem:[%s4685 + $0x20] sm:$0xf] %v4564
          %4695 = vst [vmem:[%s4685 + $0x24] sm:$0xf] %v4565
          %4696 = vst [vmem:[%s4685 + $0x28] sm:$0xf] %v4566
          %4697 = vst [vmem:[%s4685 + $0x2c] sm:$0xf] %v4567
          %4698 = vst [vmem:[%s4685 + $0x30] sm:$0xf] %v4568
          %4699 = vst [vmem:[%s4685 + $0x34] sm:$0xf] %v4569
          %4700 = vst [vmem:[%s4685 + $0x38] sm:$0xf] %v4570
          %4701 = vst [vmem:[%s4685 + $0x3c] sm:$0xf] %v4571
          %4702 = vst [vmem:[%s4685 + $0x40] sm:$0xf] %v4572
          %4703 = vst [vmem:[%s4685 + $0x44] sm:$0xf] %v4573
          %4704 = vst [vmem:[%s4685 + $0x48] sm:$0xf] %v4574
          %4705 = vst [vmem:[%s4685 + $0x4c] sm:$0xf] %v4575
          %4706 = vst [vmem:[%s4685 + $0x50] sm:$0xf] %v4576
          %4707 = vst [vmem:[%s4685 + $0x54] sm:$0xf] %v4577
          %4708 = vst [vmem:[%s4685 + $0x58] sm:$0xf] %v4578
          %4709 = vst [vmem:[%s4685 + $0x5c] sm:$0xf] %v4579
          %4710 = vst [vmem:[%s4685 + $0x60] sm:$0xf] %v4580
          %4711 = vst [vmem:[%s4685 + $0x64] sm:$0xf] %v4581
          %4712 = vst [vmem:[%s4685 + $0x68] sm:$0xf] %v4582
          %4713 = vst [vmem:[%s4685 + $0x6c] sm:$0xf] %v4583
          %4714 = vst [vmem:[%s4685 + $0x70] sm:$0xf] %v4584
          %4715 = vst [vmem:[%s4685 + $0x74] sm:$0xf] %v4585
          %4716 = vst [vmem:[%s4685 + $0x78] sm:$0xf] %v4586
          %4717 = vst [vmem:[%s4685 + $0x7c] sm:$0xf] %v4587
          %4718 = vst [vmem:[%s4685 + $0x80] sm:$0xf] %v4588
          %4719 = vst [vmem:[%s4685 + $0x84] sm:$0xf] %v4589
          %4720 = vst [vmem:[%s4685 + $0x88] sm:$0xf] %v4590
          %4721 = vst [vmem:[%s4685 + $0x8c] sm:$0xf] %v4591
          %4722 = vst [vmem:[%s4685 + $0x90] sm:$0xf] %v4592
          %4723 = vst [vmem:[%s4685 + $0x94] sm:$0xf] %v4593
          %4724 = vst [vmem:[%s4685 + $0x98] sm:$0xf] %v4594
          %4725 = vst [vmem:[%s4685 + $0x9c] sm:$0xf] %v4595
          %4726 = vst [vmem:[%s4685 + $0xa0] sm:$0xf] %v4596
          %4727 = vst [vmem:[%s4685 + $0xa4] sm:$0xf] %v4597
          %4728 = vst [vmem:[%s4685 + $0xa8] sm:$0xf] %v4598
          %4729 = vst [vmem:[%s4685 + $0xac] sm:$0xf] %v4599
          %4730 = vst [vmem:[%s4685 + $0xb0] sm:$0xf] %v4600
          %4731 = vst [vmem:[%s4685 + $0xb4] sm:$0xf] %v4601
          %4732 = vst [vmem:[%s4685 + $0xb8] sm:$0xf] %v4602
          %4733 = vst [vmem:[%s4685 + $0xbc] sm:$0xf] %v4603
          %4734 = vst [vmem:[%s4685 + $0xc0] sm:$0xf] %v4604
          %4735 = vst [vmem:[%s4685 + $0xc4] sm:$0xf] %v4605
          %4736 = vst [vmem:[%s4685 + $0xc8] sm:$0xf] %v4606
          %4737 = vst [vmem:[%s4685 + $0xcc] sm:$0xf] %v4607
          %4738 = vst [vmem:[%s4685 + $0xd0] sm:$0xf] %v4608
          %4739 = vst [vmem:[%s4685 + $0xd4] sm:$0xf] %v4609
          %4740 = vst [vmem:[%s4685 + $0xd8] sm:$0xf] %v4610
          %4741 = vst [vmem:[%s4685 + $0xdc] sm:$0xf] %v4611
          %4742 = vst [vmem:[%s4685 + $0xe0] sm:$0xf] %v4612
          %4743 = vst [vmem:[%s4685 + $0xe4] sm:$0xf] %v4613
          %4744 = vst [vmem:[%s4685 + $0xe8] sm:$0xf] %v4614
          %4745 = vst [vmem:[%s4685 + $0xec] sm:$0xf] %v4615
          %4746 = vst [vmem:[%s4685 + $0xf0] sm:$0xf] %v4616
          %4747 = vst [vmem:[%s4685 + $0xf4] sm:$0xf] %v4617
          %4748 = vst [vmem:[%s4685 + $0xf8] sm:$0xf] %v4618
          %4749 = vst [vmem:[%s4685 + $0xfc] sm:$0xf] %v4619
        $region64: #{gcn_forward_pallas.1} parent=59 // pred_fallthru
          _
        %p4750 = scmp.eq.s32.totalorder %s4422, 1
        %p4751 = pnand %p4410, %p4750
        %p4752 = pneg %p4751
        // Predicated region
        $region65: #{gcn_forward_pallas.1} parent=59 // pred_check
          _
        $region66: #{gcn_forward_pallas.1} parent=59 // pred_check_branch
          %4754 = sbr.rel (%p4751) target = $region68
        $region67: #{gcn_forward_pallas.1} parent=59 // pred_region
          %v4755 = vpack.c.bf16 %v4347, %v4346
          %v4756 = vpack.c.bf16 %v4349, %v4348
          %v4757 = vpack.c.bf16 %v4351, %v4350
          %v4758 = vpack.c.bf16 %v4353, %v4352
          %v4759 = vpack.c.bf16 %v4355, %v4354
          %v4760 = vpack.c.bf16 %v4357, %v4356
          %v4761 = vpack.c.bf16 %v4359, %v4358
          %v4762 = vpack.c.bf16 %v4361, %v4360
          %v4763 = vpack.c.bf16 %v4363, %v4362
          %v4764 = vpack.c.bf16 %v4365, %v4364
          %v4765 = vpack.c.bf16 %v4367, %v4366
          %v4766 = vpack.c.bf16 %v4369, %v4368
          %v4767 = vpack.c.bf16 %v4371, %v4370
          %v4768 = vpack.c.bf16 %v4373, %v4372
          %v4769 = vpack.c.bf16 %v4375, %v4374
          %v4770 = vpack.c.bf16 %v4377, %v4376
          %v4771 = vpack.c.bf16 %v4379, %v4378
          %v4772 = vpack.c.bf16 %v4381, %v4380
          %v4773 = vpack.c.bf16 %v4383, %v4382
          %v4774 = vpack.c.bf16 %v4385, %v4384
          %v4775 = vpack.c.bf16 %v4387, %v4386
          %v4776 = vpack.c.bf16 %v4389, %v4388
          %v4777 = vpack.c.bf16 %v4391, %v4390
          %v4778 = vpack.c.bf16 %v4393, %v4392
          %v4779 = vpack.c.bf16 %v4395, %v4394
          %v4780 = vpack.c.bf16 %v4397, %v4396
          %v4781 = vpack.c.bf16 %v4399, %v4398
          %v4782 = vpack.c.bf16 %v4401, %v4400
          %v4783 = vpack.c.bf16 %v4403, %v4402
          %v4784 = vpack.c.bf16 %v4405, %v4404
          %v4785 = vpack.c.bf16 %v4407, %v4406
          %v4786 = vpack.c.bf16 %v4409, %v4408
          %v4819 = vunpack.c.l.b16 %v4755
          %v4820 = vunpack.c.h.b16 %v4755
          %v4821 = vunpack.c.l.b16 %v4756
          %v4822 = vunpack.c.h.b16 %v4756
          %v4823 = vunpack.c.l.b16 %v4757
          %v4824 = vunpack.c.h.b16 %v4757
          %v4825 = vunpack.c.l.b16 %v4758
          %v4826 = vunpack.c.h.b16 %v4758
          %v4827 = vunpack.c.l.b16 %v4759
          %v4828 = vunpack.c.h.b16 %v4759
          %v4829 = vunpack.c.l.b16 %v4760
          %v4830 = vunpack.c.h.b16 %v4760
          %v4831 = vunpack.c.l.b16 %v4761
          %v4832 = vunpack.c.h.b16 %v4761
          %v4833 = vunpack.c.l.b16 %v4762
          %v4834 = vunpack.c.h.b16 %v4762
          %v4835 = vunpack.c.l.b16 %v4763
          %v4836 = vunpack.c.h.b16 %v4763
          %v4837 = vunpack.c.l.b16 %v4764
          %v4838 = vunpack.c.h.b16 %v4764
          %v4839 = vunpack.c.l.b16 %v4765
          %v4840 = vunpack.c.h.b16 %v4765
          %v4841 = vunpack.c.l.b16 %v4766
          %v4842 = vunpack.c.h.b16 %v4766
          %v4843 = vunpack.c.l.b16 %v4767
          %v4844 = vunpack.c.h.b16 %v4767
          %v4845 = vunpack.c.l.b16 %v4768
          %v4846 = vunpack.c.h.b16 %v4768
          %v4847 = vunpack.c.l.b16 %v4769
          %v4848 = vunpack.c.h.b16 %v4769
          %v4849 = vunpack.c.l.b16 %v4770
          %v4850 = vunpack.c.h.b16 %v4770
          %v4851 = vunpack.c.l.b16 %v4771
          %v4852 = vunpack.c.h.b16 %v4771
          %v4853 = vunpack.c.l.b16 %v4772
          %v4854 = vunpack.c.h.b16 %v4772
          %v4855 = vunpack.c.l.b16 %v4773
          %v4856 = vunpack.c.h.b16 %v4773
          %v4857 = vunpack.c.l.b16 %v4774
          %v4858 = vunpack.c.h.b16 %v4774
          %v4859 = vunpack.c.l.b16 %v4775
          %v4860 = vunpack.c.h.b16 %v4775
          %v4861 = vunpack.c.l.b16 %v4776
          %v4862 = vunpack.c.h.b16 %v4776
          %v4863 = vunpack.c.l.b16 %v4777
          %v4864 = vunpack.c.h.b16 %v4777
          %v4865 = vunpack.c.l.b16 %v4778
          %v4866 = vunpack.c.h.b16 %v4778
          %v4867 = vunpack.c.l.b16 %v4779
          %v4868 = vunpack.c.h.b16 %v4779
          %v4869 = vunpack.c.l.b16 %v4780
          %v4870 = vunpack.c.h.b16 %v4780
          %v4871 = vunpack.c.l.b16 %v4781
          %v4872 = vunpack.c.h.b16 %v4781
          %v4873 = vunpack.c.l.b16 %v4782
          %v4874 = vunpack.c.h.b16 %v4782
          %v4875 = vunpack.c.l.b16 %v4783
          %v4876 = vunpack.c.h.b16 %v4783
          %v4877 = vunpack.c.l.b16 %v4784
          %v4878 = vunpack.c.h.b16 %v4784
          %v4879 = vunpack.c.l.b16 %v4785
          %v4880 = vunpack.c.h.b16 %v4785
          %v4881 = vunpack.c.l.b16 %v4786
          %v4882 = vunpack.c.h.b16 %v4786
          %v4883 = vpack.c.b16 %v4819, %v4819
          %v4884 = vpack.c.b16 %v4820, %v4820
          %v4885 = vpack.c.b16 %v4821, %v4821
          %v4886 = vpack.c.b16 %v4822, %v4822
          %v4887 = vpack.c.b16 %v4823, %v4823
          %v4888 = vpack.c.b16 %v4824, %v4824
          %v4889 = vpack.c.b16 %v4825, %v4825
          %v4890 = vpack.c.b16 %v4826, %v4826
          %v4891 = vpack.c.b16 %v4827, %v4827
          %v4892 = vpack.c.b16 %v4828, %v4828
          %v4893 = vpack.c.b16 %v4829, %v4829
          %v4894 = vpack.c.b16 %v4830, %v4830
          %v4895 = vpack.c.b16 %v4831, %v4831
          %v4896 = vpack.c.b16 %v4832, %v4832
          %v4897 = vpack.c.b16 %v4833, %v4833
          %v4898 = vpack.c.b16 %v4834, %v4834
          %v4899 = vpack.c.b16 %v4835, %v4835
          %v4900 = vpack.c.b16 %v4836, %v4836
          %v4901 = vpack.c.b16 %v4837, %v4837
          %v4902 = vpack.c.b16 %v4838, %v4838
          %v4903 = vpack.c.b16 %v4839, %v4839
          %v4904 = vpack.c.b16 %v4840, %v4840
          %v4905 = vpack.c.b16 %v4841, %v4841
          %v4906 = vpack.c.b16 %v4842, %v4842
          %v4907 = vpack.c.b16 %v4843, %v4843
          %v4908 = vpack.c.b16 %v4844, %v4844
          %v4909 = vpack.c.b16 %v4845, %v4845
          %v4910 = vpack.c.b16 %v4846, %v4846
          %v4911 = vpack.c.b16 %v4847, %v4847
          %v4912 = vpack.c.b16 %v4848, %v4848
          %v4913 = vpack.c.b16 %v4849, %v4849
          %v4914 = vpack.c.b16 %v4850, %v4850
          %v4915 = vpack.c.b16 %v4851, %v4851
          %v4916 = vpack.c.b16 %v4852, %v4852
          %v4917 = vpack.c.b16 %v4853, %v4853
          %v4918 = vpack.c.b16 %v4854, %v4854
          %v4919 = vpack.c.b16 %v4855, %v4855
          %v4920 = vpack.c.b16 %v4856, %v4856
          %v4921 = vpack.c.b16 %v4857, %v4857
          %v4922 = vpack.c.b16 %v4858, %v4858
          %v4923 = vpack.c.b16 %v4859, %v4859
          %v4924 = vpack.c.b16 %v4860, %v4860
          %v4925 = vpack.c.b16 %v4861, %v4861
          %v4926 = vpack.c.b16 %v4862, %v4862
          %v4927 = vpack.c.b16 %v4863, %v4863
          %v4928 = vpack.c.b16 %v4864, %v4864
          %v4929 = vpack.c.b16 %v4865, %v4865
          %v4930 = vpack.c.b16 %v4866, %v4866
          %v4931 = vpack.c.b16 %v4867, %v4867
          %v4932 = vpack.c.b16 %v4868, %v4868
          %v4933 = vpack.c.b16 %v4869, %v4869
          %v4934 = vpack.c.b16 %v4870, %v4870
          %v4935 = vpack.c.b16 %v4871, %v4871
          %v4936 = vpack.c.b16 %v4872, %v4872
          %v4937 = vpack.c.b16 %v4873, %v4873
          %v4938 = vpack.c.b16 %v4874, %v4874
          %v4939 = vpack.c.b16 %v4875, %v4875
          %v4940 = vpack.c.b16 %v4876, %v4876
          %v4941 = vpack.c.b16 %v4877, %v4877
          %v4942 = vpack.c.b16 %v4878, %v4878
          %v4943 = vpack.c.b16 %v4879, %v4879
          %v4944 = vpack.c.b16 %v4880, %v4880
          %v4945 = vpack.c.b16 %v4881, %v4881
          %v4946 = vpack.c.b16 %v4882, %v4882
          %s5011 = smul.addr %s2404, 4
          %s5012 = scalar_lea.vmem [#allocation3], %s5011
          %5013 = vst [vmem:[%s5012] sm:$0xf] %v4883
          %5014 = vst [vmem:[%s5012 + $0x4] sm:$0xf] %v4884
          %5015 = vst [vmem:[%s5012 + $0x8] sm:$0xf] %v4885
          %5016 = vst [vmem:[%s5012 + $0xc] sm:$0xf] %v4886
          %5017 = vst [vmem:[%s5012 + $0x10] sm:$0xf] %v4887
          %5018 = vst [vmem:[%s5012 + $0x14] sm:$0xf] %v4888
          %5019 = vst [vmem:[%s5012 + $0x18] sm:$0xf] %v4889
          %5020 = vst [vmem:[%s5012 + $0x1c] sm:$0xf] %v4890
          %5021 = vst [vmem:[%s5012 + $0x20] sm:$0xf] %v4891
          %5022 = vst [vmem:[%s5012 + $0x24] sm:$0xf] %v4892
          %5023 = vst [vmem:[%s5012 + $0x28] sm:$0xf] %v4893
          %5024 = vst [vmem:[%s5012 + $0x2c] sm:$0xf] %v4894
          %5025 = vst [vmem:[%s5012 + $0x30] sm:$0xf] %v4895
          %5026 = vst [vmem:[%s5012 + $0x34] sm:$0xf] %v4896
          %5027 = vst [vmem:[%s5012 + $0x38] sm:$0xf] %v4897
          %5028 = vst [vmem:[%s5012 + $0x3c] sm:$0xf] %v4898
          %5029 = vst [vmem:[%s5012 + $0x40] sm:$0xf] %v4899
          %5030 = vst [vmem:[%s5012 + $0x44] sm:$0xf] %v4900
          %5031 = vst [vmem:[%s5012 + $0x48] sm:$0xf] %v4901
          %5032 = vst [vmem:[%s5012 + $0x4c] sm:$0xf] %v4902
          %5033 = vst [vmem:[%s5012 + $0x50] sm:$0xf] %v4903
          %5034 = vst [vmem:[%s5012 + $0x54] sm:$0xf] %v4904
          %5035 = vst [vmem:[%s5012 + $0x58] sm:$0xf] %v4905
          %5036 = vst [vmem:[%s5012 + $0x5c] sm:$0xf] %v4906
          %5037 = vst [vmem:[%s5012 + $0x60] sm:$0xf] %v4907
          %5038 = vst [vmem:[%s5012 + $0x64] sm:$0xf] %v4908
          %5039 = vst [vmem:[%s5012 + $0x68] sm:$0xf] %v4909
          %5040 = vst [vmem:[%s5012 + $0x6c] sm:$0xf] %v4910
          %5041 = vst [vmem:[%s5012 + $0x70] sm:$0xf] %v4911
          %5042 = vst [vmem:[%s5012 + $0x74] sm:$0xf] %v4912
          %5043 = vst [vmem:[%s5012 + $0x78] sm:$0xf] %v4913
          %5044 = vst [vmem:[%s5012 + $0x7c] sm:$0xf] %v4914
          %5045 = vst [vmem:[%s5012 + $0x80] sm:$0xf] %v4915
          %5046 = vst [vmem:[%s5012 + $0x84] sm:$0xf] %v4916
          %5047 = vst [vmem:[%s5012 + $0x88] sm:$0xf] %v4917
          %5048 = vst [vmem:[%s5012 + $0x8c] sm:$0xf] %v4918
          %5049 = vst [vmem:[%s5012 + $0x90] sm:$0xf] %v4919
          %5050 = vst [vmem:[%s5012 + $0x94] sm:$0xf] %v4920
          %5051 = vst [vmem:[%s5012 + $0x98] sm:$0xf] %v4921
          %5052 = vst [vmem:[%s5012 + $0x9c] sm:$0xf] %v4922
          %5053 = vst [vmem:[%s5012 + $0xa0] sm:$0xf] %v4923
          %5054 = vst [vmem:[%s5012 + $0xa4] sm:$0xf] %v4924
          %5055 = vst [vmem:[%s5012 + $0xa8] sm:$0xf] %v4925
          %5056 = vst [vmem:[%s5012 + $0xac] sm:$0xf] %v4926
          %5057 = vst [vmem:[%s5012 + $0xb0] sm:$0xf] %v4927
          %5058 = vst [vmem:[%s5012 + $0xb4] sm:$0xf] %v4928
          %5059 = vst [vmem:[%s5012 + $0xb8] sm:$0xf] %v4929
          %5060 = vst [vmem:[%s5012 + $0xbc] sm:$0xf] %v4930
          %5061 = vst [vmem:[%s5012 + $0xc0] sm:$0xf] %v4931
          %5062 = vst [vmem:[%s5012 + $0xc4] sm:$0xf] %v4932
          %5063 = vst [vmem:[%s5012 + $0xc8] sm:$0xf] %v4933
          %5064 = vst [vmem:[%s5012 + $0xcc] sm:$0xf] %v4934
          %5065 = vst [vmem:[%s5012 + $0xd0] sm:$0xf] %v4935
          %5066 = vst [vmem:[%s5012 + $0xd4] sm:$0xf] %v4936
          %5067 = vst [vmem:[%s5012 + $0xd8] sm:$0xf] %v4937
          %5068 = vst [vmem:[%s5012 + $0xdc] sm:$0xf] %v4938
          %5069 = vst [vmem:[%s5012 + $0xe0] sm:$0xf] %v4939
          %5070 = vst [vmem:[%s5012 + $0xe4] sm:$0xf] %v4940
          %5071 = vst [vmem:[%s5012 + $0xe8] sm:$0xf] %v4941
          %5072 = vst [vmem:[%s5012 + $0xec] sm:$0xf] %v4942
          %5073 = vst [vmem:[%s5012 + $0xf0] sm:$0xf] %v4943
          %5074 = vst [vmem:[%s5012 + $0xf4] sm:$0xf] %v4944
          %5075 = vst [vmem:[%s5012 + $0xf8] sm:$0xf] %v4945
          %5076 = vst [vmem:[%s5012 + $0xfc] sm:$0xf] %v4946
        $region68: #{gcn_forward_pallas.1} parent=59 // pred_fallthru
          _
        %p5077 = scmp.eq.s32.totalorder %s20, 3
        // Predicated region
        $region69: #{gcn_forward_pallas.1} parent=59 // pred_check
          %p5078 = pneg %p5077
        $region70: #{gcn_forward_pallas.1} parent=59 // pred_check_branch
          %5080 = sbr.rel (%p5078) target = $region72
        $region71: #{gcn_forward_pallas.1} parent=59 // pred_region
          %5081 = vst [vmem:[%s295] sm:$0xff] %v4282
          %5082 = vst [vmem:[%s295 + $0x8] sm:$0xff] %v4283
          %5083 = vst [vmem:[%s295 + $0x10] sm:$0xff] %v4284
          %5084 = vst [vmem:[%s295 + $0x18] sm:$0xff] %v4285
          %5085 = vst [vmem:[%s295 + $0x20] sm:$0xff] %v4286
          %5086 = vst [vmem:[%s295 + $0x28] sm:$0xff] %v4287
          %5087 = vst [vmem:[%s295 + $0x30] sm:$0xff] %v4288
          %5088 = vst [vmem:[%s295 + $0x38] sm:$0xff] %v4289
          %5089 = vst [vmem:[%s295 + $0x40] sm:$0xff] %v4290
          %5090 = vst [vmem:[%s295 + $0x48] sm:$0xff] %v4291
          %5091 = vst [vmem:[%s295 + $0x50] sm:$0xff] %v4292
          %5092 = vst [vmem:[%s295 + $0x58] sm:$0xff] %v4293
          %5093 = vst [vmem:[%s295 + $0x60] sm:$0xff] %v4294
          %5094 = vst [vmem:[%s295 + $0x68] sm:$0xff] %v4295
          %5095 = vst [vmem:[%s295 + $0x70] sm:$0xff] %v4296
          %5096 = vst [vmem:[%s295 + $0x78] sm:$0xff] %v4297
          %5097 = vst [vmem:[%s295 + $0x80] sm:$0xff] %v4298
          %5098 = vst [vmem:[%s295 + $0x88] sm:$0xff] %v4299
          %5099 = vst [vmem:[%s295 + $0x90] sm:$0xff] %v4300
          %5100 = vst [vmem:[%s295 + $0x98] sm:$0xff] %v4301
          %5101 = vst [vmem:[%s295 + $0xa0] sm:$0xff] %v4302
          %5102 = vst [vmem:[%s295 + $0xa8] sm:$0xff] %v4303
          %5103 = vst [vmem:[%s295 + $0xb0] sm:$0xff] %v4304
          %5104 = vst [vmem:[%s295 + $0xb8] sm:$0xff] %v4305
          %5105 = vst [vmem:[%s295 + $0xc0] sm:$0xff] %v4306
          %5106 = vst [vmem:[%s295 + $0xc8] sm:$0xff] %v4307
          %5107 = vst [vmem:[%s295 + $0xd0] sm:$0xff] %v4308
          %5108 = vst [vmem:[%s295 + $0xd8] sm:$0xff] %v4309
          %5109 = vst [vmem:[%s295 + $0xe0] sm:$0xff] %v4310
          %5110 = vst [vmem:[%s295 + $0xe8] sm:$0xff] %v4311
          %5111 = vst [vmem:[%s295 + $0xf0] sm:$0xff] %v4312
          %5112 = vst [vmem:[%s295 + $0xf8] sm:$0xff] %v4313
          %5113 = vst [vmem:[%s295 + $0x100] sm:$0xff] %v4314
          %5114 = vst [vmem:[%s295 + $0x108] sm:$0xff] %v4315
          %5115 = vst [vmem:[%s295 + $0x110] sm:$0xff] %v4316
          %5116 = vst [vmem:[%s295 + $0x118] sm:$0xff] %v4317
          %5117 = vst [vmem:[%s295 + $0x120] sm:$0xff] %v4318
          %5118 = vst [vmem:[%s295 + $0x128] sm:$0xff] %v4319
          %5119 = vst [vmem:[%s295 + $0x130] sm:$0xff] %v4320
          %5120 = vst [vmem:[%s295 + $0x138] sm:$0xff] %v4321
          %5121 = vst [vmem:[%s295 + $0x140] sm:$0xff] %v4322
          %5122 = vst [vmem:[%s295 + $0x148] sm:$0xff] %v4323
          %5123 = vst [vmem:[%s295 + $0x150] sm:$0xff] %v4324
          %5124 = vst [vmem:[%s295 + $0x158] sm:$0xff] %v4325
          %5125 = vst [vmem:[%s295 + $0x160] sm:$0xff] %v4326
          %5126 = vst [vmem:[%s295 + $0x168] sm:$0xff] %v4327
          %5127 = vst [vmem:[%s295 + $0x170] sm:$0xff] %v4328
          %5128 = vst [vmem:[%s295 + $0x178] sm:$0xff] %v4329
          %5129 = vst [vmem:[%s295 + $0x180] sm:$0xff] %v4330
          %5130 = vst [vmem:[%s295 + $0x188] sm:$0xff] %v4331
          %5131 = vst [vmem:[%s295 + $0x190] sm:$0xff] %v4332
          %5132 = vst [vmem:[%s295 + $0x198] sm:$0xff] %v4333
          %5133 = vst [vmem:[%s295 + $0x1a0] sm:$0xff] %v4334
          %5134 = vst [vmem:[%s295 + $0x1a8] sm:$0xff] %v4335
          %5135 = vst [vmem:[%s295 + $0x1b0] sm:$0xff] %v4336
          %5136 = vst [vmem:[%s295 + $0x1b8] sm:$0xff] %v4337
          %5137 = vst [vmem:[%s295 + $0x1c0] sm:$0xff] %v4338
          %5138 = vst [vmem:[%s295 + $0x1c8] sm:$0xff] %v4339
          %5139 = vst [vmem:[%s295 + $0x1d0] sm:$0xff] %v4340
          %5140 = vst [vmem:[%s295 + $0x1d8] sm:$0xff] %v4341
          %5141 = vst [vmem:[%s295 + $0x1e0] sm:$0xff] %v4342
          %5142 = vst [vmem:[%s295 + $0x1e8] sm:$0xff] %v4343
          %5143 = vst [vmem:[%s295 + $0x1f0] sm:$0xff] %v4344
          %5144 = vst [vmem:[%s295 + $0x1f8] sm:$0xff] %v4345
        $region72: #{gcn_forward_pallas.1} parent=59 // pred_fallthru
          _
      $region60: #{gcn_forward_pallas.1} parent=35 // pred_fallthru
        _
      %p5145 = scmp.eq.s32.totalorder %s20, 3
      %s5146 = scalar_select %p5145, %s21, 0
      %s5147 = smul.u32 64, %s5146
      %p5148 = scmp.lt.s32.totalorder %s5147, 127
      %s5149 = scalar_select %p5148, %s5147, 127
      %s5150 = smul.addr %s5149, 8
      %s5151 = scalar_lea.vmem %s4, %s5150
      // Predicated region
      $region73: #{gcn_forward_pallas.1} parent=35 // pred_check
        %p5152 = pneg %p165
      $region74: #{gcn_forward_pallas.1} parent=35 // pred_check_branch
        %5154 = sbr.rel (%p5152) target = $region76
      $region75: #{gcn_forward_pallas.1} parent=35 // pred_region
        %p5155 = scmp.eq.s32.totalorder %s20, 3
        %s5156 = scalar_select %p5155, %s21, 0
        %s5157 = smul.u32 64, %s5156
      $region76: #{gcn_forward_pallas.1} parent=35 // pred_fallthru
        _
    $region36: #{gcn_forward_pallas.1} parent=5 // pred_fallthru
      _
    %p5158 = scmp.le.s32.totalorder 2, %s10
    // Predicated region
    $region77: #{gcn_forward_pallas.1} parent=5 // pred_check
      %p5159 = pneg %p5158
    $region78: #{gcn_forward_pallas.1} parent=5 // pred_check_branch
      %5161 = sbr.rel (%p5159) target = $region80
    $region79: #{gcn_forward_pallas.1} parent=5 // pred_region
      %s5162 = ssub.s32 %s10, 2
      // Predicated region
      $region81: #{gcn_forward_pallas.1} parent=79 // pred_check
        %p5163 = pneg %p171
      $region82: #{gcn_forward_pallas.1} parent=79 // pred_check_branch
        %5165 = sbr.rel (%p5163) target = $region84
      $region83: #{gcn_forward_pallas.1} parent=79 // pred_region
        %p5166 = scmp.eq.s32.totalorder %s23, 3
        %s5167 = scalar_select %p5166, %s24, 0
        %s5168 = smul.u32 64, %s5167
        %p5169 = scmp.lt.s32.totalorder %s5168, 127
        %s5170 = scalar_select %p5169, %s5168, 127
        %s5171 = smul.addr %s5170, 8
        %s5172 = scalar_lea.vmem %s4, %s5171
      $region84: #{gcn_forward_pallas.1} parent=79 // pred_fallthru
        _
    $region80: #{gcn_forward_pallas.1} parent=5 // pred_fallthru
      _
  $region6: #{gcn_forward_pallas.1} parent=0 // loop_footer
    %s14 = sadd.s32 1, %s10
  $region7: #{gcn_forward_pallas.1} parent=0 // loop_footer_branch
    %9 = sbr.rel target = $region3
  $region8: #{gcn_forward_pallas.1} parent=0 // loop_exit
    _

</llo_original>
